<compile_context>
chip_gen: v7x
topology: tpu7x:2x2x1
jax: 0.10.0
libtpu: 0.0.40
codegen_flags: <defaults>
</compile_context>

<pallas_src>
import jax
import jax.numpy as jnp
from jax import lax
from jax.experimental import pallas as pl
from jax.experimental.pallas import tpu as pltpu


_LANES = 128


def _rup(c, m=_LANES):
    return ((c + m - 1) // m) * m


def _pad_axis(a, axis, target):
    if a.shape[axis] == target:
        return a
    cfg = [(0, 0)] * a.ndim
    cfg[axis] = (0, target - a.shape[axis])
    return jnp.pad(a, cfg)


# ---------------------------------------------------------------------------
# 3x3 conv (stride 1, pad 1) + bias, optional fused input BatchNorm+ReLU,
# plus per-image per-channel (sum, sumsq) statistics for the two-pass BN.
# ---------------------------------------------------------------------------
def _make_conv3x3_kernel(H, W, CPI, CPO, fuse_in):
    HW = H * W

    def kernel(*refs):
        if fuse_in:
            (x_ref, w_ref, b_ref, sc_ref, sh_ref,
             y_ref, stats_ref, xpad, acc) = refs
        else:
            x_ref, w_ref, b_ref, y_ref, stats_ref, xpad, acc = refs

        x = x_ref[0]                                      # (H, W, CPI)
        if fuse_in:
            # BatchNorm + ReLU of the previous block, fused into this load.
            x = jnp.maximum(x * sc_ref[...][None] + sh_ref[...][None], 0.0)

        # Spatial zero-padding built in VMEM — no wrapper-side jnp.pad.
        xpad[...] = jnp.zeros_like(xpad)
        xpad[1:H + 1, 1:W + 1, :] = x

        # 9-tap conv as lane-dense (HW, CPI) x (CPI, CPO) MXU matmuls,
        # accumulated into a VMEM scratch accumulator.
        acc[...] = jnp.zeros_like(acc)
        for kh in range(3):
            for kw in range(3):
                xs = xpad[kh:kh + H, kw:kw + W, :].reshape(HW, CPI)
                acc[...] += jnp.dot(xs, w_ref[kh * 3 + kw],
                                    preferred_element_type=jnp.float32)

        y = acc[...] + b_ref[...]                         # (HW, CPO)
        y_ref[...] = y.reshape(1, H, W, CPO)

        # Per-image partial BN statistics (finalized in the wrapper).
        s = jnp.sum(y, axis=0, keepdims=True)             # (1, CPO)
        sq = jnp.sum(y * y, axis=0, keepdims=True)        # (1, CPO)
        stats_ref[0, 0:1, :] = s
        stats_ref[0, 1:2, :] = sq
        stats_ref[0, 2:8, :] = jnp.zeros((6, CPO), jnp.float32)

    return kernel


def _conv3x3_block(x_p, w_taps_p, b_p, scale_p=None, shift_p=None):
    """Raw 3x3 conv + bias (optionally preceded by fused BN+ReLU) + stats."""
    N, H, W, CPI = x_p.shape
    CPO = w_taps_p.shape[-1]
    fuse_in = scale_p is not None

    kernel = _make_conv3x3_kernel(H, W, CPI, CPO, fuse_in)

    in_arrays = [x_p, w_taps_p, b_p]
    in_specs = [
        pl.BlockSpec((1, H, W, CPI), lambda n: (n, 0, 0, 0)),
        pl.BlockSpec((9, CPI, CPO), lambda n: (0, 0, 0)),   # resident weights
        pl.BlockSpec((1, CPO), lambda n: (0, 0)),
    ]
    if fuse_in:
        in_arrays += [scale_p, shift_p]
        in_specs += [pl.BlockSpec((1, CPI), lambda n: (0, 0)),
                     pl.BlockSpec((1, CPI), lambda n: (0, 0))]

    y, stats = pl.pallas_call(
        kernel,
        grid=(N,),
        in_specs=in_specs,
        out_specs=(pl.BlockSpec((1, H, W, CPO), lambda n: (n, 0, 0, 0)),
                   pl.BlockSpec((1, 8, CPO), lambda n: (n, 0, 0))),
        out_shape=(jax.ShapeDtypeStruct((N, H, W, CPO), jnp.float32),
                   jax.ShapeDtypeStruct((N, 8, CPO), jnp.float32)),
        scratch_shapes=[pltpu.VMEM((H + 2, W + 2, CPI), jnp.float32),
                        pltpu.VMEM((H * W, CPO), jnp.float32)],
        compiler_params=pltpu.CompilerParams(
            dimension_semantics=("parallel",)),
    )(*in_arrays)
    return y, stats


def _bn_scale_shift(stats, count, gamma, beta, eps, cpo):
    """Finalize training-mode BN: per-channel affine (scale, shift)."""
    s = jnp.sum(stats[:, 0, :], axis=0)                   # (CPO,)
    sq = jnp.sum(stats[:, 1, :], axis=0)
    mean = s / count
    var = jnp.maximum(sq / count - mean * mean, 0.0)      # biased batch var
    g = _pad_axis(gamma.astype(jnp.float32), 0, cpo)      # padded channels: 0
    b = _pad_axis(beta.astype(jnp.float32), 0, cpo)
    scale = g * lax.rsqrt(var + eps)
    shift = b - mean * scale
    return scale.reshape(1, cpo), shift.reshape(1, cpo)


# ---------------------------------------------------------------------------
# Final fused kernel: last BN+ReLU + 1x1 residual conv + add, tiled over M.
# ---------------------------------------------------------------------------
def _residual_kernel(x_ref, y_ref, w0_ref, b0_ref, sc_ref, sh_ref, o_ref):
    act = jnp.maximum(y_ref[...] * sc_ref[...] + sh_ref[...], 0.0)
    res = jnp.dot(x_ref[...], w0_ref[...],
                  preferred_element_type=jnp.float32) + b0_ref[...]
    o_ref[...] = act + res


def _pick_tile(m):
    for t in (256, 128, 64, 32, 16, 8):
        if m % t == 0:
            return t
    return m


def unet_conv2_res_forward(x_nchw, w0, b0, w3, b3, gammas, betas, eps=1e-5):
    """Pallas forward of unetConv2_res (is_batchnorm=True, ks=3, s=1, p=1)."""
    N, Cin, H, W = x_nchw.shape
    Cout = w0.shape[0]
    CPI, CPO = _rup(Cin), _rup(Cout)
    count = N * H * W
    f32 = jnp.float32

    # NCHW -> NHWC, channels zero-padded to a lane-dense multiple of 128.
    x_p = _pad_axis(jnp.transpose(x_nchw, (0, 2, 3, 1)).astype(f32), 3, CPI)

    def prep_taps(w):                       # (Co, Ci, 3, 3) -> (9, CPi, CPo)
        co, ci = w.shape[0], w.shape[1]
        t = jnp.transpose(w.astype(f32), (2, 3, 1, 0)).reshape(9, ci, co)
        return _pad_axis(_pad_axis(t, 1, _rup(ci)), 2, _rup(co))

    def prep_vec(v, target):
        return _pad_axis(v.astype(f32).reshape(1, -1), 1, target)

    # n conv blocks: raw conv + stats; BN+ReLU is fused into the next kernel.
    h = x_p
    scale_p = shift_p = None
    for w, b, g, be in zip(w3, b3, gammas, betas):
        h, stats = _conv3x3_block(h, prep_taps(w), prep_vec(b, CPO),
                                  scale_p, shift_p)
        scale_p, shift_p = _bn_scale_shift(stats, count, g, be, eps, CPO)

    # Final fused kernel: BN+ReLU of the last block + 1x1 conv residual + add.
    w0_p = _pad_axis(_pad_axis(w0.astype(f32).reshape(Cout, Cin).T, 0, CPI),
                     1, CPO)
    b0_p = prep_vec(b0, CPO)
    M = count
    TM = _pick_tile(M)
    out_flat = pl.pallas_call(
        _residual_kernel,
        grid=(M // TM,),
        in_specs=[pl.BlockSpec((TM, CPI), lambda i: (i, 0)),
                  pl.BlockSpec((TM, CPO), lambda i: (i, 0)),
                  pl.BlockSpec((CPI, CPO), lambda i: (0, 0)),
                  pl.BlockSpec((1, CPO), lambda i: (0, 0)),
                  pl.BlockSpec((1, CPO), lambda i: (0, 0)),
                  pl.BlockSpec((1, CPO), lambda i: (0, 0))],
        out_specs=pl.BlockSpec((TM, CPO), lambda i: (i, 0)),
        out_shape=jax.ShapeDtypeStruct((M, CPO), f32),
        compiler_params=pltpu.CompilerParams(
            dimension_semantics=("parallel",)),
    )(x_p.reshape(M, CPI), h.reshape(M, CPO), w0_p, b0_p, scale_p, shift_p)

    out = out_flat.reshape(N, H, W, CPO)[:, :, :, :Cout]
    return jnp.transpose(out, (0, 3, 1, 2))               # back to NCHW


# ---------------------------------------------------------------------------
# Pure-JAX reference (training-mode BN) for validation.
# ---------------------------------------------------------------------------
def _reference(x, w0, b0, w3, b3, gammas, betas, eps=1e-5):
    f32 = jnp.float32

    def conv(x, w, pad):
        return lax.conv_general_dilated(
            x.astype(f32), w.astype(f32), (1, 1), [(pad, pad), (pad, pad)],
            dimension_numbers=("NCHW", "OIHW", "NCHW"),
            precision=lax.Precision.HIGHEST)

    res = conv(x, w0, 0) + b0[None, :, None, None]
    h = x
    for w, b, g, be in zip(w3, b3, gammas, betas):
        y = conv(h, w, 1) + b[None, :, None, None]
        m = jnp.mean(y, axis=(0, 2, 3), keepdims=True)
        v = jnp.mean((y - m) ** 2, axis=(0, 2, 3), keepdims=True)
        h = jnp.maximum((y - m) * lax.rsqrt(v + eps) * g[None, :, None, None]
                        + be[None, :, None, None], 0.0)
    return h + res


if __name__ == "__main__":
    N, Cin, H, W = 2, 4, 16, 16
    Cout = 8
    n_blocks = 2    # unetConv2_res default n=2

    key = jax.random.PRNGKey(0)
    ks = jax.random.split(key, 3 + 4 * n_blocks)
    x = jax.random.normal(ks[0], (N, Cin, H, W), dtype=jnp.float32)
    w0 = 0.1 * jax.random.normal(ks[1], (Cout, Cin, 1, 1), dtype=jnp.float32)
    b0 = 0.1 * jax.random.normal(ks[2], (Cout,), dtype=jnp.float32)

    w3, b3, gs, bs = [], [], [], []
    ci = Cin
    for i in range(n_blocks):
        k = ks[3 + 4 * i: 3 + 4 * (i + 1)]
        w3.append(0.1 * jax.random.normal(k[0], (Cout, ci, 3, 3),
                                          dtype=jnp.float32))
        b3.append(0.1 * jax.random.normal(k[1], (Cout,), dtype=jnp.float32))
        gs.append(1.0 + 0.1 * jax.random.normal(k[2], (Cout,),
                                                dtype=jnp.float32))
        bs.append(0.1 * jax.random.normal(k[3], (Cout,), dtype=jnp.float32))
        ci = Cout

    out = unet_conv2_res_forward(x, w0, b0, w3, b3, gs, bs)
    out = jax.block_until_ready(out)

    ref = _reference(x, w0, b0, w3, b3, gs, bs)
    assert out.shape == (N, Cout, H, W)
    err = float(jnp.max(jnp.abs(out - ref)))
    assert jnp.allclose(out, ref, atol=1e-3, rtol=1e-3), err

    print("KERNEL_OK")
</pallas_src>

<mosaic_0001>
module attributes {stable_mosaic.version = 11 : i64} {
  func.func @kernel(%arg0: i32, %arg1: memref<1x16x16x128xf32, #tpu.memory_space<vmem>>, %arg2: memref<9x128x128xf32, #tpu.memory_space<vmem>>, %arg3: memref<1x128xf32, #tpu.memory_space<vmem>>, %arg4: memref<1x16x16x128xf32, #tpu.memory_space<vmem>>, %arg5: memref<1x8x128xf32, #tpu.memory_space<vmem>>, %arg6: memref<18x18x128xf32, #tpu.memory_space<vmem>>, %arg7: memref<256x128xf32, #tpu.memory_space<vmem>>) attributes {dimension_semantics = [#tpu.dimension_semantics<parallel>], iteration_bounds = array<i64: 2>, scalar_prefetch = 0 : i64, scratch_operands = 2 : i64, tpu.core_type = #tpu.core_type<tc>, window_params = [{transform_indices = @transform_0, window_bounds = array<i64: 1, 16, 16, 128>}, {pipeline_mode = #tpu.pipeline_mode<synchronous>, transform_indices = @transform_1, window_bounds = array<i64: 9, 128, 128>}, {pipeline_mode = #tpu.pipeline_mode<synchronous>, transform_indices = @transform_2, window_bounds = array<i64: 1, 128>}, {transform_indices = @transform_3, window_bounds = array<i64: 1, 16, 16, 128>}, {transform_indices = @transform_4, window_bounds = array<i64: 1, 8, 128>}]} {
    %c0 = arith.constant 0 : index
    %c0_0 = arith.constant 0 : index
    %c0_1 = arith.constant 0 : index
    %c0_2 = arith.constant 0 : index
    %0 = vector.load %arg1[%c0, %c0_0, %c0_1, %c0_2] : memref<1x16x16x128xf32, #tpu.memory_space<vmem>>, vector<1x16x16x128xf32>
    %1 = vector.shape_cast %0 : vector<1x16x16x128xf32> to vector<16x16x128xf32>
    %cst = arith.constant 0.000000e+00 : f32
    %2 = vector.broadcast %cst : f32 to vector<18x18x128xf32>
    %c0_3 = arith.constant 0 : index
    %c0_4 = arith.constant 0 : index
    %c0_5 = arith.constant 0 : index
    %3 = vector.load %arg6[%c0_3, %c0_4, %c0_5] : memref<18x18x128xf32, #tpu.memory_space<vmem>>, vector<18x18x128xf32>
    tpu.vector_store %arg6[%c0_3, %c0_4, %c0_5], %2 {strides = array<i32>} : memref<18x18x128xf32, #tpu.memory_space<vmem>>, vector<18x18x128xf32>,
    %c1 = arith.constant 1 : index
    %c1_6 = arith.constant 1 : index
    %c0_7 = arith.constant 0 : index
    %4 = vector.load %arg6[%c1, %c1_6, %c0_7] : memref<18x18x128xf32, #tpu.memory_space<vmem>>, vector<16x16x128xf32>
    tpu.vector_store %arg6[%c1, %c1_6, %c0_7], %1 {strides = array<i32>} : memref<18x18x128xf32, #tpu.memory_space<vmem>>, vector<16x16x128xf32>,
    %cst_8 = arith.constant 0.000000e+00 : f32
    %5 = vector.broadcast %cst_8 : f32 to vector<256x128xf32>
    %c0_9 = arith.constant 0 : index
    %c0_10 = arith.constant 0 : index
    %6 = vector.load %arg7[%c0_9, %c0_10] : memref<256x128xf32, #tpu.memory_space<vmem>>, vector<256x128xf32>
    tpu.vector_store %arg7[%c0_9, %c0_10], %5 {strides = array<i32>} : memref<256x128xf32, #tpu.memory_space<vmem>>, vector<256x128xf32>,
    %c0_11 = arith.constant 0 : index
    %c0_12 = arith.constant 0 : index
    %c0_13 = arith.constant 0 : index
    %7 = vector.load %arg6[%c0_11, %c0_12, %c0_13] : memref<18x18x128xf32, #tpu.memory_space<vmem>>, vector<16x16x128xf32>
    %8 = vector.shape_cast %7 : vector<16x16x128xf32> to vector<256x128xf32>
    %c0_14 = arith.constant 0 : index
    %c0_15 = arith.constant 0 : index
    %9 = vector.load %arg7[%c0_14, %c0_15] : memref<256x128xf32, #tpu.memory_space<vmem>>, vector<256x128xf32>
    %c0_16 = arith.constant 0 : index
    %c0_17 = arith.constant 0 : index
    %c0_18 = arith.constant 0 : index
    %10 = vector.load %arg2[%c0_16, %c0_17, %c0_18] : memref<9x128x128xf32, #tpu.memory_space<vmem>>, vector<1x128x128xf32>
    %11 = vector.shape_cast %10 : vector<1x128x128xf32> to vector<128x128xf32>
    %cst_19 = arith.constant dense<0.000000e+00> : vector<256x128xf32>
    %12 = tpu.matmul %8, %11, %cst_19 {dimension_numbers = #tpu.dot_dimension_numbers<[1], [0], [0], [1], [0, 0, 1, 1], [], []>} : vector<256x128xf32>, vector<128x128xf32>, vector<256x128xf32> -> vector<256x128xf32>
    %13 = arith.addf %9, %12 : vector<256x128xf32>
    %c0_20 = arith.constant 0 : index
    %c0_21 = arith.constant 0 : index
    %14 = vector.load %arg7[%c0_20, %c0_21] : memref<256x128xf32, #tpu.memory_space<vmem>>, vector<256x128xf32>
    tpu.vector_store %arg7[%c0_20, %c0_21], %13 {strides = array<i32>} : memref<256x128xf32, #tpu.memory_space<vmem>>, vector<256x128xf32>,
    %c0_22 = arith.constant 0 : index
    %c1_23 = arith.constant 1 : index
    %c0_24 = arith.constant 0 : index
    %15 = vector.load %arg6[%c0_22, %c1_23, %c0_24] : memref<18x18x128xf32, #tpu.memory_space<vmem>>, vector<16x16x128xf32>
    %16 = vector.shape_cast %15 : vector<16x16x128xf32> to vector<256x128xf32>
    %c0_25 = arith.constant 0 : index
    %c0_26 = arith.constant 0 : index
    %17 = vector.load %arg7[%c0_25, %c0_26] : memref<256x128xf32, #tpu.memory_space<vmem>>, vector<256x128xf32>
    %c1_27 = arith.constant 1 : index
    %c0_28 = arith.constant 0 : index
    %c0_29 = arith.constant 0 : index
    %18 = vector.load %arg2[%c1_27, %c0_28, %c0_29] : memref<9x128x128xf32, #tpu.memory_space<vmem>>, vector<1x128x128xf32>
    %19 = vector.shape_cast %18 : vector<1x128x128xf32> to vector<128x128xf32>
    %cst_30 = arith.constant dense<0.000000e+00> : vector<256x128xf32>
    %20 = tpu.matmul %16, %19, %cst_30 {dimension_numbers = #tpu.dot_dimension_numbers<[1], [0], [0], [1], [0, 0, 1, 1], [], []>} : vector<256x128xf32>, vector<128x128xf32>, vector<256x128xf32> -> vector<256x128xf32>
    %21 = arith.addf %17, %20 : vector<256x128xf32>
    %c0_31 = arith.constant 0 : index
    %c0_32 = arith.constant 0 : index
    %22 = vector.load %arg7[%c0_31, %c0_32] : memref<256x128xf32, #tpu.memory_space<vmem>>, vector<256x128xf32>
    tpu.vector_store %arg7[%c0_31, %c0_32], %21 {strides = array<i32>} : memref<256x128xf32, #tpu.memory_space<vmem>>, vector<256x128xf32>,
    %c0_33 = arith.constant 0 : index
    %c2 = arith.constant 2 : index
    %c0_34 = arith.constant 0 : index
    %23 = vector.load %arg6[%c0_33, %c2, %c0_34] : memref<18x18x128xf32, #tpu.memory_space<vmem>>, vector<16x16x128xf32>
    %24 = vector.shape_cast %23 : vector<16x16x128xf32> to vector<256x128xf32>
    %c0_35 = arith.constant 0 : index
    %c0_36 = arith.constant 0 : index
    %25 = vector.load %arg7[%c0_35, %c0_36] : memref<256x128xf32, #tpu.memory_space<vmem>>, vector<256x128xf32>
    %c2_37 = arith.constant 2 : index
    %c0_38 = arith.constant 0 : index
    %c0_39 = arith.constant 0 : index
    %26 = vector.load %arg2[%c2_37, %c0_38, %c0_39] : memref<9x128x128xf32, #tpu.memory_space<vmem>>, vector<1x128x128xf32>
    %27 = vector.shape_cast %26 : vector<1x128x128xf32> to vector<128x128xf32>
    %cst_40 = arith.constant dense<0.000000e+00> : vector<256x128xf32>
    %28 = tpu.matmul %24, %27, %cst_40 {dimension_numbers = #tpu.dot_dimension_numbers<[1], [0], [0], [1], [0, 0, 1, 1], [], []>} : vector<256x128xf32>, vector<128x128xf32>, vector<256x128xf32> -> vector<256x128xf32>
    %29 = arith.addf %25, %28 : vector<256x128xf32>
    %c0_41 = arith.constant 0 : index
    %c0_42 = arith.constant 0 : index
    %30 = vector.load %arg7[%c0_41, %c0_42] : memref<256x128xf32, #tpu.memory_space<vmem>>, vector<256x128xf32>
    tpu.vector_store %arg7[%c0_41, %c0_42], %29 {strides = array<i32>} : memref<256x128xf32, #tpu.memory_space<vmem>>, vector<256x128xf32>,
    %c1_43 = arith.constant 1 : index
    %c0_44 = arith.constant 0 : index
    %c0_45 = arith.constant 0 : index
    %31 = vector.load %arg6[%c1_43, %c0_44, %c0_45] : memref<18x18x128xf32, #tpu.memory_space<vmem>>, vector<16x16x128xf32>
    %32 = vector.shape_cast %31 : vector<16x16x128xf32> to vector<256x128xf32>
    %c0_46 = arith.constant 0 : index
    %c0_47 = arith.constant 0 : index
    %33 = vector.load %arg7[%c0_46, %c0_47] : memref<256x128xf32, #tpu.memory_space<vmem>>, vector<256x128xf32>
    %c3 = arith.constant 3 : index
    %c0_48 = arith.constant 0 : index
    %c0_49 = arith.constant 0 : index
    %34 = vector.load %arg2[%c3, %c0_48, %c0_49] : memref<9x128x128xf32, #tpu.memory_space<vmem>>, vector<1x128x128xf32>
    %35 = vector.shape_cast %34 : vector<1x128x128xf32> to vector<128x128xf32>
    %cst_50 = arith.constant dense<0.000000e+00> : vector<256x128xf32>
    %36 = tpu.matmul %32, %35, %cst_50 {dimension_numbers = #tpu.dot_dimension_numbers<[1], [0], [0], [1], [0, 0, 1, 1], [], []>} : vector<256x128xf32>, vector<128x128xf32>, vector<256x128xf32> -> vector<256x128xf32>
    %37 = arith.addf %33, %36 : vector<256x128xf32>
    %c0_51 = arith.constant 0 : index
    %c0_52 = arith.constant 0 : index
    %38 = vector.load %arg7[%c0_51, %c0_52] : memref<256x128xf32, #tpu.memory_space<vmem>>, vector<256x128xf32>
    tpu.vector_store %arg7[%c0_51, %c0_52], %37 {strides = array<i32>} : memref<256x128xf32, #tpu.memory_space<vmem>>, vector<256x128xf32>,
    %c1_53 = arith.constant 1 : index
    %c1_54 = arith.constant 1 : index
    %c0_55 = arith.constant 0 : index
    %39 = vector.load %arg6[%c1_53, %c1_54, %c0_55] : memref<18x18x128xf32, #tpu.memory_space<vmem>>, vector<16x16x128xf32>
    %40 = vector.shape_cast %39 : vector<16x16x128xf32> to vector<256x128xf32>
    %c0_56 = arith.constant 0 : index
    %c0_57 = arith.constant 0 : index
    %41 = vector.load %arg7[%c0_56, %c0_57] : memref<256x128xf32, #tpu.memory_space<vmem>>, vector<256x128xf32>
    %c4 = arith.constant 4 : index
    %c0_58 = arith.constant 0 : index
    %c0_59 = arith.constant 0 : index
    %42 = vector.load %arg2[%c4, %c0_58, %c0_59] : memref<9x128x128xf32, #tpu.memory_space<vmem>>, vector<1x128x128xf32>
    %43 = vector.shape_cast %42 : vector<1x128x128xf32> to vector<128x128xf32>
    %cst_60 = arith.constant dense<0.000000e+00> : vector<256x128xf32>
    %44 = tpu.matmul %40, %43, %cst_60 {dimension_numbers = #tpu.dot_dimension_numbers<[1], [0], [0], [1], [0, 0, 1, 1], [], []>} : vector<256x128xf32>, vector<128x128xf32>, vector<256x128xf32> -> vector<256x128xf32>
    %45 = arith.addf %41, %44 : vector<256x128xf32>
    %c0_61 = arith.constant 0 : index
    %c0_62 = arith.constant 0 : index
    %46 = vector.load %arg7[%c0_61, %c0_62] : memref<256x128xf32, #tpu.memory_space<vmem>>, vector<256x128xf32>
    tpu.vector_store %arg7[%c0_61, %c0_62], %45 {strides = array<i32>} : memref<256x128xf32, #tpu.memory_space<vmem>>, vector<256x128xf32>,
    %c1_63 = arith.constant 1 : index
    %c2_64 = arith.constant 2 : index
    %c0_65 = arith.constant 0 : index
    %47 = vector.load %arg6[%c1_63, %c2_64, %c0_65] : memref<18x18x128xf32, #tpu.memory_space<vmem>>, vector<16x16x128xf32>
    %48 = vector.shape_cast %47 : vector<16x16x128xf32> to vector<256x128xf32>
    %c0_66 = arith.constant 0 : index
    %c0_67 = arith.constant 0 : index
    %49 = vector.load %arg7[%c0_66, %c0_67] : memref<256x128xf32, #tpu.memory_space<vmem>>, vector<256x128xf32>
    %c5 = arith.constant 5 : index
    %c0_68 = arith.constant 0 : index
    %c0_69 = arith.constant 0 : index
    %50 = vector.load %arg2[%c5, %c0_68, %c0_69] : memref<9x128x128xf32, #tpu.memory_space<vmem>>, vector<1x128x128xf32>
    %51 = vector.shape_cast %50 : vector<1x128x128xf32> to vector<128x128xf32>
    %cst_70 = arith.constant dense<0.000000e+00> : vector<256x128xf32>
    %52 = tpu.matmul %48, %51, %cst_70 {dimension_numbers = #tpu.dot_dimension_numbers<[1], [0], [0], [1], [0, 0, 1, 1], [], []>} : vector<256x128xf32>, vector<128x128xf32>, vector<256x128xf32> -> vector<256x128xf32>
    %53 = arith.addf %49, %52 : vector<256x128xf32>
    %c0_71 = arith.constant 0 : index
    %c0_72 = arith.constant 0 : index
    %54 = vector.load %arg7[%c0_71, %c0_72] : memref<256x128xf32, #tpu.memory_space<vmem>>, vector<256x128xf32>
    tpu.vector_store %arg7[%c0_71, %c0_72], %53 {strides = array<i32>} : memref<256x128xf32, #tpu.memory_space<vmem>>, vector<256x128xf32>,
    %c2_73 = arith.constant 2 : index
    %c0_74 = arith.constant 0 : index
    %c0_75 = arith.constant 0 : index
    %55 = vector.load %arg6[%c2_73, %c0_74, %c0_75] : memref<18x18x128xf32, #tpu.memory_space<vmem>>, vector<16x16x128xf32>
    %56 = vector.shape_cast %55 : vector<16x16x128xf32> to vector<256x128xf32>
    %c0_76 = arith.constant 0 : index
    %c0_77 = arith.constant 0 : index
    %57 = vector.load %arg7[%c0_76, %c0_77] : memref<256x128xf32, #tpu.memory_space<vmem>>, vector<256x128xf32>
    %c6 = arith.constant 6 : index
    %c0_78 = arith.constant 0 : index
    %c0_79 = arith.constant 0 : index
    %58 = vector.load %arg2[%c6, %c0_78, %c0_79] : memref<9x128x128xf32, #tpu.memory_space<vmem>>, vector<1x128x128xf32>
    %59 = vector.shape_cast %58 : vector<1x128x128xf32> to vector<128x128xf32>
    %cst_80 = arith.constant dense<0.000000e+00> : vector<256x128xf32>
    %60 = tpu.matmul %56, %59, %cst_80 {dimension_numbers = #tpu.dot_dimension_numbers<[1], [0], [0], [1], [0, 0, 1, 1], [], []>} : vector<256x128xf32>, vector<128x128xf32>, vector<256x128xf32> -> vector<256x128xf32>
    %61 = arith.addf %57, %60 : vector<256x128xf32>
    %c0_81 = arith.constant 0 : index
    %c0_82 = arith.constant 0 : index
    %62 = vector.load %arg7[%c0_81, %c0_82] : memref<256x128xf32, #tpu.memory_space<vmem>>, vector<256x128xf32>
    tpu.vector_store %arg7[%c0_81, %c0_82], %61 {strides = array<i32>} : memref<256x128xf32, #tpu.memory_space<vmem>>, vector<256x128xf32>,
    %c2_83 = arith.constant 2 : index
    %c1_84 = arith.constant 1 : index
    %c0_85 = arith.constant 0 : index
    %63 = vector.load %arg6[%c2_83, %c1_84, %c0_85] : memref<18x18x128xf32, #tpu.memory_space<vmem>>, vector<16x16x128xf32>
    %64 = vector.shape_cast %63 : vector<16x16x128xf32> to vector<256x128xf32>
    %c0_86 = arith.constant 0 : index
    %c0_87 = arith.constant 0 : index
    %65 = vector.load %arg7[%c0_86, %c0_87] : memref<256x128xf32, #tpu.memory_space<vmem>>, vector<256x128xf32>
    %c7 = arith.constant 7 : index
    %c0_88 = arith.constant 0 : index
    %c0_89 = arith.constant 0 : index
    %66 = vector.load %arg2[%c7, %c0_88, %c0_89] : memref<9x128x128xf32, #tpu.memory_space<vmem>>, vector<1x128x128xf32>
    %67 = vector.shape_cast %66 : vector<1x128x128xf32> to vector<128x128xf32>
    %cst_90 = arith.constant dense<0.000000e+00> : vector<256x128xf32>
    %68 = tpu.matmul %64, %67, %cst_90 {dimension_numbers = #tpu.dot_dimension_numbers<[1], [0], [0], [1], [0, 0, 1, 1], [], []>} : vector<256x128xf32>, vector<128x128xf32>, vector<256x128xf32> -> vector<256x128xf32>
    %69 = arith.addf %65, %68 : vector<256x128xf32>
    %c0_91 = arith.constant 0 : index
    %c0_92 = arith.constant 0 : index
    %70 = vector.load %arg7[%c0_91, %c0_92] : memref<256x128xf32, #tpu.memory_space<vmem>>, vector<256x128xf32>
    tpu.vector_store %arg7[%c0_91, %c0_92], %69 {strides = array<i32>} : memref<256x128xf32, #tpu.memory_space<vmem>>, vector<256x128xf32>,
    %c2_93 = arith.constant 2 : index
    %c2_94 = arith.constant 2 : index
    %c0_95 = arith.constant 0 : index
    %71 = vector.load %arg6[%c2_93, %c2_94, %c0_95] : memref<18x18x128xf32, #tpu.memory_space<vmem>>, vector<16x16x128xf32>
    %72 = vector.shape_cast %71 : vector<16x16x128xf32> to vector<256x128xf32>
    %c0_96 = arith.constant 0 : index
    %c0_97 = arith.constant 0 : index
    %73 = vector.load %arg7[%c0_96, %c0_97] : memref<256x128xf32, #tpu.memory_space<vmem>>, vector<256x128xf32>
    %c8 = arith.constant 8 : index
    %c0_98 = arith.constant 0 : index
    %c0_99 = arith.constant 0 : index
    %74 = vector.load %arg2[%c8, %c0_98, %c0_99] : memref<9x128x128xf32, #tpu.memory_space<vmem>>, vector<1x128x128xf32>
    %75 = vector.shape_cast %74 : vector<1x128x128xf32> to vector<128x128xf32>
    %cst_100 = arith.constant dense<0.000000e+00> : vector<256x128xf32>
    %76 = tpu.matmul %72, %75, %cst_100 {dimension_numbers = #tpu.dot_dimension_numbers<[1], [0], [0], [1], [0, 0, 1, 1], [], []>} : vector<256x128xf32>, vector<128x128xf32>, vector<256x128xf32> -> vector<256x128xf32>
    %77 = arith.addf %73, %76 : vector<256x128xf32>
    %c0_101 = arith.constant 0 : index
    %c0_102 = arith.constant 0 : index
    %78 = vector.load %arg7[%c0_101, %c0_102] : memref<256x128xf32, #tpu.memory_space<vmem>>, vector<256x128xf32>
    tpu.vector_store %arg7[%c0_101, %c0_102], %77 {strides = array<i32>} : memref<256x128xf32, #tpu.memory_space<vmem>>, vector<256x128xf32>,
    %c0_103 = arith.constant 0 : index
    %c0_104 = arith.constant 0 : index
    %79 = vector.load %arg7[%c0_103, %c0_104] : memref<256x128xf32, #tpu.memory_space<vmem>>, vector<256x128xf32>
    %c0_105 = arith.constant 0 : index
    %c0_106 = arith.constant 0 : index
    %80 = vector.load %arg3[%c0_105, %c0_106] : memref<1x128xf32, #tpu.memory_space<vmem>>, vector<1x128xf32>
    %81 = vector.broadcast %80 : vector<1x128xf32> to vector<256x128xf32>
    %82 = arith.addf %79, %81 : vector<256x128xf32>
    %83 = vector.shape_cast %82 : vector<256x128xf32> to vector<1x16x16x128xf32>
    %c0_107 = arith.constant 0 : index
    %c0_108 = arith.constant 0 : index
    %c0_109 = arith.constant 0 : index
    %c0_110 = arith.constant 0 : index
    %84 = vector.load %arg4[%c0_107, %c0_108, %c0_109, %c0_110] : memref<1x16x16x128xf32, #tpu.memory_space<vmem>>, vector<1x16x16x128xf32>
    tpu.vector_store %arg4[%c0_107, %c0_108, %c0_109, %c0_110], %83 {strides = array<i32>} : memref<1x16x16x128xf32, #tpu.memory_space<vmem>>, vector<1x16x16x128xf32>,
    %cst_111 = arith.constant dense<0.000000e+00> : vector<128xf32>
    %85 = vector.multi_reduction <add>, %82, %cst_111 [0] : vector<256x128xf32> to vector<128xf32>
    %86 = vector.shape_cast %85 : vector<128xf32> to vector<1x128xf32>
    %87 = arith.mulf %82, %82 : vector<256x128xf32>
    %cst_112 = arith.constant dense<0.000000e+00> : vector<128xf32>
    %88 = vector.multi_reduction <add>, %87, %cst_112 [0] : vector<256x128xf32> to vector<128xf32>
    %89 = vector.shape_cast %88 : vector<128xf32> to vector<1x128xf32>
    %c0_113 = arith.constant 0 : index
    %c0_114 = arith.constant 0 : index
    %c0_115 = arith.constant 0 : index
    %90 = vector.load %arg5[%c0_113, %c0_114, %c0_115] : memref<1x8x128xf32, #tpu.memory_space<vmem>>, vector<1x1x128xf32>
    %91 = vector.shape_cast %90 : vector<1x1x128xf32> to vector<1x128xf32>
    %92 = vector.shape_cast %86 : vector<1x128xf32> to vector<1x1x128xf32>
    tpu.vector_store %arg5[%c0_113, %c0_114, %c0_115], %92 {strides = array<i32>} : memref<1x8x128xf32, #tpu.memory_space<vmem>>, vector<1x1x128xf32>,
    %c0_116 = arith.constant 0 : index
    %c1_117 = arith.constant 1 : index
    %c0_118 = arith.constant 0 : index
    %93 = vector.load %arg5[%c0_116, %c1_117, %c0_118] : memref<1x8x128xf32, #tpu.memory_space<vmem>>, vector<1x1x128xf32>
    %94 = vector.shape_cast %93 : vector<1x1x128xf32> to vector<1x128xf32>
    %95 = vector.shape_cast %89 : vector<1x128xf32> to vector<1x1x128xf32>
    tpu.vector_store %arg5[%c0_116, %c1_117, %c0_118], %95 {strides = array<i32>} : memref<1x8x128xf32, #tpu.memory_space<vmem>>, vector<1x1x128xf32>,
    %cst_119 = arith.constant 0.000000e+00 : f32
    %96 = vector.broadcast %cst_119 : f32 to vector<6x128xf32>
    %c0_120 = arith.constant 0 : index
    %c2_121 = arith.constant 2 : index
    %c0_122 = arith.constant 0 : index
    %97 = vector.load %arg5[%c0_120, %c2_121, %c0_122] : memref<1x8x128xf32, #tpu.memory_space<vmem>>, vector<1x6x128xf32>
    %98 = vector.shape_cast %97 : vector<1x6x128xf32> to vector<6x128xf32>
    %99 = vector.shape_cast %96 : vector<6x128xf32> to vector<1x6x128xf32>
    tpu.vector_store %arg5[%c0_120, %c2_121, %c0_122], %99 {strides = array<i32>} : memref<1x8x128xf32, #tpu.memory_space<vmem>>, vector<1x6x128xf32>,
    return
  }
  func.func @transform_0(%arg0: i32) -> (i32, i32, i32, i32) {
    %c0_i32 = arith.constant 0 : i32
    %c0_i32_0 = arith.constant 0 : i32
    %c0_i32_1 = arith.constant 0 : i32
    %c0_i32_2 = arith.constant 0 : i32
    return %arg0, %c0_i32, %c0_i32_0, %c0_i32_1 : i32, i32, i32, i32
  }
  func.func @transform_1(%arg0: i32) -> (i32, i32, i32) {
    %c0_i32 = arith.constant 0 : i32
    %c0_i32_0 = arith.constant 0 : i32
    %c0_i32_1 = arith.constant 0 : i32
    %c0_i32_2 = arith.constant 0 : i32
    return %c0_i32, %c0_i32_0, %c0_i32_1 : i32, i32, i32
  }
  func.func @transform_2(%arg0: i32) -> (i32, i32) {
    %c0_i32 = arith.constant 0 : i32
    %c0_i32_0 = arith.constant 0 : i32
    %c0_i32_1 = arith.constant 0 : i32
    return %c0_i32, %c0_i32_0 : i32, i32
  }
  func.func @transform_3(%arg0: i32) -> (i32, i32, i32, i32) {
    %c0_i32 = arith.constant 0 : i32
    %c0_i32_0 = arith.constant 0 : i32
    %c0_i32_1 = arith.constant 0 : i32
    %c0_i32_2 = arith.constant 0 : i32
    return %arg0, %c0_i32, %c0_i32_0, %c0_i32_1 : i32, i32, i32, i32
  }
  func.func @transform_4(%arg0: i32) -> (i32, i32, i32) {
    %c0_i32 = arith.constant 0 : i32
    %c0_i32_0 = arith.constant 0 : i32
    %c0_i32_1 = arith.constant 0 : i32
    return %arg0, %c0_i32, %c0_i32_0 : i32, i32, i32
  }
}

</mosaic_0001>

<llo_original>
// kernel: tpu_custom_call.1
$region0: #{tpu_custom_call.1}
  #allocation0 [shape = 'u32[]', space=smem, size = 0x4, offset = 0x4, fixed_abs, tag = 'smem constant byte address 0x4 - core index']
  #allocation1 [shape = 'u32[144,128]{1,0:T(1,128)}', space=vmem, size = 0x12000, scoped, tag = 'internal scratch']
  #allocation2 [shape = 'f32[18,18,128]{2,1,0:T(8,128)}', space=vmem, size = 0x36000, scoped, tag = 'scratch operand']
  #allocation3 [shape = 'f32[256,128]{1,0:T(8,128)}', space=vmem, size = 0x20000, scoped, tag = 'scratch operand']
  %s0 = inlined_call_operand.hbm [shape: f32[2,16,16,128], index: 0, kind: input, shape index: {}]
  %s1 = inlined_call_operand.hbm [shape: f32[9,128,128], index: 1, kind: input, shape index: {}]
  %s2 = inlined_call_operand.vmem [shape: f32[1,128], index: 2, kind: input, shape index: {}]
  %s3 = inlined_call_operand.hbm [shape: f32[2,16,16,128], index: 3, kind: output, shape index: {0}]
  %s4 = inlined_call_operand.hbm [shape: f32[2,8,128], index: 4, kind: output, shape index: {1}]
  %5 = xla_tuple %s3, %s4
  %s6 = sld [smem:[#allocation0]]
  $region61: #{tpu_custom_call.1} parent=0
    _
  %s8 = ssub.s32 1, %s6
  %s9 = scalar_select 0, %s8, %s6
  $region1: #{tpu_custom_call.1} parent=0
    #allocation4 [shape = 'u8[262144]{0}', space=vmem, size = 0x40000, scoped, tag = 'input window, operand 0']
    #allocation5 [shape = 's32[2]{0}', space=sflag, size = 0x8, scoped, tag = 'scoped memory for tpu_custom_call.1']
    #allocation6 [shape = 's32[2]{0}', space=sflag, size = 0x8, scoped, tag = 'scoped memory for tpu_custom_call.1']
    #allocation7 [shape = 'u8[589824]{0}', space=vmem, size = 0x90000, scoped, tag = 'input window, operand 1, single buffered']
    #allocation8 [shape = 's32[1]{0}', space=sflag, size = 0x4, scoped, tag = 'scoped memory for tpu_custom_call.1']
    #allocation9 [shape = 'u8[262144]{0}', space=vmem, size = 0x40000, scoped, tag = 'output window, operand 0']
    #allocation10 [shape = 'u8[8192]{0}', space=vmem, size = 0x2000, scoped, tag = 'output window, operand 1']
    #allocation11 [shape = 's32[2]{0}', space=sflag, size = 0x8, scoped, tag = 'scoped memory for tpu_custom_call.1']
    %10 = vsyncpa [#allocation5], 0
    %s11 = scalar_lea.sflag [#allocation5], 1
    %12 = vsyncpa %s11, 0
    %13 = vsyncpa [#allocation8], 0
    %14 = vsyncpa [#allocation6], 0
    %s15 = scalar_lea.sflag [#allocation6], 1
    %16 = vsyncpa %s15, 0
    %17 = vsyncpa [#allocation11], 0
    %s18 = scalar_lea.sflag [#allocation11], 1
    %19 = vsyncpa %s18, 0
    loop: start=0, step=1, limit=4
    $region2: #{tpu_custom_call.1} parent=1 // loop_pre_header
      _
    $region3: #{tpu_custom_call.1} parent=1 // loop_header
      %s21 = sphi 0, %s25
      %p22 = scmp.ge.s32.totalorder %s21, 4
      %s31 = sphi 0, %s33
      %s34 = sphi 0, %s31
      %s35 = sphi 0, %s34
      %s51 = sphi 0, %s35
      %s55 = sphi 0, %s55
      %s57 = sphi 0, %s55
      %s58 = sphi 0, %s57
      %s72 = sphi 0, %s58
      %s76 = sphi 0, %s76
      %s78 = sphi 0, %s76
      %s79 = sphi 0, %s78
      %s93 = sphi 0, %s79
      %s99 = sphi 0, %s101
      %s102 = sphi 0, %s99
      %s103 = sphi 0, %s102
      %s119 = sphi 0, %s103
      %s125 = sphi 0, %s127
      %s128 = sphi 0, %s125
      %s129 = sphi 0, %s128
      %s145 = sphi 0, %s129
    $region4: #{tpu_custom_call.1} parent=1 // loop_header_branch
      %24 = sbr.rel (%p22) target = $region8
    $region5: #{tpu_custom_call.1} parent=1 // loop_body
      %s26 = ssub.s32 %s21, 1
      %s27 = ssub.s32 %s21, 2
      %s28 = sadd.s32 %s21, 1
      %s29 = ssub.s32 %s21, %s28
      %p30 = scmp.eq.s32.totalorder %s29, 0
      %s32 = sadd.s32 %s31, 1
      %s33 = scalar_select %p30, %s31, %s32
      %p36 = pneg %p30
      %p37 = scmp.eq.s32.totalorder %s21, 1
      %p38 = por %p36, %p37
      %p39 = scmp.ne.s32.totalorder %s31, %s34
      %p40 = scmp.eq.s32.totalorder %s21, 0
      %p41 = por %p39, %p40
      %p42 = scmp.ne.s32.totalorder %s31, %s34
      %p43 = scmp.eq.s32.totalorder %s26, 1
      %p44 = por %p42, %p43
      %p45 = scmp.ne.s32.totalorder %s34, %s35
      %p46 = scmp.eq.s32.totalorder %s26, 0
      %p47 = por %p45, %p46
      %p48 = scmp.ne.s32.totalorder %s34, %s35
      %p49 = scmp.eq.s32.totalorder %s27, 1
      %p50 = por %p48, %p49
      %p52 = scmp.ne.s32.totalorder %s35, %s51
      %p53 = scmp.eq.s32.totalorder %s27, 0
      %p54 = por %p52, %p53
      %s56 = sadd.s32 %s55, 1
      %p59 = scmp.eq.s32.totalorder %s21, 1
      %p60 = scmp.ne.s32.totalorder %s55, %s57
      %p61 = scmp.eq.s32.totalorder %s21, 0
      %p62 = por %p60, %p61
      %p63 = scmp.ne.s32.totalorder %s55, %s57
      %p64 = scmp.eq.s32.totalorder %s26, 1
      %p65 = por %p63, %p64
      %p66 = scmp.ne.s32.totalorder %s57, %s58
      %p67 = scmp.eq.s32.totalorder %s26, 0
      %p68 = por %p66, %p67
      %p69 = scmp.ne.s32.totalorder %s57, %s58
      %p70 = scmp.eq.s32.totalorder %s27, 1
      %p71 = por %p69, %p70
      %p73 = scmp.ne.s32.totalorder %s58, %s72
      %p74 = scmp.eq.s32.totalorder %s27, 0
      %p75 = por %p73, %p74
      %s77 = sadd.s32 %s76, 1
      %p80 = scmp.eq.s32.totalorder %s21, 1
      %p81 = scmp.ne.s32.totalorder %s76, %s78
      %p82 = scmp.eq.s32.totalorder %s21, 0
      %p83 = por %p81, %p82
      %p84 = scmp.ne.s32.totalorder %s76, %s78
      %p85 = scmp.eq.s32.totalorder %s26, 1
      %p86 = por %p84, %p85
      %p87 = scmp.ne.s32.totalorder %s78, %s79
      %p88 = scmp.eq.s32.totalorder %s26, 0
      %p89 = por %p87, %p88
      %p90 = scmp.ne.s32.totalorder %s78, %s79
      %p91 = scmp.eq.s32.totalorder %s27, 1
      %p92 = por %p90, %p91
      %p94 = scmp.ne.s32.totalorder %s79, %s93
      %p95 = scmp.eq.s32.totalorder %s27, 0
      %p96 = por %p94, %p95
      %s97 = ssub.s32 %s21, %s28
      %p98 = scmp.eq.s32.totalorder %s97, 0
      %s100 = sadd.s32 %s99, 1
      %s101 = scalar_select %p98, %s99, %s100
      %p104 = pneg %p98
      %p105 = scmp.eq.s32.totalorder %s21, 1
      %p106 = por %p104, %p105
      %p107 = scmp.ne.s32.totalorder %s99, %s102
      %p108 = scmp.eq.s32.totalorder %s21, 0
      %p109 = por %p107, %p108
      %p110 = scmp.ne.s32.totalorder %s99, %s102
      %p111 = scmp.eq.s32.totalorder %s26, 1
      %p112 = por %p110, %p111
      %p113 = scmp.ne.s32.totalorder %s102, %s103
      %p114 = scmp.eq.s32.totalorder %s26, 0
      %p115 = por %p113, %p114
      %p116 = scmp.ne.s32.totalorder %s102, %s103
      %p117 = scmp.eq.s32.totalorder %s27, 1
      %p118 = por %p116, %p117
      %p120 = scmp.ne.s32.totalorder %s103, %s119
      %p121 = scmp.eq.s32.totalorder %s27, 0
      %p122 = por %p120, %p121
      %s123 = ssub.s32 %s21, %s28
      %p124 = scmp.eq.s32.totalorder %s123, 0
      %s126 = sadd.s32 %s125, 1
      %s127 = scalar_select %p124, %s125, %s126
      %p130 = pneg %p124
      %p131 = scmp.eq.s32.totalorder %s21, 1
      %p132 = por %p130, %p131
      %p133 = scmp.ne.s32.totalorder %s125, %s128
      %p134 = scmp.eq.s32.totalorder %s21, 0
      %p135 = por %p133, %p134
      %p136 = scmp.ne.s32.totalorder %s125, %s128
      %p137 = scmp.eq.s32.totalorder %s26, 1
      %p138 = por %p136, %p137
      %p139 = scmp.ne.s32.totalorder %s128, %s129
      %p140 = scmp.eq.s32.totalorder %s26, 0
      %p141 = por %p139, %p140
      %p142 = scmp.ne.s32.totalorder %s128, %s129
      %p143 = scmp.eq.s32.totalorder %s27, 1
      %p144 = por %p142, %p143
      %p146 = scmp.ne.s32.totalorder %s129, %s145
      %p147 = scmp.eq.s32.totalorder %s27, 0
      %p148 = por %p146, %p147
      %p149 = scmp.le.s32.totalorder 1, %s21
      %p150 = scmp.lt.s32.totalorder %s21, 3
      %p151 = pnand %p149, %p150
      %p152 = pneg %p151
      // Predicated region
      $region9: #{tpu_custom_call.1} parent=5 // pred_check
        _
      $region10: #{tpu_custom_call.1} parent=5 // pred_check_branch
        %154 = sbr.rel (%p151) target = $region12
      $region11: #{tpu_custom_call.1} parent=5 // pred_region
        %s155 = ssub.s32 %s21, 1
        // Predicated region
        $region13: #{tpu_custom_call.1} parent=11 // pred_check
          %p156 = pneg %p68
        $region14: #{tpu_custom_call.1} parent=11 // pred_check_branch
          %158 = sbr.rel (%p156) target = $region16
        $region15: #{tpu_custom_call.1} parent=11 // pred_region
          %s160 = ssub.s32 18432, 18432
          %161 = vsyncadd [#allocation8], %s160
          %s162 = sshll.u32 [#allocation7], 4
          %s163 = int_to_ptr.vmem [resolvable:$true] %s162
          %168 = dma.hbm_to_vmem [thread:$0]  %s1, 18432, %s163, [#allocation8], 128, 128, 8
        $region16: #{tpu_custom_call.1} parent=11 // pred_fallthru
          _
        // Predicated region
        $region17: #{tpu_custom_call.1} parent=11 // pred_check
          %p169 = pneg %p89
        $region18: #{tpu_custom_call.1} parent=11 // pred_check_branch
          %171 = sbr.rel (%p169) target = $region20
        $region19: #{tpu_custom_call.1} parent=11 // pred_region
          _
        $region20: #{tpu_custom_call.1} parent=11 // pred_fallthru
          _
      $region12: #{tpu_custom_call.1} parent=5 // pred_fallthru
        _
      %p172 = scmp.lt.s32.totalorder %s21, 2
      // Predicated region
      $region21: #{tpu_custom_call.1} parent=5 // pred_check
        %p173 = pneg %p172
      $region22: #{tpu_custom_call.1} parent=5 // pred_check_branch
        %175 = sbr.rel (%p173) target = $region24
      $region23: #{tpu_custom_call.1} parent=5 // pred_region
        // Predicated region
        $region25: #{tpu_custom_call.1} parent=23 // pred_check
          %p176 = pneg %p41
        $region26: #{tpu_custom_call.1} parent=23 // pred_check_branch
          %178 = sbr.rel (%p176) target = $region28
        $region27: #{tpu_custom_call.1} parent=23 // pred_region
          %s179 = sand.u32 %s31, 1
          %s180 = scalar_lea.sflag [#allocation5], %s179
          %s181 = sand.u32 %s31, 1
          %s182 = smul.addr %s181, 256
          %s183 = scalar_lea.vmem [#allocation4], %s182
          %s185 = ssub.s32 4096, 4096
          %186 = vsyncadd %s180, %s185
          %s187 = smul.addr %s21, 32
          %s188 = smul.addr %s187, 128
          %s189 = scalar_lea.hbm %s0, %s188
          %s190 = sshll.u32 %s183, 4
          %s191 = int_to_ptr.vmem [resolvable:$true] %s190
          %196 = dma.hbm_to_vmem [thread:$0]  %s189, 4096, %s191, %s180, 128, 128, 8
        $region28: #{tpu_custom_call.1} parent=23 // pred_fallthru
          _
      $region24: #{tpu_custom_call.1} parent=5 // pred_fallthru
        _
      %p197 = scmp.le.s32.totalorder 1, %s21
      %p198 = scmp.lt.s32.totalorder %s21, 3
      %p199 = pnand %p197, %p198
      %p200 = pneg %p199
      // Predicated region
      $region29: #{tpu_custom_call.1} parent=5 // pred_check
        _
      $region30: #{tpu_custom_call.1} parent=5 // pred_check_branch
        %202 = sbr.rel (%p199) target = $region32
      $region31: #{tpu_custom_call.1} parent=5 // pred_region
        %s203 = ssub.s32 %s21, 1
        %s204 = sand.u32 %s34, 1
        %s205 = scalar_lea.sflag [#allocation5], %s204
        %s206 = sand.u32 %s34, 1
        %s207 = smul.addr %s206, 256
        %s208 = scalar_lea.vmem [#allocation4], %s207
        // Predicated region
        $region33: #{tpu_custom_call.1} parent=31 // pred_check
          %p209 = pneg %p47
        $region34: #{tpu_custom_call.1} parent=31 // pred_check_branch
          %211 = sbr.rel (%p209) target = $region36
        $region35: #{tpu_custom_call.1} parent=31 // pred_region
          %212 = dma.done %s205, 4096
        $region36: #{tpu_custom_call.1} parent=31 // pred_fallthru
          _
        // Predicated region
        $region37: #{tpu_custom_call.1} parent=31 // pred_check
          %p213 = pneg %p68
        $region38: #{tpu_custom_call.1} parent=31 // pred_check_branch
          %215 = sbr.rel (%p213) target = $region40
        $region39: #{tpu_custom_call.1} parent=31 // pred_region
          %216 = dma.done [#allocation8], 18432
        $region40: #{tpu_custom_call.1} parent=31 // pred_fallthru
          _
        %s217 = sand.u32 %s34, 1
        %s218 = scalar_lea.sflag [#allocation5], %s217
        %s219 = sand.u32 %s34, 1
        %s220 = smul.addr %s219, 256
        %s221 = scalar_lea.vmem [#allocation4], %s220
        %p222 = pneg %p47
        %p223 = pneg %p44
        %p224 = pneg %p68
        %p225 = pneg %p65
        %p226 = pneg %p89
        %p227 = pneg %p86
        %p228 = pneg %p115
        %p229 = pneg %p112
        %s230 = sand.u32 %s102, 1
        %s231 = scalar_lea.sflag [#allocation6], %s230
        %s232 = sand.u32 %s102, 1
        %s233 = smul.addr %s232, 256
        %s234 = scalar_lea.vmem [#allocation9], %s233
        %p235 = pneg %p141
        %p236 = pneg %p138
        %s237 = sand.u32 %s128, 1
        %s238 = scalar_lea.sflag [#allocation11], %s237
        %s239 = sand.u32 %s128, 1
        %s240 = smul.addr %s239, 8
        %s241 = scalar_lea.vmem [#allocation10], %s240
        %v242 = vld [vmem:[%s208] sm:$0xff]
        %v243 = vld [vmem:[%s208 + $0x8] sm:$0xff]
        %v244 = vld [vmem:[%s208 + $0x10] sm:$0xff]
        %v245 = vld [vmem:[%s208 + $0x18] sm:$0xff]
        %v246 = vld [vmem:[%s208 + $0x20] sm:$0xff]
        %v247 = vld [vmem:[%s208 + $0x28] sm:$0xff]
        %v248 = vld [vmem:[%s208 + $0x30] sm:$0xff]
        %v249 = vld [vmem:[%s208 + $0x38] sm:$0xff]
        %v250 = vld [vmem:[%s208 + $0x40] sm:$0xff]
        %v251 = vld [vmem:[%s208 + $0x48] sm:$0xff]
        %v252 = vld [vmem:[%s208 + $0x50] sm:$0xff]
        %v253 = vld [vmem:[%s208 + $0x58] sm:$0xff]
        %v254 = vld [vmem:[%s208 + $0x60] sm:$0xff]
        %v255 = vld [vmem:[%s208 + $0x68] sm:$0xff]
        %v256 = vld [vmem:[%s208 + $0x70] sm:$0xff]
        %v257 = vld [vmem:[%s208 + $0x78] sm:$0xff]
        %v258 = vld [vmem:[%s208 + $0x80] sm:$0xff]
        %v259 = vld [vmem:[%s208 + $0x88] sm:$0xff]
        %v260 = vld [vmem:[%s208 + $0x90] sm:$0xff]
        %v261 = vld [vmem:[%s208 + $0x98] sm:$0xff]
        %v262 = vld [vmem:[%s208 + $0xa0] sm:$0xff]
        %v263 = vld [vmem:[%s208 + $0xa8] sm:$0xff]
        %v264 = vld [vmem:[%s208 + $0xb0] sm:$0xff]
        %v265 = vld [vmem:[%s208 + $0xb8] sm:$0xff]
        %v266 = vld [vmem:[%s208 + $0xc0] sm:$0xff]
        %v267 = vld [vmem:[%s208 + $0xc8] sm:$0xff]
        %v268 = vld [vmem:[%s208 + $0xd0] sm:$0xff]
        %v269 = vld [vmem:[%s208 + $0xd8] sm:$0xff]
        %v270 = vld [vmem:[%s208 + $0xe0] sm:$0xff]
        %v271 = vld [vmem:[%s208 + $0xe8] sm:$0xff]
        %v272 = vld [vmem:[%s208 + $0xf0] sm:$0xff]
        %v273 = vld [vmem:[%s208 + $0xf8] sm:$0xff]
        %274 = vst [vmem:[#allocation2] sm:$0xff] 0.0
        %275 = vst [vmem:[#allocation2 + $0x8] sm:$0xff] 0.0
        %276 = vst [vmem:[#allocation2 + $0x10] sm:$0x3] 0.0
        %277 = vst [vmem:[#allocation2 + $0x18] sm:$0xff] 0.0
        %278 = vst [vmem:[#allocation2 + $0x20] sm:$0xff] 0.0
        %279 = vst [vmem:[#allocation2 + $0x28] sm:$0x3] 0.0
        %280 = vst [vmem:[#allocation2 + $0x30] sm:$0xff] 0.0
        %281 = vst [vmem:[#allocation2 + $0x38] sm:$0xff] 0.0
        %282 = vst [vmem:[#allocation2 + $0x40] sm:$0x3] 0.0
        %283 = vst [vmem:[#allocation2 + $0x48] sm:$0xff] 0.0
        %284 = vst [vmem:[#allocation2 + $0x50] sm:$0xff] 0.0
        %285 = vst [vmem:[#allocation2 + $0x58] sm:$0x3] 0.0
        %286 = vst [vmem:[#allocation2 + $0x60] sm:$0xff] 0.0
        %287 = vst [vmem:[#allocation2 + $0x68] sm:$0xff] 0.0
        %288 = vst [vmem:[#allocation2 + $0x70] sm:$0x3] 0.0
        %289 = vst [vmem:[#allocation2 + $0x78] sm:$0xff] 0.0
        %290 = vst [vmem:[#allocation2 + $0x80] sm:$0xff] 0.0
        %291 = vst [vmem:[#allocation2 + $0x88] sm:$0x3] 0.0
        %292 = vst [vmem:[#allocation2 + $0x90] sm:$0xff] 0.0
        %293 = vst [vmem:[#allocation2 + $0x98] sm:$0xff] 0.0
        %294 = vst [vmem:[#allocation2 + $0xa0] sm:$0x3] 0.0
        %295 = vst [vmem:[#allocation2 + $0xa8] sm:$0xff] 0.0
        %296 = vst [vmem:[#allocation2 + $0xb0] sm:$0xff] 0.0
        %297 = vst [vmem:[#allocation2 + $0xb8] sm:$0x3] 0.0
        %298 = vst [vmem:[#allocation2 + $0xc0] sm:$0xff] 0.0
        %299 = vst [vmem:[#allocation2 + $0xc8] sm:$0xff] 0.0
        %300 = vst [vmem:[#allocation2 + $0xd0] sm:$0x3] 0.0
        %301 = vst [vmem:[#allocation2 + $0xd8] sm:$0xff] 0.0
        %302 = vst [vmem:[#allocation2 + $0xe0] sm:$0xff] 0.0
        %303 = vst [vmem:[#allocation2 + $0xe8] sm:$0x3] 0.0
        %304 = vst [vmem:[#allocation2 + $0xf0] sm:$0xff] 0.0
        %305 = vst [vmem:[#allocation2 + $0xf8] sm:$0xff] 0.0
        %306 = vst [vmem:[#allocation2 + $0x100] sm:$0x3] 0.0
        %307 = vst [vmem:[#allocation2 + $0x108] sm:$0xff] 0.0
        %308 = vst [vmem:[#allocation2 + $0x110] sm:$0xff] 0.0
        %309 = vst [vmem:[#allocation2 + $0x118] sm:$0x3] 0.0
        %310 = vst [vmem:[#allocation2 + $0x120] sm:$0xff] 0.0
        %311 = vst [vmem:[#allocation2 + $0x128] sm:$0xff] 0.0
        %312 = vst [vmem:[#allocation2 + $0x130] sm:$0x3] 0.0
        %313 = vst [vmem:[#allocation2 + $0x138] sm:$0xff] 0.0
        %314 = vst [vmem:[#allocation2 + $0x140] sm:$0xff] 0.0
        %315 = vst [vmem:[#allocation2 + $0x148] sm:$0x3] 0.0
        %316 = vst [vmem:[#allocation2 + $0x150] sm:$0xff] 0.0
        %317 = vst [vmem:[#allocation2 + $0x158] sm:$0xff] 0.0
        %318 = vst [vmem:[#allocation2 + $0x160] sm:$0x3] 0.0
        %319 = vst [vmem:[#allocation2 + $0x168] sm:$0xff] 0.0
        %320 = vst [vmem:[#allocation2 + $0x170] sm:$0xff] 0.0
        %321 = vst [vmem:[#allocation2 + $0x178] sm:$0x3] 0.0
        %322 = vst [vmem:[#allocation2 + $0x180] sm:$0xff] 0.0
        %323 = vst [vmem:[#allocation2 + $0x188] sm:$0xff] 0.0
        %324 = vst [vmem:[#allocation2 + $0x190] sm:$0x3] 0.0
        %325 = vst [vmem:[#allocation2 + $0x198] sm:$0xff] 0.0
        %326 = vst [vmem:[#allocation2 + $0x1a0] sm:$0xff] 0.0
        %327 = vst [vmem:[#allocation2 + $0x1a8] sm:$0x3] 0.0
        %s328 = scalar_lea.vmem [#allocation2], 24
        %329 = vst [vmem:[%s328 + $0x1] sm:$0xff] %v242
        %330 = vst [vmem:[%s328 + $0x9] sm:$0xff] %v243
        %331 = vst [vmem:[%s328 + $0x19] sm:$0xff] %v244
        %332 = vst [vmem:[%s328 + $0x21] sm:$0xff] %v245
        %333 = vst [vmem:[%s328 + $0x31] sm:$0xff] %v246
        %334 = vst [vmem:[%s328 + $0x39] sm:$0xff] %v247
        %335 = vst [vmem:[%s328 + $0x49] sm:$0xff] %v248
        %336 = vst [vmem:[%s328 + $0x51] sm:$0xff] %v249
        %337 = vst [vmem:[%s328 + $0x61] sm:$0xff] %v250
        %338 = vst [vmem:[%s328 + $0x69] sm:$0xff] %v251
        %339 = vst [vmem:[%s328 + $0x79] sm:$0xff] %v252
        %340 = vst [vmem:[%s328 + $0x81] sm:$0xff] %v253
        %341 = vst [vmem:[%s328 + $0x91] sm:$0xff] %v254
        %342 = vst [vmem:[%s328 + $0x99] sm:$0xff] %v255
        %343 = vst [vmem:[%s328 + $0xa9] sm:$0xff] %v256
        %344 = vst [vmem:[%s328 + $0xb1] sm:$0xff] %v257
        %345 = vst [vmem:[%s328 + $0xc1] sm:$0xff] %v258
        %346 = vst [vmem:[%s328 + $0xc9] sm:$0xff] %v259
        %347 = vst [vmem:[%s328 + $0xd9] sm:$0xff] %v260
        %348 = vst [vmem:[%s328 + $0xe1] sm:$0xff] %v261
        %349 = vst [vmem:[%s328 + $0xf1] sm:$0xff] %v262
        %350 = vst [vmem:[%s328 + $0xf9] sm:$0xff] %v263
        %351 = vst [vmem:[%s328 + $0x109] sm:$0xff] %v264
        %352 = vst [vmem:[%s328 + $0x111] sm:$0xff] %v265
        %353 = vst [vmem:[%s328 + $0x121] sm:$0xff] %v266
        %354 = vst [vmem:[%s328 + $0x129] sm:$0xff] %v267
        %355 = vst [vmem:[%s328 + $0x139] sm:$0xff] %v268
        %356 = vst [vmem:[%s328 + $0x141] sm:$0xff] %v269
        %357 = vst [vmem:[%s328 + $0x151] sm:$0xff] %v270
        %358 = vst [vmem:[%s328 + $0x159] sm:$0xff] %v271
        %359 = vst [vmem:[%s328 + $0x169] sm:$0xff] %v272
        %360 = vst [vmem:[%s328 + $0x171] sm:$0xff] %v273
        %361 = vst [vmem:[#allocation3] sm:$0xff] 0.0
        %362 = vst [vmem:[#allocation3 + $0x8] sm:$0xff] 0.0
        %363 = vst [vmem:[#allocation3 + $0x10] sm:$0xff] 0.0
        %364 = vst [vmem:[#allocation3 + $0x18] sm:$0xff] 0.0
        %365 = vst [vmem:[#allocation3 + $0x20] sm:$0xff] 0.0
        %366 = vst [vmem:[#allocation3 + $0x28] sm:$0xff] 0.0
        %367 = vst [vmem:[#allocation3 + $0x30] sm:$0xff] 0.0
        %368 = vst [vmem:[#allocation3 + $0x38] sm:$0xff] 0.0
        %369 = vst [vmem:[#allocation3 + $0x40] sm:$0xff] 0.0
        %370 = vst [vmem:[#allocation3 + $0x48] sm:$0xff] 0.0
        %371 = vst [vmem:[#allocation3 + $0x50] sm:$0xff] 0.0
        %372 = vst [vmem:[#allocation3 + $0x58] sm:$0xff] 0.0
        %373 = vst [vmem:[#allocation3 + $0x60] sm:$0xff] 0.0
        %374 = vst [vmem:[#allocation3 + $0x68] sm:$0xff] 0.0
        %375 = vst [vmem:[#allocation3 + $0x70] sm:$0xff] 0.0
        %376 = vst [vmem:[#allocation3 + $0x78] sm:$0xff] 0.0
        %377 = vst [vmem:[#allocation3 + $0x80] sm:$0xff] 0.0
        %378 = vst [vmem:[#allocation3 + $0x88] sm:$0xff] 0.0
        %379 = vst [vmem:[#allocation3 + $0x90] sm:$0xff] 0.0
        %380 = vst [vmem:[#allocation3 + $0x98] sm:$0xff] 0.0
        %381 = vst [vmem:[#allocation3 + $0xa0] sm:$0xff] 0.0
        %382 = vst [vmem:[#allocation3 + $0xa8] sm:$0xff] 0.0
        %383 = vst [vmem:[#allocation3 + $0xb0] sm:$0xff] 0.0
        %384 = vst [vmem:[#allocation3 + $0xb8] sm:$0xff] 0.0
        %385 = vst [vmem:[#allocation3 + $0xc0] sm:$0xff] 0.0
        %386 = vst [vmem:[#allocation3 + $0xc8] sm:$0xff] 0.0
        %387 = vst [vmem:[#allocation3 + $0xd0] sm:$0xff] 0.0
        %388 = vst [vmem:[#allocation3 + $0xd8] sm:$0xff] 0.0
        %389 = vst [vmem:[#allocation3 + $0xe0] sm:$0xff] 0.0
        %390 = vst [vmem:[#allocation3 + $0xe8] sm:$0xff] 0.0
        %391 = vst [vmem:[#allocation3 + $0xf0] sm:$0xff] 0.0
        %392 = vst [vmem:[#allocation3 + $0xf8] sm:$0xff] 0.0
        %v393 = vld [vmem:[#allocation2] sm:$0xff]
        %v394 = vld [vmem:[#allocation2 + $0x8] sm:$0xff]
        %v395 = vld [vmem:[#allocation2 + $0x18] sm:$0xff]
        %v396 = vld [vmem:[#allocation2 + $0x20] sm:$0xff]
        %v397 = vld [vmem:[#allocation2 + $0x30] sm:$0xff]
        %v398 = vld [vmem:[#allocation2 + $0x38] sm:$0xff]
        %v399 = vld [vmem:[#allocation2 + $0x48] sm:$0xff]
        %v400 = vld [vmem:[#allocation2 + $0x50] sm:$0xff]
        %v401 = vld [vmem:[#allocation2 + $0x60] sm:$0xff]
        %v402 = vld [vmem:[#allocation2 + $0x68] sm:$0xff]
        %v403 = vld [vmem:[#allocation2 + $0x78] sm:$0xff]
        %v404 = vld [vmem:[#allocation2 + $0x80] sm:$0xff]
        %v405 = vld [vmem:[#allocation2 + $0x90] sm:$0xff]
        %v406 = vld [vmem:[#allocation2 + $0x98] sm:$0xff]
        %v407 = vld [vmem:[#allocation2 + $0xa8] sm:$0xff]
        %v408 = vld [vmem:[#allocation2 + $0xb0] sm:$0xff]
        %v409 = vld [vmem:[#allocation2 + $0xc0] sm:$0xff]
        %v410 = vld [vmem:[#allocation2 + $0xc8] sm:$0xff]
        %v411 = vld [vmem:[#allocation2 + $0xd8] sm:$0xff]
        %v412 = vld [vmem:[#allocation2 + $0xe0] sm:$0xff]
        %v413 = vld [vmem:[#allocation2 + $0xf0] sm:$0xff]
        %v414 = vld [vmem:[#allocation2 + $0xf8] sm:$0xff]
        %v415 = vld [vmem:[#allocation2 + $0x108] sm:$0xff]
        %v416 = vld [vmem:[#allocation2 + $0x110] sm:$0xff]
        %v417 = vld [vmem:[#allocation2 + $0x120] sm:$0xff]
        %v418 = vld [vmem:[#allocation2 + $0x128] sm:$0xff]
        %v419 = vld [vmem:[#allocation2 + $0x138] sm:$0xff]
        %v420 = vld [vmem:[#allocation2 + $0x140] sm:$0xff]
        %v421 = vld [vmem:[#allocation2 + $0x150] sm:$0xff]
        %v422 = vld [vmem:[#allocation2 + $0x158] sm:$0xff]
        %v423 = vld [vmem:[#allocation2 + $0x168] sm:$0xff]
        %v424 = vld [vmem:[#allocation2 + $0x170] sm:$0xff]
        %v425 = vld [vmem:[#allocation3] sm:$0xff]
        %v426 = vld [vmem:[#allocation3 + $0x8] sm:$0xff]
        %v427 = vld [vmem:[#allocation3 + $0x10] sm:$0xff]
        %v428 = vld [vmem:[#allocation3 + $0x18] sm:$0xff]
        %v429 = vld [vmem:[#allocation3 + $0x20] sm:$0xff]
        %v430 = vld [vmem:[#allocation3 + $0x28] sm:$0xff]
        %v431 = vld [vmem:[#allocation3 + $0x30] sm:$0xff]
        %v432 = vld [vmem:[#allocation3 + $0x38] sm:$0xff]
        %v433 = vld [vmem:[#allocation3 + $0x40] sm:$0xff]
        %v434 = vld [vmem:[#allocation3 + $0x48] sm:$0xff]
        %v435 = vld [vmem:[#allocation3 + $0x50] sm:$0xff]
        %v436 = vld [vmem:[#allocation3 + $0x58] sm:$0xff]
        %v437 = vld [vmem:[#allocation3 + $0x60] sm:$0xff]
        %v438 = vld [vmem:[#allocation3 + $0x68] sm:$0xff]
        %v439 = vld [vmem:[#allocation3 + $0x70] sm:$0xff]
        %v440 = vld [vmem:[#allocation3 + $0x78] sm:$0xff]
        %v441 = vld [vmem:[#allocation3 + $0x80] sm:$0xff]
        %v442 = vld [vmem:[#allocation3 + $0x88] sm:$0xff]
        %v443 = vld [vmem:[#allocation3 + $0x90] sm:$0xff]
        %v444 = vld [vmem:[#allocation3 + $0x98] sm:$0xff]
        %v445 = vld [vmem:[#allocation3 + $0xa0] sm:$0xff]
        %v446 = vld [vmem:[#allocation3 + $0xa8] sm:$0xff]
        %v447 = vld [vmem:[#allocation3 + $0xb0] sm:$0xff]
        %v448 = vld [vmem:[#allocation3 + $0xb8] sm:$0xff]
        %v449 = vld [vmem:[#allocation3 + $0xc0] sm:$0xff]
        %v450 = vld [vmem:[#allocation3 + $0xc8] sm:$0xff]
        %v451 = vld [vmem:[#allocation3 + $0xd0] sm:$0xff]
        %v452 = vld [vmem:[#allocation3 + $0xd8] sm:$0xff]
        %v453 = vld [vmem:[#allocation3 + $0xe0] sm:$0xff]
        %v454 = vld [vmem:[#allocation3 + $0xe8] sm:$0xff]
        %v455 = vld [vmem:[#allocation3 + $0xf0] sm:$0xff]
        %v456 = vld [vmem:[#allocation3 + $0xf8] sm:$0xff]
        %v457 = vld [vmem:[#allocation7] sm:$0xff]
        %v458 = vld [vmem:[#allocation7 + $0x8] sm:$0xff]
        %v459 = vld [vmem:[#allocation7 + $0x10] sm:$0xff]
        %v460 = vld [vmem:[#allocation7 + $0x18] sm:$0xff]
        %v461 = vld [vmem:[#allocation7 + $0x20] sm:$0xff]
        %v462 = vld [vmem:[#allocation7 + $0x28] sm:$0xff]
        %v463 = vld [vmem:[#allocation7 + $0x30] sm:$0xff]
        %v464 = vld [vmem:[#allocation7 + $0x38] sm:$0xff]
        %v465 = vld [vmem:[#allocation7 + $0x40] sm:$0xff]
        %v466 = vld [vmem:[#allocation7 + $0x48] sm:$0xff]
        %v467 = vld [vmem:[#allocation7 + $0x50] sm:$0xff]
        %v468 = vld [vmem:[#allocation7 + $0x58] sm:$0xff]
        %v469 = vld [vmem:[#allocation7 + $0x60] sm:$0xff]
        %v470 = vld [vmem:[#allocation7 + $0x68] sm:$0xff]
        %v471 = vld [vmem:[#allocation7 + $0x70] sm:$0xff]
        %v472 = vld [vmem:[#allocation7 + $0x78] sm:$0xff]
        %473 = vmatprep.subr.mxu0 0.0
        %474 = vmatpush1.msra.mxu0 %v457
        %475 = vmatprep.subr.mxu0 0.0
        %476 = vmatpush1.msra.mxu0 %v458
        %477 = vmatprep.subr.mxu0 0.0
        %478 = vmatpush1.msra.mxu0 %v459
        %479 = vmatprep.subr.mxu0 0.0
        %480 = vmatpush1.msra.mxu0 %v460
        %481 = vmatprep.subr.mxu0 0.0
        %482 = vmatpush1.msra.mxu0 %v461
        %483 = vmatprep.subr.mxu0 0.0
        %484 = vmatpush1.msra.mxu0 %v462
        %485 = vmatprep.subr.mxu0 0.0
        %486 = vmatpush1.msra.mxu0 %v463
        %487 = vmatprep.subr.mxu0 0.0
        %488 = vmatpush1.msra.mxu0 %v464
        %489 = vmatprep.subr.mxu0 0.0
        %490 = vmatpush1.msra.mxu0 %v465
        %491 = vmatprep.subr.mxu0 0.0
        %492 = vmatpush1.msra.mxu0 %v466
        %493 = vmatprep.subr.mxu0 0.0
        %494 = vmatpush1.msra.mxu0 %v467
        %495 = vmatprep.subr.mxu0 0.0
        %496 = vmatpush1.msra.mxu0 %v468
        %497 = vmatprep.subr.mxu0 0.0
        %498 = vmatpush1.msra.mxu0 %v469
        %499 = vmatprep.subr.mxu0 0.0
        %500 = vmatpush1.msra.mxu0 %v470
        %501 = vmatprep.subr.mxu0 0.0
        %502 = vmatpush1.msra.mxu0 %v471
        %503 = vmatprep.subr.mxu0 0.0
        %504 = vmatpush1.msra.mxu0 %v472
        %505 = vmatprep.subr.mxu0 0.0
        %506 = vmatpush1.msra.mxu0 0.0
        %507 = vmatprep.subr.mxu0 0.0
        %508 = vmatpush1.msra.mxu0 0.0
        %509 = vmatprep.subr.mxu0 0.0
        %510 = vmatpush1.msra.mxu0 0.0
        %511 = vmatprep.subr.mxu0 0.0
        %512 = vmatpush1.msra.mxu0 0.0
        %513 = vmatprep.subr.mxu0 0.0
        %514 = vmatpush1.msra.mxu0 0.0
        %515 = vmatprep.subr.mxu0 0.0
        %516 = vmatpush1.msra.mxu0 0.0
        %517 = vmatprep.subr.mxu0 0.0
        %518 = vmatpush1.msra.mxu0 0.0
        %519 = vmatprep.subr.mxu0 0.0
        %520 = vmatpush1.msra.mxu0 0.0
        %521 = vmatprep.subr.mxu0 0.0
        %522 = vmatpush1.msra.mxu0 0.0
        %523 = vmatprep.subr.mxu0 0.0
        %524 = vmatpush1.msra.mxu0 0.0
        %525 = vmatprep.subr.mxu0 0.0
        %526 = vmatpush1.msra.mxu0 0.0
        %527 = vmatprep.subr.mxu0 0.0
        %528 = vmatpush1.msra.mxu0 0.0
        %529 = vmatprep.subr.mxu0 0.0
        %530 = vmatpush1.msra.mxu0 0.0
        %531 = vmatprep.subr.mxu0 0.0
        %532 = vmatpush1.msra.mxu0 0.0
        %533 = vmatprep.subr.mxu0 0.0
        %534 = vmatpush1.msra.mxu0 0.0
        %535 = vmatprep.subr.mxu0 0.0
        %536 = vmatpush1.msra.mxu0 0.0
        %537 = vmatprep.mubr.f32.mxu0 0.0
        %538 = vmatmul.mubr.f32.gmra.mrb[0].mxu0 %v393
        %v539 = vpop.f32.mrb[0].mxu0
        %v540 = vadd.f32 0.0, %v539
        %v541 = vpop.f32.mrb[0].mxu0
        %542 = vmatprep.mubr.f32.mxu0 0.0
        %543 = vmatmul.mubr.f32.gmra.mrb[0].mxu0 %v394
        %v544 = vpop.f32.mrb[0].mxu0
        %v545 = vadd.f32 0.0, %v544
        %v546 = vpop.f32.mrb[0].mxu0
        %547 = vmatprep.mubr.f32.mxu0 0.0
        %548 = vmatmul.mubr.f32.gmra.mrb[0].mxu0 %v395
        %v549 = vpop.f32.mrb[0].mxu0
        %v550 = vadd.f32 0.0, %v549
        %v551 = vpop.f32.mrb[0].mxu0
        %552 = vmatprep.mubr.f32.mxu0 0.0
        %553 = vmatmul.mubr.f32.gmra.mrb[0].mxu0 %v396
        %v554 = vpop.f32.mrb[0].mxu0
        %v555 = vadd.f32 0.0, %v554
        %v556 = vpop.f32.mrb[0].mxu0
        %557 = vmatprep.mubr.f32.mxu0 0.0
        %558 = vmatmul.mubr.f32.gmra.mrb[0].mxu0 %v397
        %v559 = vpop.f32.mrb[0].mxu0
        %v560 = vadd.f32 0.0, %v559
        %v561 = vpop.f32.mrb[0].mxu0
        %562 = vmatprep.mubr.f32.mxu0 0.0
        %563 = vmatmul.mubr.f32.gmra.mrb[0].mxu0 %v398
        %v564 = vpop.f32.mrb[0].mxu0
        %v565 = vadd.f32 0.0, %v564
        %v566 = vpop.f32.mrb[0].mxu0
        %567 = vmatprep.mubr.f32.mxu0 0.0
        %568 = vmatmul.mubr.f32.gmra.mrb[0].mxu0 %v399
        %v569 = vpop.f32.mrb[0].mxu0
        %v570 = vadd.f32 0.0, %v569
        %v571 = vpop.f32.mrb[0].mxu0
        %572 = vmatprep.mubr.f32.mxu0 0.0
        %573 = vmatmul.mubr.f32.gmra.mrb[0].mxu0 %v400
        %v574 = vpop.f32.mrb[0].mxu0
        %v575 = vadd.f32 0.0, %v574
        %v576 = vpop.f32.mrb[0].mxu0
        %577 = vmatprep.mubr.f32.mxu0 0.0
        %578 = vmatmul.mubr.f32.gmra.mrb[0].mxu0 %v401
        %v579 = vpop.f32.mrb[0].mxu0
        %v580 = vadd.f32 0.0, %v579
        %v581 = vpop.f32.mrb[0].mxu0
        %582 = vmatprep.mubr.f32.mxu0 0.0
        %583 = vmatmul.mubr.f32.gmra.mrb[0].mxu0 %v402
        %v584 = vpop.f32.mrb[0].mxu0
        %v585 = vadd.f32 0.0, %v584
        %v586 = vpop.f32.mrb[0].mxu0
        %587 = vmatprep.mubr.f32.mxu0 0.0
        %588 = vmatmul.mubr.f32.gmra.mrb[0].mxu0 %v403
        %v589 = vpop.f32.mrb[0].mxu0
        %v590 = vadd.f32 0.0, %v589
        %v591 = vpop.f32.mrb[0].mxu0
        %592 = vmatprep.mubr.f32.mxu0 0.0
        %593 = vmatmul.mubr.f32.gmra.mrb[0].mxu0 %v404
        %v594 = vpop.f32.mrb[0].mxu0
        %v595 = vadd.f32 0.0, %v594
        %v596 = vpop.f32.mrb[0].mxu0
        %597 = vmatprep.mubr.f32.mxu0 0.0
        %598 = vmatmul.mubr.f32.gmra.mrb[0].mxu0 %v405
        %v599 = vpop.f32.mrb[0].mxu0
        %v600 = vadd.f32 0.0, %v599
        %v601 = vpop.f32.mrb[0].mxu0
        %602 = vmatprep.mubr.f32.mxu0 0.0
        %603 = vmatmul.mubr.f32.gmra.mrb[0].mxu0 %v406
        %v604 = vpop.f32.mrb[0].mxu0
        %v605 = vadd.f32 0.0, %v604
        %v606 = vpop.f32.mrb[0].mxu0
        %607 = vmatprep.mubr.f32.mxu0 0.0
        %608 = vmatmul.mubr.f32.gmra.mrb[0].mxu0 %v407
        %v609 = vpop.f32.mrb[0].mxu0
        %v610 = vadd.f32 0.0, %v609
        %v611 = vpop.f32.mrb[0].mxu0
        %612 = vmatprep.mubr.f32.mxu0 0.0
        %613 = vmatmul.mubr.f32.gmra.mrb[0].mxu0 %v408
        %v614 = vpop.f32.mrb[0].mxu0
        %v615 = vadd.f32 0.0, %v614
        %v616 = vpop.f32.mrb[0].mxu0
        %617 = vmatprep.mubr.f32.mxu0 0.0
        %618 = vmatmul.mubr.f32.gmra.mrb[0].mxu0 %v409
        %v619 = vpop.f32.mrb[0].mxu0
        %v620 = vadd.f32 0.0, %v619
        %v621 = vpop.f32.mrb[0].mxu0
        %622 = vmatprep.mubr.f32.mxu0 0.0
        %623 = vmatmul.mubr.f32.gmra.mrb[0].mxu0 %v410
        %v624 = vpop.f32.mrb[0].mxu0
        %v625 = vadd.f32 0.0, %v624
        %v626 = vpop.f32.mrb[0].mxu0
        %627 = vmatprep.mubr.f32.mxu0 0.0
        %628 = vmatmul.mubr.f32.gmra.mrb[0].mxu0 %v411
        %v629 = vpop.f32.mrb[0].mxu0
        %v630 = vadd.f32 0.0, %v629
        %v631 = vpop.f32.mrb[0].mxu0
        %632 = vmatprep.mubr.f32.mxu0 0.0
        %633 = vmatmul.mubr.f32.gmra.mrb[0].mxu0 %v412
        %v634 = vpop.f32.mrb[0].mxu0
        %v635 = vadd.f32 0.0, %v634
        %v636 = vpop.f32.mrb[0].mxu0
        %637 = vmatprep.mubr.f32.mxu0 0.0
        %638 = vmatmul.mubr.f32.gmra.mrb[0].mxu0 %v413
        %v639 = vpop.f32.mrb[0].mxu0
        %v640 = vadd.f32 0.0, %v639
        %v641 = vpop.f32.mrb[0].mxu0
        %642 = vmatprep.mubr.f32.mxu0 0.0
        %643 = vmatmul.mubr.f32.gmra.mrb[0].mxu0 %v414
        %v644 = vpop.f32.mrb[0].mxu0
        %v645 = vadd.f32 0.0, %v644
        %v646 = vpop.f32.mrb[0].mxu0
        %647 = vmatprep.mubr.f32.mxu0 0.0
        %648 = vmatmul.mubr.f32.gmra.mrb[0].mxu0 %v415
        %v649 = vpop.f32.mrb[0].mxu0
        %v650 = vadd.f32 0.0, %v649
        %v651 = vpop.f32.mrb[0].mxu0
        %652 = vmatprep.mubr.f32.mxu0 0.0
        %653 = vmatmul.mubr.f32.gmra.mrb[0].mxu0 %v416
        %v654 = vpop.f32.mrb[0].mxu0
        %v655 = vadd.f32 0.0, %v654
        %v656 = vpop.f32.mrb[0].mxu0
        %657 = vmatprep.mubr.f32.mxu0 0.0
        %658 = vmatmul.mubr.f32.gmra.mrb[0].mxu0 %v417
        %v659 = vpop.f32.mrb[0].mxu0
        %v660 = vadd.f32 0.0, %v659
        %v661 = vpop.f32.mrb[0].mxu0
        %662 = vmatprep.mubr.f32.mxu0 0.0
        %663 = vmatmul.mubr.f32.gmra.mrb[0].mxu0 %v418
        %v664 = vpop.f32.mrb[0].mxu0
        %v665 = vadd.f32 0.0, %v664
        %v666 = vpop.f32.mrb[0].mxu0
        %667 = vmatprep.mubr.f32.mxu0 0.0
        %668 = vmatmul.mubr.f32.gmra.mrb[0].mxu0 %v419
        %v669 = vpop.f32.mrb[0].mxu0
        %v670 = vadd.f32 0.0, %v669
        %v671 = vpop.f32.mrb[0].mxu0
        %672 = vmatprep.mubr.f32.mxu0 0.0
        %673 = vmatmul.mubr.f32.gmra.mrb[0].mxu0 %v420
        %v674 = vpop.f32.mrb[0].mxu0
        %v675 = vadd.f32 0.0, %v674
        %v676 = vpop.f32.mrb[0].mxu0
        %677 = vmatprep.mubr.f32.mxu0 0.0
        %678 = vmatmul.mubr.f32.gmra.mrb[0].mxu0 %v421
        %v679 = vpop.f32.mrb[0].mxu0
        %v680 = vadd.f32 0.0, %v679
        %v681 = vpop.f32.mrb[0].mxu0
        %682 = vmatprep.mubr.f32.mxu0 0.0
        %683 = vmatmul.mubr.f32.gmra.mrb[0].mxu0 %v422
        %v684 = vpop.f32.mrb[0].mxu0
        %v685 = vadd.f32 0.0, %v684
        %v686 = vpop.f32.mrb[0].mxu0
        %687 = vmatprep.mubr.f32.mxu0 0.0
        %688 = vmatmul.mubr.f32.gmra.mrb[0].mxu0 %v423
        %v689 = vpop.f32.mrb[0].mxu0
        %v690 = vadd.f32 0.0, %v689
        %v691 = vpop.f32.mrb[0].mxu0
        %692 = vmatprep.mubr.f32.mxu0 0.0
        %693 = vmatmul.mubr.f32.gmra.mrb[0].mxu0 %v424
        %v694 = vpop.f32.mrb[0].mxu0
        %v695 = vadd.f32 0.0, %v694
        %v696 = vpop.f32.mrb[0].mxu0
        %697 = vdwg.mxu0
        %v698 = vadd.f32 %v425, %v540
        %v699 = vadd.f32 %v426, %v545
        %v700 = vadd.f32 %v427, %v550
        %v701 = vadd.f32 %v428, %v555
        %v702 = vadd.f32 %v429, %v560
        %v703 = vadd.f32 %v430, %v565
        %v704 = vadd.f32 %v431, %v570
        %v705 = vadd.f32 %v432, %v575
        %v706 = vadd.f32 %v433, %v580
        %v707 = vadd.f32 %v434, %v585
        %v708 = vadd.f32 %v435, %v590
        %v709 = vadd.f32 %v436, %v595
        %v710 = vadd.f32 %v437, %v600
        %v711 = vadd.f32 %v438, %v605
        %v712 = vadd.f32 %v439, %v610
        %v713 = vadd.f32 %v440, %v615
        %v714 = vadd.f32 %v441, %v620
        %v715 = vadd.f32 %v442, %v625
        %v716 = vadd.f32 %v443, %v630
        %v717 = vadd.f32 %v444, %v635
        %v718 = vadd.f32 %v445, %v640
        %v719 = vadd.f32 %v446, %v645
        %v720 = vadd.f32 %v447, %v650
        %v721 = vadd.f32 %v448, %v655
        %v722 = vadd.f32 %v449, %v660
        %v723 = vadd.f32 %v450, %v665
        %v724 = vadd.f32 %v451, %v670
        %v725 = vadd.f32 %v452, %v675
        %v726 = vadd.f32 %v453, %v680
        %v727 = vadd.f32 %v454, %v685
        %v728 = vadd.f32 %v455, %v690
        %v729 = vadd.f32 %v456, %v695
        %730 = vst [vmem:[#allocation3] sm:$0xff] %v698
        %731 = vst [vmem:[#allocation3 + $0x8] sm:$0xff] %v699
        %732 = vst [vmem:[#allocation3 + $0x10] sm:$0xff] %v700
        %733 = vst [vmem:[#allocation3 + $0x18] sm:$0xff] %v701
        %734 = vst [vmem:[#allocation3 + $0x20] sm:$0xff] %v702
        %735 = vst [vmem:[#allocation3 + $0x28] sm:$0xff] %v703
        %736 = vst [vmem:[#allocation3 + $0x30] sm:$0xff] %v704
        %737 = vst [vmem:[#allocation3 + $0x38] sm:$0xff] %v705
        %738 = vst [vmem:[#allocation3 + $0x40] sm:$0xff] %v706
        %739 = vst [vmem:[#allocation3 + $0x48] sm:$0xff] %v707
        %740 = vst [vmem:[#allocation3 + $0x50] sm:$0xff] %v708
        %741 = vst [vmem:[#allocation3 + $0x58] sm:$0xff] %v709
        %742 = vst [vmem:[#allocation3 + $0x60] sm:$0xff] %v710
        %743 = vst [vmem:[#allocation3 + $0x68] sm:$0xff] %v711
        %744 = vst [vmem:[#allocation3 + $0x70] sm:$0xff] %v712
        %745 = vst [vmem:[#allocation3 + $0x78] sm:$0xff] %v713
        %746 = vst [vmem:[#allocation3 + $0x80] sm:$0xff] %v714
        %747 = vst [vmem:[#allocation3 + $0x88] sm:$0xff] %v715
        %748 = vst [vmem:[#allocation3 + $0x90] sm:$0xff] %v716
        %749 = vst [vmem:[#allocation3 + $0x98] sm:$0xff] %v717
        %750 = vst [vmem:[#allocation3 + $0xa0] sm:$0xff] %v718
        %751 = vst [vmem:[#allocation3 + $0xa8] sm:$0xff] %v719
        %752 = vst [vmem:[#allocation3 + $0xb0] sm:$0xff] %v720
        %753 = vst [vmem:[#allocation3 + $0xb8] sm:$0xff] %v721
        %754 = vst [vmem:[#allocation3 + $0xc0] sm:$0xff] %v722
        %755 = vst [vmem:[#allocation3 + $0xc8] sm:$0xff] %v723
        %756 = vst [vmem:[#allocation3 + $0xd0] sm:$0xff] %v724
        %757 = vst [vmem:[#allocation3 + $0xd8] sm:$0xff] %v725
        %758 = vst [vmem:[#allocation3 + $0xe0] sm:$0xff] %v726
        %759 = vst [vmem:[#allocation3 + $0xe8] sm:$0xff] %v727
        %760 = vst [vmem:[#allocation3 + $0xf0] sm:$0xff] %v728
        %761 = vst [vmem:[#allocation3 + $0xf8] sm:$0xff] %v729
        %v762 = vld [vmem:[#allocation2 + $0x1] sm:$0xff]
        %v763 = vld [vmem:[#allocation2 + $0x9] sm:$0xff]
        %v764 = vld [vmem:[#allocation2 + $0x19] sm:$0xff]
        %v765 = vld [vmem:[#allocation2 + $0x21] sm:$0xff]
        %v766 = vld [vmem:[#allocation2 + $0x31] sm:$0xff]
        %v767 = vld [vmem:[#allocation2 + $0x39] sm:$0xff]
        %v768 = vld [vmem:[#allocation2 + $0x49] sm:$0xff]
        %v769 = vld [vmem:[#allocation2 + $0x51] sm:$0xff]
        %v770 = vld [vmem:[#allocation2 + $0x61] sm:$0xff]
        %v771 = vld [vmem:[#allocation2 + $0x69] sm:$0xff]
        %v772 = vld [vmem:[#allocation2 + $0x79] sm:$0xff]
        %v773 = vld [vmem:[#allocation2 + $0x81] sm:$0xff]
        %v774 = vld [vmem:[#allocation2 + $0x91] sm:$0xff]
        %v775 = vld [vmem:[#allocation2 + $0x99] sm:$0xff]
        %v776 = vld [vmem:[#allocation2 + $0xa9] sm:$0xff]
        %v777 = vld [vmem:[#allocation2 + $0xb1] sm:$0xff]
        %v778 = vld [vmem:[#allocation2 + $0xc1] sm:$0xff]
        %v779 = vld [vmem:[#allocation2 + $0xc9] sm:$0xff]
        %v780 = vld [vmem:[#allocation2 + $0xd9] sm:$0xff]
        %v781 = vld [vmem:[#allocation2 + $0xe1] sm:$0xff]
        %v782 = vld [vmem:[#allocation2 + $0xf1] sm:$0xff]
        %v783 = vld [vmem:[#allocation2 + $0xf9] sm:$0xff]
        %v784 = vld [vmem:[#allocation2 + $0x109] sm:$0xff]
        %v785 = vld [vmem:[#allocation2 + $0x111] sm:$0xff]
        %v786 = vld [vmem:[#allocation2 + $0x121] sm:$0xff]
        %v787 = vld [vmem:[#allocation2 + $0x129] sm:$0xff]
        %v788 = vld [vmem:[#allocation2 + $0x139] sm:$0xff]
        %v789 = vld [vmem:[#allocation2 + $0x141] sm:$0xff]
        %v790 = vld [vmem:[#allocation2 + $0x151] sm:$0xff]
        %v791 = vld [vmem:[#allocation2 + $0x159] sm:$0xff]
        %v792 = vld [vmem:[#allocation2 + $0x169] sm:$0xff]
        %v793 = vld [vmem:[#allocation2 + $0x171] sm:$0xff]
        %v794 = vld [vmem:[#allocation3] sm:$0xff]
        %v795 = vld [vmem:[#allocation3 + $0x8] sm:$0xff]
        %v796 = vld [vmem:[#allocation3 + $0x10] sm:$0xff]
        %v797 = vld [vmem:[#allocation3 + $0x18] sm:$0xff]
        %v798 = vld [vmem:[#allocation3 + $0x20] sm:$0xff]
        %v799 = vld [vmem:[#allocation3 + $0x28] sm:$0xff]
        %v800 = vld [vmem:[#allocation3 + $0x30] sm:$0xff]
        %v801 = vld [vmem:[#allocation3 + $0x38] sm:$0xff]
        %v802 = vld [vmem:[#allocation3 + $0x40] sm:$0xff]
        %v803 = vld [vmem:[#allocation3 + $0x48] sm:$0xff]
        %v804 = vld [vmem:[#allocation3 + $0x50] sm:$0xff]
        %v805 = vld [vmem:[#allocation3 + $0x58] sm:$0xff]
        %v806 = vld [vmem:[#allocation3 + $0x60] sm:$0xff]
        %v807 = vld [vmem:[#allocation3 + $0x68] sm:$0xff]
        %v808 = vld [vmem:[#allocation3 + $0x70] sm:$0xff]
        %v809 = vld [vmem:[#allocation3 + $0x78] sm:$0xff]
        %v810 = vld [vmem:[#allocation3 + $0x80] sm:$0xff]
        %v811 = vld [vmem:[#allocation3 + $0x88] sm:$0xff]
        %v812 = vld [vmem:[#allocation3 + $0x90] sm:$0xff]
        %v813 = vld [vmem:[#allocation3 + $0x98] sm:$0xff]
        %v814 = vld [vmem:[#allocation3 + $0xa0] sm:$0xff]
        %v815 = vld [vmem:[#allocation3 + $0xa8] sm:$0xff]
        %v816 = vld [vmem:[#allocation3 + $0xb0] sm:$0xff]
        %v817 = vld [vmem:[#allocation3 + $0xb8] sm:$0xff]
        %v818 = vld [vmem:[#allocation3 + $0xc0] sm:$0xff]
        %v819 = vld [vmem:[#allocation3 + $0xc8] sm:$0xff]
        %v820 = vld [vmem:[#allocation3 + $0xd0] sm:$0xff]
        %v821 = vld [vmem:[#allocation3 + $0xd8] sm:$0xff]
        %v822 = vld [vmem:[#allocation3 + $0xe0] sm:$0xff]
        %v823 = vld [vmem:[#allocation3 + $0xe8] sm:$0xff]
        %v824 = vld [vmem:[#allocation3 + $0xf0] sm:$0xff]
        %v825 = vld [vmem:[#allocation3 + $0xf8] sm:$0xff]
        %s826 = scalar_lea.vmem [#allocation7], 128
        %v827 = vld [vmem:[%s826] sm:$0xff]
        %v828 = vld [vmem:[%s826 + $0x8] sm:$0xff]
        %v829 = vld [vmem:[%s826 + $0x10] sm:$0xff]
        %v830 = vld [vmem:[%s826 + $0x18] sm:$0xff]
        %v831 = vld [vmem:[%s826 + $0x20] sm:$0xff]
        %v832 = vld [vmem:[%s826 + $0x28] sm:$0xff]
        %v833 = vld [vmem:[%s826 + $0x30] sm:$0xff]
        %v834 = vld [vmem:[%s826 + $0x38] sm:$0xff]
        %v835 = vld [vmem:[%s826 + $0x40] sm:$0xff]
        %v836 = vld [vmem:[%s826 + $0x48] sm:$0xff]
        %v837 = vld [vmem:[%s826 + $0x50] sm:$0xff]
        %v838 = vld [vmem:[%s826 + $0x58] sm:$0xff]
        %v839 = vld [vmem:[%s826 + $0x60] sm:$0xff]
        %v840 = vld [vmem:[%s826 + $0x68] sm:$0xff]
        %v841 = vld [vmem:[%s826 + $0x70] sm:$0xff]
        %v842 = vld [vmem:[%s826 + $0x78] sm:$0xff]
        %843 = vmatprep.subr.mxu0 0.0
        %844 = vmatpush1.msra.mxu0 %v827
        %845 = vmatprep.subr.mxu0 0.0
        %846 = vmatpush1.msra.mxu0 %v828
        %847 = vmatprep.subr.mxu0 0.0
        %848 = vmatpush1.msra.mxu0 %v829
        %849 = vmatprep.subr.mxu0 0.0
        %850 = vmatpush1.msra.mxu0 %v830
        %851 = vmatprep.subr.mxu0 0.0
        %852 = vmatpush1.msra.mxu0 %v831
        %853 = vmatprep.subr.mxu0 0.0
        %854 = vmatpush1.msra.mxu0 %v832
        %855 = vmatprep.subr.mxu0 0.0
        %856 = vmatpush1.msra.mxu0 %v833
        %857 = vmatprep.subr.mxu0 0.0
        %858 = vmatpush1.msra.mxu0 %v834
        %859 = vmatprep.subr.mxu0 0.0
        %860 = vmatpush1.msra.mxu0 %v835
        %861 = vmatprep.subr.mxu0 0.0
        %862 = vmatpush1.msra.mxu0 %v836
        %863 = vmatprep.subr.mxu0 0.0
        %864 = vmatpush1.msra.mxu0 %v837
        %865 = vmatprep.subr.mxu0 0.0
        %866 = vmatpush1.msra.mxu0 %v838
        %867 = vmatprep.subr.mxu0 0.0
        %868 = vmatpush1.msra.mxu0 %v839
        %869 = vmatprep.subr.mxu0 0.0
        %870 = vmatpush1.msra.mxu0 %v840
        %871 = vmatprep.subr.mxu0 0.0
        %872 = vmatpush1.msra.mxu0 %v841
        %873 = vmatprep.subr.mxu0 0.0
        %874 = vmatpush1.msra.mxu0 %v842
        %875 = vmatprep.subr.mxu0 0.0
        %876 = vmatpush1.msra.mxu0 0.0
        %877 = vmatprep.subr.mxu0 0.0
        %878 = vmatpush1.msra.mxu0 0.0
        %879 = vmatprep.subr.mxu0 0.0
        %880 = vmatpush1.msra.mxu0 0.0
        %881 = vmatprep.subr.mxu0 0.0
        %882 = vmatpush1.msra.mxu0 0.0
        %883 = vmatprep.subr.mxu0 0.0
        %884 = vmatpush1.msra.mxu0 0.0
        %885 = vmatprep.subr.mxu0 0.0
        %886 = vmatpush1.msra.mxu0 0.0
        %887 = vmatprep.subr.mxu0 0.0
        %888 = vmatpush1.msra.mxu0 0.0
        %889 = vmatprep.subr.mxu0 0.0
        %890 = vmatpush1.msra.mxu0 0.0
        %891 = vmatprep.subr.mxu0 0.0
        %892 = vmatpush1.msra.mxu0 0.0
        %893 = vmatprep.subr.mxu0 0.0
        %894 = vmatpush1.msra.mxu0 0.0
        %895 = vmatprep.subr.mxu0 0.0
        %896 = vmatpush1.msra.mxu0 0.0
        %897 = vmatprep.subr.mxu0 0.0
        %898 = vmatpush1.msra.mxu0 0.0
        %899 = vmatprep.subr.mxu0 0.0
        %900 = vmatpush1.msra.mxu0 0.0
        %901 = vmatprep.subr.mxu0 0.0
        %902 = vmatpush1.msra.mxu0 0.0
        %903 = vmatprep.subr.mxu0 0.0
        %904 = vmatpush1.msra.mxu0 0.0
        %905 = vmatprep.subr.mxu0 0.0
        %906 = vmatpush1.msra.mxu0 0.0
        %907 = vmatprep.mubr.f32.mxu0 0.0
        %908 = vmatmul.mubr.f32.gmra.mrb[0].mxu0 %v762
        %v909 = vpop.f32.mrb[0].mxu0
        %v910 = vadd.f32 0.0, %v909
        %v911 = vpop.f32.mrb[0].mxu0
        %912 = vmatprep.mubr.f32.mxu0 0.0
        %913 = vmatmul.mubr.f32.gmra.mrb[0].mxu0 %v763
        %v914 = vpop.f32.mrb[0].mxu0
        %v915 = vadd.f32 0.0, %v914
        %v916 = vpop.f32.mrb[0].mxu0
        %917 = vmatprep.mubr.f32.mxu0 0.0
        %918 = vmatmul.mubr.f32.gmra.mrb[0].mxu0 %v764
        %v919 = vpop.f32.mrb[0].mxu0
        %v920 = vadd.f32 0.0, %v919
        %v921 = vpop.f32.mrb[0].mxu0
        %922 = vmatprep.mubr.f32.mxu0 0.0
        %923 = vmatmul.mubr.f32.gmra.mrb[0].mxu0 %v765
        %v924 = vpop.f32.mrb[0].mxu0
        %v925 = vadd.f32 0.0, %v924
        %v926 = vpop.f32.mrb[0].mxu0
        %927 = vmatprep.mubr.f32.mxu0 0.0
        %928 = vmatmul.mubr.f32.gmra.mrb[0].mxu0 %v766
        %v929 = vpop.f32.mrb[0].mxu0
        %v930 = vadd.f32 0.0, %v929
        %v931 = vpop.f32.mrb[0].mxu0
        %932 = vmatprep.mubr.f32.mxu0 0.0
        %933 = vmatmul.mubr.f32.gmra.mrb[0].mxu0 %v767
        %v934 = vpop.f32.mrb[0].mxu0
        %v935 = vadd.f32 0.0, %v934
        %v936 = vpop.f32.mrb[0].mxu0
        %937 = vmatprep.mubr.f32.mxu0 0.0
        %938 = vmatmul.mubr.f32.gmra.mrb[0].mxu0 %v768
        %v939 = vpop.f32.mrb[0].mxu0
        %v940 = vadd.f32 0.0, %v939
        %v941 = vpop.f32.mrb[0].mxu0
        %942 = vmatprep.mubr.f32.mxu0 0.0
        %943 = vmatmul.mubr.f32.gmra.mrb[0].mxu0 %v769
        %v944 = vpop.f32.mrb[0].mxu0
        %v945 = vadd.f32 0.0, %v944
        %v946 = vpop.f32.mrb[0].mxu0
        %947 = vmatprep.mubr.f32.mxu0 0.0
        %948 = vmatmul.mubr.f32.gmra.mrb[0].mxu0 %v770
        %v949 = vpop.f32.mrb[0].mxu0
        %v950 = vadd.f32 0.0, %v949
        %v951 = vpop.f32.mrb[0].mxu0
        %952 = vmatprep.mubr.f32.mxu0 0.0
        %953 = vmatmul.mubr.f32.gmra.mrb[0].mxu0 %v771
        %v954 = vpop.f32.mrb[0].mxu0
        %v955 = vadd.f32 0.0, %v954
        %v956 = vpop.f32.mrb[0].mxu0
        %957 = vmatprep.mubr.f32.mxu0 0.0
        %958 = vmatmul.mubr.f32.gmra.mrb[0].mxu0 %v772
        %v959 = vpop.f32.mrb[0].mxu0
        %v960 = vadd.f32 0.0, %v959
        %v961 = vpop.f32.mrb[0].mxu0
        %962 = vmatprep.mubr.f32.mxu0 0.0
        %963 = vmatmul.mubr.f32.gmra.mrb[0].mxu0 %v773
        %v964 = vpop.f32.mrb[0].mxu0
        %v965 = vadd.f32 0.0, %v964
        %v966 = vpop.f32.mrb[0].mxu0
        %967 = vmatprep.mubr.f32.mxu0 0.0
        %968 = vmatmul.mubr.f32.gmra.mrb[0].mxu0 %v774
        %v969 = vpop.f32.mrb[0].mxu0
        %v970 = vadd.f32 0.0, %v969
        %v971 = vpop.f32.mrb[0].mxu0
        %972 = vmatprep.mubr.f32.mxu0 0.0
        %973 = vmatmul.mubr.f32.gmra.mrb[0].mxu0 %v775
        %v974 = vpop.f32.mrb[0].mxu0
        %v975 = vadd.f32 0.0, %v974
        %v976 = vpop.f32.mrb[0].mxu0
        %977 = vmatprep.mubr.f32.mxu0 0.0
        %978 = vmatmul.mubr.f32.gmra.mrb[0].mxu0 %v776
        %v979 = vpop.f32.mrb[0].mxu0
        %v980 = vadd.f32 0.0, %v979
        %v981 = vpop.f32.mrb[0].mxu0
        %982 = vmatprep.mubr.f32.mxu0 0.0
        %983 = vmatmul.mubr.f32.gmra.mrb[0].mxu0 %v777
        %v984 = vpop.f32.mrb[0].mxu0
        %v985 = vadd.f32 0.0, %v984
        %v986 = vpop.f32.mrb[0].mxu0
        %987 = vmatprep.mubr.f32.mxu0 0.0
        %988 = vmatmul.mubr.f32.gmra.mrb[0].mxu0 %v778
        %v989 = vpop.f32.mrb[0].mxu0
        %v990 = vadd.f32 0.0, %v989
        %v991 = vpop.f32.mrb[0].mxu0
        %992 = vmatprep.mubr.f32.mxu0 0.0
        %993 = vmatmul.mubr.f32.gmra.mrb[0].mxu0 %v779
        %v994 = vpop.f32.mrb[0].mxu0
        %v995 = vadd.f32 0.0, %v994
        %v996 = vpop.f32.mrb[0].mxu0
        %997 = vmatprep.mubr.f32.mxu0 0.0
        %998 = vmatmul.mubr.f32.gmra.mrb[0].mxu0 %v780
        %v999 = vpop.f32.mrb[0].mxu0
        %v1000 = vadd.f32 0.0, %v999
        %v1001 = vpop.f32.mrb[0].mxu0
        %1002 = vmatprep.mubr.f32.mxu0 0.0
        %1003 = vmatmul.mubr.f32.gmra.mrb[0].mxu0 %v781
        %v1004 = vpop.f32.mrb[0].mxu0
        %v1005 = vadd.f32 0.0, %v1004
        %v1006 = vpop.f32.mrb[0].mxu0
        %1007 = vmatprep.mubr.f32.mxu0 0.0
        %1008 = vmatmul.mubr.f32.gmra.mrb[0].mxu0 %v782
        %v1009 = vpop.f32.mrb[0].mxu0
        %v1010 = vadd.f32 0.0, %v1009
        %v1011 = vpop.f32.mrb[0].mxu0
        %1012 = vmatprep.mubr.f32.mxu0 0.0
        %1013 = vmatmul.mubr.f32.gmra.mrb[0].mxu0 %v783
        %v1014 = vpop.f32.mrb[0].mxu0
        %v1015 = vadd.f32 0.0, %v1014
        %v1016 = vpop.f32.mrb[0].mxu0
        %1017 = vmatprep.mubr.f32.mxu0 0.0
        %1018 = vmatmul.mubr.f32.gmra.mrb[0].mxu0 %v784
        %v1019 = vpop.f32.mrb[0].mxu0
        %v1020 = vadd.f32 0.0, %v1019
        %v1021 = vpop.f32.mrb[0].mxu0
        %1022 = vmatprep.mubr.f32.mxu0 0.0
        %1023 = vmatmul.mubr.f32.gmra.mrb[0].mxu0 %v785
        %v1024 = vpop.f32.mrb[0].mxu0
        %v1025 = vadd.f32 0.0, %v1024
        %v1026 = vpop.f32.mrb[0].mxu0
        %1027 = vmatprep.mubr.f32.mxu0 0.0
        %1028 = vmatmul.mubr.f32.gmra.mrb[0].mxu0 %v786
        %v1029 = vpop.f32.mrb[0].mxu0
        %v1030 = vadd.f32 0.0, %v1029
        %v1031 = vpop.f32.mrb[0].mxu0
        %1032 = vmatprep.mubr.f32.mxu0 0.0
        %1033 = vmatmul.mubr.f32.gmra.mrb[0].mxu0 %v787
        %v1034 = vpop.f32.mrb[0].mxu0
        %v1035 = vadd.f32 0.0, %v1034
        %v1036 = vpop.f32.mrb[0].mxu0
        %1037 = vmatprep.mubr.f32.mxu0 0.0
        %1038 = vmatmul.mubr.f32.gmra.mrb[0].mxu0 %v788
        %v1039 = vpop.f32.mrb[0].mxu0
        %v1040 = vadd.f32 0.0, %v1039
        %v1041 = vpop.f32.mrb[0].mxu0
        %1042 = vmatprep.mubr.f32.mxu0 0.0
        %1043 = vmatmul.mubr.f32.gmra.mrb[0].mxu0 %v789
        %v1044 = vpop.f32.mrb[0].mxu0
        %v1045 = vadd.f32 0.0, %v1044
        %v1046 = vpop.f32.mrb[0].mxu0
        %1047 = vmatprep.mubr.f32.mxu0 0.0
        %1048 = vmatmul.mubr.f32.gmra.mrb[0].mxu0 %v790
        %v1049 = vpop.f32.mrb[0].mxu0
        %v1050 = vadd.f32 0.0, %v1049
        %v1051 = vpop.f32.mrb[0].mxu0
        %1052 = vmatprep.mubr.f32.mxu0 0.0
        %1053 = vmatmul.mubr.f32.gmra.mrb[0].mxu0 %v791
        %v1054 = vpop.f32.mrb[0].mxu0
        %v1055 = vadd.f32 0.0, %v1054
        %v1056 = vpop.f32.mrb[0].mxu0
        %1057 = vmatprep.mubr.f32.mxu0 0.0
        %1058 = vmatmul.mubr.f32.gmra.mrb[0].mxu0 %v792
        %v1059 = vpop.f32.mrb[0].mxu0
        %v1060 = vadd.f32 0.0, %v1059
        %v1061 = vpop.f32.mrb[0].mxu0
        %1062 = vmatprep.mubr.f32.mxu0 0.0
        %1063 = vmatmul.mubr.f32.gmra.mrb[0].mxu0 %v793
        %v1064 = vpop.f32.mrb[0].mxu0
        %v1065 = vadd.f32 0.0, %v1064
        %v1066 = vpop.f32.mrb[0].mxu0
        %1067 = vdwg.mxu0
        %v1068 = vadd.f32 %v794, %v910
        %v1069 = vadd.f32 %v795, %v915
        %v1070 = vadd.f32 %v796, %v920
        %v1071 = vadd.f32 %v797, %v925
        %v1072 = vadd.f32 %v798, %v930
        %v1073 = vadd.f32 %v799, %v935
        %v1074 = vadd.f32 %v800, %v940
        %v1075 = vadd.f32 %v801, %v945
        %v1076 = vadd.f32 %v802, %v950
        %v1077 = vadd.f32 %v803, %v955
        %v1078 = vadd.f32 %v804, %v960
        %v1079 = vadd.f32 %v805, %v965
        %v1080 = vadd.f32 %v806, %v970
        %v1081 = vadd.f32 %v807, %v975
        %v1082 = vadd.f32 %v808, %v980
        %v1083 = vadd.f32 %v809, %v985
        %v1084 = vadd.f32 %v810, %v990
        %v1085 = vadd.f32 %v811, %v995
        %v1086 = vadd.f32 %v812, %v1000
        %v1087 = vadd.f32 %v813, %v1005
        %v1088 = vadd.f32 %v814, %v1010
        %v1089 = vadd.f32 %v815, %v1015
        %v1090 = vadd.f32 %v816, %v1020
        %v1091 = vadd.f32 %v817, %v1025
        %v1092 = vadd.f32 %v818, %v1030
        %v1093 = vadd.f32 %v819, %v1035
        %v1094 = vadd.f32 %v820, %v1040
        %v1095 = vadd.f32 %v821, %v1045
        %v1096 = vadd.f32 %v822, %v1050
        %v1097 = vadd.f32 %v823, %v1055
        %v1098 = vadd.f32 %v824, %v1060
        %v1099 = vadd.f32 %v825, %v1065
        %1100 = vst [vmem:[#allocation3] sm:$0xff] %v1068
        %1101 = vst [vmem:[#allocation3 + $0x8] sm:$0xff] %v1069
        %1102 = vst [vmem:[#allocation3 + $0x10] sm:$0xff] %v1070
        %1103 = vst [vmem:[#allocation3 + $0x18] sm:$0xff] %v1071
        %1104 = vst [vmem:[#allocation3 + $0x20] sm:$0xff] %v1072
        %1105 = vst [vmem:[#allocation3 + $0x28] sm:$0xff] %v1073
        %1106 = vst [vmem:[#allocation3 + $0x30] sm:$0xff] %v1074
        %1107 = vst [vmem:[#allocation3 + $0x38] sm:$0xff] %v1075
        %1108 = vst [vmem:[#allocation3 + $0x40] sm:$0xff] %v1076
        %1109 = vst [vmem:[#allocation3 + $0x48] sm:$0xff] %v1077
        %1110 = vst [vmem:[#allocation3 + $0x50] sm:$0xff] %v1078
        %1111 = vst [vmem:[#allocation3 + $0x58] sm:$0xff] %v1079
        %1112 = vst [vmem:[#allocation3 + $0x60] sm:$0xff] %v1080
        %1113 = vst [vmem:[#allocation3 + $0x68] sm:$0xff] %v1081
        %1114 = vst [vmem:[#allocation3 + $0x70] sm:$0xff] %v1082
        %1115 = vst [vmem:[#allocation3 + $0x78] sm:$0xff] %v1083
        %1116 = vst [vmem:[#allocation3 + $0x80] sm:$0xff] %v1084
        %1117 = vst [vmem:[#allocation3 + $0x88] sm:$0xff] %v1085
        %1118 = vst [vmem:[#allocation3 + $0x90] sm:$0xff] %v1086
        %1119 = vst [vmem:[#allocation3 + $0x98] sm:$0xff] %v1087
        %1120 = vst [vmem:[#allocation3 + $0xa0] sm:$0xff] %v1088
        %1121 = vst [vmem:[#allocation3 + $0xa8] sm:$0xff] %v1089
        %1122 = vst [vmem:[#allocation3 + $0xb0] sm:$0xff] %v1090
        %1123 = vst [vmem:[#allocation3 + $0xb8] sm:$0xff] %v1091
        %1124 = vst [vmem:[#allocation3 + $0xc0] sm:$0xff] %v1092
        %1125 = vst [vmem:[#allocation3 + $0xc8] sm:$0xff] %v1093
        %1126 = vst [vmem:[#allocation3 + $0xd0] sm:$0xff] %v1094
        %1127 = vst [vmem:[#allocation3 + $0xd8] sm:$0xff] %v1095
        %1128 = vst [vmem:[#allocation3 + $0xe0] sm:$0xff] %v1096
        %1129 = vst [vmem:[#allocation3 + $0xe8] sm:$0xff] %v1097
        %1130 = vst [vmem:[#allocation3 + $0xf0] sm:$0xff] %v1098
        %1131 = vst [vmem:[#allocation3 + $0xf8] sm:$0xff] %v1099
        %v1132 = vld [vmem:[#allocation2 + $0x2] sm:$0xff]
        %v1133 = vld [vmem:[#allocation2 + $0xa] sm:$0xff]
        %v1134 = vld [vmem:[#allocation2 + $0x1a] sm:$0xff]
        %v1135 = vld [vmem:[#allocation2 + $0x22] sm:$0xff]
        %v1136 = vld [vmem:[#allocation2 + $0x32] sm:$0xff]
        %v1137 = vld [vmem:[#allocation2 + $0x3a] sm:$0xff]
        %v1138 = vld [vmem:[#allocation2 + $0x4a] sm:$0xff]
        %v1139 = vld [vmem:[#allocation2 + $0x52] sm:$0xff]
        %v1140 = vld [vmem:[#allocation2 + $0x62] sm:$0xff]
        %v1141 = vld [vmem:[#allocation2 + $0x6a] sm:$0xff]
        %v1142 = vld [vmem:[#allocation2 + $0x7a] sm:$0xff]
        %v1143 = vld [vmem:[#allocation2 + $0x82] sm:$0xff]
        %v1144 = vld [vmem:[#allocation2 + $0x92] sm:$0xff]
        %v1145 = vld [vmem:[#allocation2 + $0x9a] sm:$0xff]
        %v1146 = vld [vmem:[#allocation2 + $0xaa] sm:$0xff]
        %v1147 = vld [vmem:[#allocation2 + $0xb2] sm:$0xff]
        %v1148 = vld [vmem:[#allocation2 + $0xc2] sm:$0xff]
        %v1149 = vld [vmem:[#allocation2 + $0xca] sm:$0xff]
        %v1150 = vld [vmem:[#allocation2 + $0xda] sm:$0xff]
        %v1151 = vld [vmem:[#allocation2 + $0xe2] sm:$0xff]
        %v1152 = vld [vmem:[#allocation2 + $0xf2] sm:$0xff]
        %v1153 = vld [vmem:[#allocation2 + $0xfa] sm:$0xff]
        %v1154 = vld [vmem:[#allocation2 + $0x10a] sm:$0xff]
        %v1155 = vld [vmem:[#allocation2 + $0x112] sm:$0xff]
        %v1156 = vld [vmem:[#allocation2 + $0x122] sm:$0xff]
        %v1157 = vld [vmem:[#allocation2 + $0x12a] sm:$0xff]
        %v1158 = vld [vmem:[#allocation2 + $0x13a] sm:$0xff]
        %v1159 = vld [vmem:[#allocation2 + $0x142] sm:$0xff]
        %v1160 = vld [vmem:[#allocation2 + $0x152] sm:$0xff]
        %v1161 = vld [vmem:[#allocation2 + $0x15a] sm:$0xff]
        %v1162 = vld [vmem:[#allocation2 + $0x16a] sm:$0xff]
        %v1163 = vld [vmem:[#allocation2 + $0x172] sm:$0xff]
        %v1164 = vld [vmem:[#allocation3] sm:$0xff]
        %v1165 = vld [vmem:[#allocation3 + $0x8] sm:$0xff]
        %v1166 = vld [vmem:[#allocation3 + $0x10] sm:$0xff]
        %v1167 = vld [vmem:[#allocation3 + $0x18] sm:$0xff]
        %v1168 = vld [vmem:[#allocation3 + $0x20] sm:$0xff]
        %v1169 = vld [vmem:[#allocation3 + $0x28] sm:$0xff]
        %v1170 = vld [vmem:[#allocation3 + $0x30] sm:$0xff]
        %v1171 = vld [vmem:[#allocation3 + $0x38] sm:$0xff]
        %v1172 = vld [vmem:[#allocation3 + $0x40] sm:$0xff]
        %v1173 = vld [vmem:[#allocation3 + $0x48] sm:$0xff]
        %v1174 = vld [vmem:[#allocation3 + $0x50] sm:$0xff]
        %v1175 = vld [vmem:[#allocation3 + $0x58] sm:$0xff]
        %v1176 = vld [vmem:[#allocation3 + $0x60] sm:$0xff]
        %v1177 = vld [vmem:[#allocation3 + $0x68] sm:$0xff]
        %v1178 = vld [vmem:[#allocation3 + $0x70] sm:$0xff]
        %v1179 = vld [vmem:[#allocation3 + $0x78] sm:$0xff]
        %v1180 = vld [vmem:[#allocation3 + $0x80] sm:$0xff]
        %v1181 = vld [vmem:[#allocation3 + $0x88] sm:$0xff]
        %v1182 = vld [vmem:[#allocation3 + $0x90] sm:$0xff]
        %v1183 = vld [vmem:[#allocation3 + $0x98] sm:$0xff]
        %v1184 = vld [vmem:[#allocation3 + $0xa0] sm:$0xff]
        %v1185 = vld [vmem:[#allocation3 + $0xa8] sm:$0xff]
        %v1186 = vld [vmem:[#allocation3 + $0xb0] sm:$0xff]
        %v1187 = vld [vmem:[#allocation3 + $0xb8] sm:$0xff]
        %v1188 = vld [vmem:[#allocation3 + $0xc0] sm:$0xff]
        %v1189 = vld [vmem:[#allocation3 + $0xc8] sm:$0xff]
        %v1190 = vld [vmem:[#allocation3 + $0xd0] sm:$0xff]
        %v1191 = vld [vmem:[#allocation3 + $0xd8] sm:$0xff]
        %v1192 = vld [vmem:[#allocation3 + $0xe0] sm:$0xff]
        %v1193 = vld [vmem:[#allocation3 + $0xe8] sm:$0xff]
        %v1194 = vld [vmem:[#allocation3 + $0xf0] sm:$0xff]
        %v1195 = vld [vmem:[#allocation3 + $0xf8] sm:$0xff]
        %s1196 = scalar_lea.vmem [#allocation7], 256
        %v1197 = vld [vmem:[%s1196] sm:$0xff]
        %v1198 = vld [vmem:[%s1196 + $0x8] sm:$0xff]
        %v1199 = vld [vmem:[%s1196 + $0x10] sm:$0xff]
        %v1200 = vld [vmem:[%s1196 + $0x18] sm:$0xff]
        %v1201 = vld [vmem:[%s1196 + $0x20] sm:$0xff]
        %v1202 = vld [vmem:[%s1196 + $0x28] sm:$0xff]
        %v1203 = vld [vmem:[%s1196 + $0x30] sm:$0xff]
        %v1204 = vld [vmem:[%s1196 + $0x38] sm:$0xff]
        %v1205 = vld [vmem:[%s1196 + $0x40] sm:$0xff]
        %v1206 = vld [vmem:[%s1196 + $0x48] sm:$0xff]
        %v1207 = vld [vmem:[%s1196 + $0x50] sm:$0xff]
        %v1208 = vld [vmem:[%s1196 + $0x58] sm:$0xff]
        %v1209 = vld [vmem:[%s1196 + $0x60] sm:$0xff]
        %v1210 = vld [vmem:[%s1196 + $0x68] sm:$0xff]
        %v1211 = vld [vmem:[%s1196 + $0x70] sm:$0xff]
        %v1212 = vld [vmem:[%s1196 + $0x78] sm:$0xff]
        %1213 = vmatprep.subr.mxu0 0.0
        %1214 = vmatpush1.msra.mxu0 %v1197
        %1215 = vmatprep.subr.mxu0 0.0
        %1216 = vmatpush1.msra.mxu0 %v1198
        %1217 = vmatprep.subr.mxu0 0.0
        %1218 = vmatpush1.msra.mxu0 %v1199
        %1219 = vmatprep.subr.mxu0 0.0
        %1220 = vmatpush1.msra.mxu0 %v1200
        %1221 = vmatprep.subr.mxu0 0.0
        %1222 = vmatpush1.msra.mxu0 %v1201
        %1223 = vmatprep.subr.mxu0 0.0
        %1224 = vmatpush1.msra.mxu0 %v1202
        %1225 = vmatprep.subr.mxu0 0.0
        %1226 = vmatpush1.msra.mxu0 %v1203
        %1227 = vmatprep.subr.mxu0 0.0
        %1228 = vmatpush1.msra.mxu0 %v1204
        %1229 = vmatprep.subr.mxu0 0.0
        %1230 = vmatpush1.msra.mxu0 %v1205
        %1231 = vmatprep.subr.mxu0 0.0
        %1232 = vmatpush1.msra.mxu0 %v1206
        %1233 = vmatprep.subr.mxu0 0.0
        %1234 = vmatpush1.msra.mxu0 %v1207
        %1235 = vmatprep.subr.mxu0 0.0
        %1236 = vmatpush1.msra.mxu0 %v1208
        %1237 = vmatprep.subr.mxu0 0.0
        %1238 = vmatpush1.msra.mxu0 %v1209
        %1239 = vmatprep.subr.mxu0 0.0
        %1240 = vmatpush1.msra.mxu0 %v1210
        %1241 = vmatprep.subr.mxu0 0.0
        %1242 = vmatpush1.msra.mxu0 %v1211
        %1243 = vmatprep.subr.mxu0 0.0
        %1244 = vmatpush1.msra.mxu0 %v1212
        %1245 = vmatprep.subr.mxu0 0.0
        %1246 = vmatpush1.msra.mxu0 0.0
        %1247 = vmatprep.subr.mxu0 0.0
        %1248 = vmatpush1.msra.mxu0 0.0
        %1249 = vmatprep.subr.mxu0 0.0
        %1250 = vmatpush1.msra.mxu0 0.0
        %1251 = vmatprep.subr.mxu0 0.0
        %1252 = vmatpush1.msra.mxu0 0.0
        %1253 = vmatprep.subr.mxu0 0.0
        %1254 = vmatpush1.msra.mxu0 0.0
        %1255 = vmatprep.subr.mxu0 0.0
        %1256 = vmatpush1.msra.mxu0 0.0
        %1257 = vmatprep.subr.mxu0 0.0
        %1258 = vmatpush1.msra.mxu0 0.0
        %1259 = vmatprep.subr.mxu0 0.0
        %1260 = vmatpush1.msra.mxu0 0.0
        %1261 = vmatprep.subr.mxu0 0.0
        %1262 = vmatpush1.msra.mxu0 0.0
        %1263 = vmatprep.subr.mxu0 0.0
        %1264 = vmatpush1.msra.mxu0 0.0
        %1265 = vmatprep.subr.mxu0 0.0
        %1266 = vmatpush1.msra.mxu0 0.0
        %1267 = vmatprep.subr.mxu0 0.0
        %1268 = vmatpush1.msra.mxu0 0.0
        %1269 = vmatprep.subr.mxu0 0.0
        %1270 = vmatpush1.msra.mxu0 0.0
        %1271 = vmatprep.subr.mxu0 0.0
        %1272 = vmatpush1.msra.mxu0 0.0
        %1273 = vmatprep.subr.mxu0 0.0
        %1274 = vmatpush1.msra.mxu0 0.0
        %1275 = vmatprep.subr.mxu0 0.0
        %1276 = vmatpush1.msra.mxu0 0.0
        %1277 = vmatprep.mubr.f32.mxu0 0.0
        %1278 = vmatmul.mubr.f32.gmra.mrb[0].mxu0 %v1132
        %v1279 = vpop.f32.mrb[0].mxu0
        %v1280 = vadd.f32 0.0, %v1279
        %v1281 = vpop.f32.mrb[0].mxu0
        %1282 = vmatprep.mubr.f32.mxu0 0.0
        %1283 = vmatmul.mubr.f32.gmra.mrb[0].mxu0 %v1133
        %v1284 = vpop.f32.mrb[0].mxu0
        %v1285 = vadd.f32 0.0, %v1284
        %v1286 = vpop.f32.mrb[0].mxu0
        %1287 = vmatprep.mubr.f32.mxu0 0.0
        %1288 = vmatmul.mubr.f32.gmra.mrb[0].mxu0 %v1134
        %v1289 = vpop.f32.mrb[0].mxu0
        %v1290 = vadd.f32 0.0, %v1289
        %v1291 = vpop.f32.mrb[0].mxu0
        %1292 = vmatprep.mubr.f32.mxu0 0.0
        %1293 = vmatmul.mubr.f32.gmra.mrb[0].mxu0 %v1135
        %v1294 = vpop.f32.mrb[0].mxu0
        %v1295 = vadd.f32 0.0, %v1294
        %v1296 = vpop.f32.mrb[0].mxu0
        %1297 = vmatprep.mubr.f32.mxu0 0.0
        %1298 = vmatmul.mubr.f32.gmra.mrb[0].mxu0 %v1136
        %v1299 = vpop.f32.mrb[0].mxu0
        %v1300 = vadd.f32 0.0, %v1299
        %v1301 = vpop.f32.mrb[0].mxu0
        %1302 = vmatprep.mubr.f32.mxu0 0.0
        %1303 = vmatmul.mubr.f32.gmra.mrb[0].mxu0 %v1137
        %v1304 = vpop.f32.mrb[0].mxu0
        %v1305 = vadd.f32 0.0, %v1304
        %v1306 = vpop.f32.mrb[0].mxu0
        %1307 = vmatprep.mubr.f32.mxu0 0.0
        %1308 = vmatmul.mubr.f32.gmra.mrb[0].mxu0 %v1138
        %v1309 = vpop.f32.mrb[0].mxu0
        %v1310 = vadd.f32 0.0, %v1309
        %v1311 = vpop.f32.mrb[0].mxu0
        %1312 = vmatprep.mubr.f32.mxu0 0.0
        %1313 = vmatmul.mubr.f32.gmra.mrb[0].mxu0 %v1139
        %v1314 = vpop.f32.mrb[0].mxu0
        %v1315 = vadd.f32 0.0, %v1314
        %v1316 = vpop.f32.mrb[0].mxu0
        %1317 = vmatprep.mubr.f32.mxu0 0.0
        %1318 = vmatmul.mubr.f32.gmra.mrb[0].mxu0 %v1140
        %v1319 = vpop.f32.mrb[0].mxu0
        %v1320 = vadd.f32 0.0, %v1319
        %v1321 = vpop.f32.mrb[0].mxu0
        %1322 = vmatprep.mubr.f32.mxu0 0.0
        %1323 = vmatmul.mubr.f32.gmra.mrb[0].mxu0 %v1141
        %v1324 = vpop.f32.mrb[0].mxu0
        %v1325 = vadd.f32 0.0, %v1324
        %v1326 = vpop.f32.mrb[0].mxu0
        %1327 = vmatprep.mubr.f32.mxu0 0.0
        %1328 = vmatmul.mubr.f32.gmra.mrb[0].mxu0 %v1142
        %v1329 = vpop.f32.mrb[0].mxu0
        %v1330 = vadd.f32 0.0, %v1329
        %v1331 = vpop.f32.mrb[0].mxu0
        %1332 = vmatprep.mubr.f32.mxu0 0.0
        %1333 = vmatmul.mubr.f32.gmra.mrb[0].mxu0 %v1143
        %v1334 = vpop.f32.mrb[0].mxu0
        %v1335 = vadd.f32 0.0, %v1334
        %v1336 = vpop.f32.mrb[0].mxu0
        %1337 = vmatprep.mubr.f32.mxu0 0.0
        %1338 = vmatmul.mubr.f32.gmra.mrb[0].mxu0 %v1144
        %v1339 = vpop.f32.mrb[0].mxu0
        %v1340 = vadd.f32 0.0, %v1339
        %v1341 = vpop.f32.mrb[0].mxu0
        %1342 = vmatprep.mubr.f32.mxu0 0.0
        %1343 = vmatmul.mubr.f32.gmra.mrb[0].mxu0 %v1145
        %v1344 = vpop.f32.mrb[0].mxu0
        %v1345 = vadd.f32 0.0, %v1344
        %v1346 = vpop.f32.mrb[0].mxu0
        %1347 = vmatprep.mubr.f32.mxu0 0.0
        %1348 = vmatmul.mubr.f32.gmra.mrb[0].mxu0 %v1146
        %v1349 = vpop.f32.mrb[0].mxu0
        %v1350 = vadd.f32 0.0, %v1349
        %v1351 = vpop.f32.mrb[0].mxu0
        %1352 = vmatprep.mubr.f32.mxu0 0.0
        %1353 = vmatmul.mubr.f32.gmra.mrb[0].mxu0 %v1147
        %v1354 = vpop.f32.mrb[0].mxu0
        %v1355 = vadd.f32 0.0, %v1354
        %v1356 = vpop.f32.mrb[0].mxu0
        %1357 = vmatprep.mubr.f32.mxu0 0.0
        %1358 = vmatmul.mubr.f32.gmra.mrb[0].mxu0 %v1148
        %v1359 = vpop.f32.mrb[0].mxu0
        %v1360 = vadd.f32 0.0, %v1359
        %v1361 = vpop.f32.mrb[0].mxu0
        %1362 = vmatprep.mubr.f32.mxu0 0.0
        %1363 = vmatmul.mubr.f32.gmra.mrb[0].mxu0 %v1149
        %v1364 = vpop.f32.mrb[0].mxu0
        %v1365 = vadd.f32 0.0, %v1364
        %v1366 = vpop.f32.mrb[0].mxu0
        %1367 = vmatprep.mubr.f32.mxu0 0.0
        %1368 = vmatmul.mubr.f32.gmra.mrb[0].mxu0 %v1150
        %v1369 = vpop.f32.mrb[0].mxu0
        %v1370 = vadd.f32 0.0, %v1369
        %v1371 = vpop.f32.mrb[0].mxu0
        %1372 = vmatprep.mubr.f32.mxu0 0.0
        %1373 = vmatmul.mubr.f32.gmra.mrb[0].mxu0 %v1151
        %v1374 = vpop.f32.mrb[0].mxu0
        %v1375 = vadd.f32 0.0, %v1374
        %v1376 = vpop.f32.mrb[0].mxu0
        %1377 = vmatprep.mubr.f32.mxu0 0.0
        %1378 = vmatmul.mubr.f32.gmra.mrb[0].mxu0 %v1152
        %v1379 = vpop.f32.mrb[0].mxu0
        %v1380 = vadd.f32 0.0, %v1379
        %v1381 = vpop.f32.mrb[0].mxu0
        %1382 = vmatprep.mubr.f32.mxu0 0.0
        %1383 = vmatmul.mubr.f32.gmra.mrb[0].mxu0 %v1153
        %v1384 = vpop.f32.mrb[0].mxu0
        %v1385 = vadd.f32 0.0, %v1384
        %v1386 = vpop.f32.mrb[0].mxu0
        %1387 = vmatprep.mubr.f32.mxu0 0.0
        %1388 = vmatmul.mubr.f32.gmra.mrb[0].mxu0 %v1154
        %v1389 = vpop.f32.mrb[0].mxu0
        %v1390 = vadd.f32 0.0, %v1389
        %v1391 = vpop.f32.mrb[0].mxu0
        %1392 = vmatprep.mubr.f32.mxu0 0.0
        %1393 = vmatmul.mubr.f32.gmra.mrb[0].mxu0 %v1155
        %v1394 = vpop.f32.mrb[0].mxu0
        %v1395 = vadd.f32 0.0, %v1394
        %v1396 = vpop.f32.mrb[0].mxu0
        %1397 = vmatprep.mubr.f32.mxu0 0.0
        %1398 = vmatmul.mubr.f32.gmra.mrb[0].mxu0 %v1156
        %v1399 = vpop.f32.mrb[0].mxu0
        %v1400 = vadd.f32 0.0, %v1399
        %v1401 = vpop.f32.mrb[0].mxu0
        %1402 = vmatprep.mubr.f32.mxu0 0.0
        %1403 = vmatmul.mubr.f32.gmra.mrb[0].mxu0 %v1157
        %v1404 = vpop.f32.mrb[0].mxu0
        %v1405 = vadd.f32 0.0, %v1404
        %v1406 = vpop.f32.mrb[0].mxu0
        %1407 = vmatprep.mubr.f32.mxu0 0.0
        %1408 = vmatmul.mubr.f32.gmra.mrb[0].mxu0 %v1158
        %v1409 = vpop.f32.mrb[0].mxu0
        %v1410 = vadd.f32 0.0, %v1409
        %v1411 = vpop.f32.mrb[0].mxu0
        %1412 = vmatprep.mubr.f32.mxu0 0.0
        %1413 = vmatmul.mubr.f32.gmra.mrb[0].mxu0 %v1159
        %v1414 = vpop.f32.mrb[0].mxu0
        %v1415 = vadd.f32 0.0, %v1414
        %v1416 = vpop.f32.mrb[0].mxu0
        %1417 = vmatprep.mubr.f32.mxu0 0.0
        %1418 = vmatmul.mubr.f32.gmra.mrb[0].mxu0 %v1160
        %v1419 = vpop.f32.mrb[0].mxu0
        %v1420 = vadd.f32 0.0, %v1419
        %v1421 = vpop.f32.mrb[0].mxu0
        %1422 = vmatprep.mubr.f32.mxu0 0.0
        %1423 = vmatmul.mubr.f32.gmra.mrb[0].mxu0 %v1161
        %v1424 = vpop.f32.mrb[0].mxu0
        %v1425 = vadd.f32 0.0, %v1424
        %v1426 = vpop.f32.mrb[0].mxu0
        %1427 = vmatprep.mubr.f32.mxu0 0.0
        %1428 = vmatmul.mubr.f32.gmra.mrb[0].mxu0 %v1162
        %v1429 = vpop.f32.mrb[0].mxu0
        %v1430 = vadd.f32 0.0, %v1429
        %v1431 = vpop.f32.mrb[0].mxu0
        %1432 = vmatprep.mubr.f32.mxu0 0.0
        %1433 = vmatmul.mubr.f32.gmra.mrb[0].mxu0 %v1163
        %v1434 = vpop.f32.mrb[0].mxu0
        %v1435 = vadd.f32 0.0, %v1434
        %v1436 = vpop.f32.mrb[0].mxu0
        %1437 = vdwg.mxu0
        %v1438 = vadd.f32 %v1164, %v1280
        %v1439 = vadd.f32 %v1165, %v1285
        %v1440 = vadd.f32 %v1166, %v1290
        %v1441 = vadd.f32 %v1167, %v1295
        %v1442 = vadd.f32 %v1168, %v1300
        %v1443 = vadd.f32 %v1169, %v1305
        %v1444 = vadd.f32 %v1170, %v1310
        %v1445 = vadd.f32 %v1171, %v1315
        %v1446 = vadd.f32 %v1172, %v1320
        %v1447 = vadd.f32 %v1173, %v1325
        %v1448 = vadd.f32 %v1174, %v1330
        %v1449 = vadd.f32 %v1175, %v1335
        %v1450 = vadd.f32 %v1176, %v1340
        %v1451 = vadd.f32 %v1177, %v1345
        %v1452 = vadd.f32 %v1178, %v1350
        %v1453 = vadd.f32 %v1179, %v1355
        %v1454 = vadd.f32 %v1180, %v1360
        %v1455 = vadd.f32 %v1181, %v1365
        %v1456 = vadd.f32 %v1182, %v1370
        %v1457 = vadd.f32 %v1183, %v1375
        %v1458 = vadd.f32 %v1184, %v1380
        %v1459 = vadd.f32 %v1185, %v1385
        %v1460 = vadd.f32 %v1186, %v1390
        %v1461 = vadd.f32 %v1187, %v1395
        %v1462 = vadd.f32 %v1188, %v1400
        %v1463 = vadd.f32 %v1189, %v1405
        %v1464 = vadd.f32 %v1190, %v1410
        %v1465 = vadd.f32 %v1191, %v1415
        %v1466 = vadd.f32 %v1192, %v1420
        %v1467 = vadd.f32 %v1193, %v1425
        %v1468 = vadd.f32 %v1194, %v1430
        %v1469 = vadd.f32 %v1195, %v1435
        %1470 = vst [vmem:[#allocation3] sm:$0xff] %v1438
        %1471 = vst [vmem:[#allocation3 + $0x8] sm:$0xff] %v1439
        %1472 = vst [vmem:[#allocation3 + $0x10] sm:$0xff] %v1440
        %1473 = vst [vmem:[#allocation3 + $0x18] sm:$0xff] %v1441
        %1474 = vst [vmem:[#allocation3 + $0x20] sm:$0xff] %v1442
        %1475 = vst [vmem:[#allocation3 + $0x28] sm:$0xff] %v1443
        %1476 = vst [vmem:[#allocation3 + $0x30] sm:$0xff] %v1444
        %1477 = vst [vmem:[#allocation3 + $0x38] sm:$0xff] %v1445
        %1478 = vst [vmem:[#allocation3 + $0x40] sm:$0xff] %v1446
        %1479 = vst [vmem:[#allocation3 + $0x48] sm:$0xff] %v1447
        %1480 = vst [vmem:[#allocation3 + $0x50] sm:$0xff] %v1448
        %1481 = vst [vmem:[#allocation3 + $0x58] sm:$0xff] %v1449
        %1482 = vst [vmem:[#allocation3 + $0x60] sm:$0xff] %v1450
        %1483 = vst [vmem:[#allocation3 + $0x68] sm:$0xff] %v1451
        %1484 = vst [vmem:[#allocation3 + $0x70] sm:$0xff] %v1452
        %1485 = vst [vmem:[#allocation3 + $0x78] sm:$0xff] %v1453
        %1486 = vst [vmem:[#allocation3 + $0x80] sm:$0xff] %v1454
        %1487 = vst [vmem:[#allocation3 + $0x88] sm:$0xff] %v1455
        %1488 = vst [vmem:[#allocation3 + $0x90] sm:$0xff] %v1456
        %1489 = vst [vmem:[#allocation3 + $0x98] sm:$0xff] %v1457
        %1490 = vst [vmem:[#allocation3 + $0xa0] sm:$0xff] %v1458
        %1491 = vst [vmem:[#allocation3 + $0xa8] sm:$0xff] %v1459
        %1492 = vst [vmem:[#allocation3 + $0xb0] sm:$0xff] %v1460
        %1493 = vst [vmem:[#allocation3 + $0xb8] sm:$0xff] %v1461
        %1494 = vst [vmem:[#allocation3 + $0xc0] sm:$0xff] %v1462
        %1495 = vst [vmem:[#allocation3 + $0xc8] sm:$0xff] %v1463
        %1496 = vst [vmem:[#allocation3 + $0xd0] sm:$0xff] %v1464
        %1497 = vst [vmem:[#allocation3 + $0xd8] sm:$0xff] %v1465
        %1498 = vst [vmem:[#allocation3 + $0xe0] sm:$0xff] %v1466
        %1499 = vst [vmem:[#allocation3 + $0xe8] sm:$0xff] %v1467
        %1500 = vst [vmem:[#allocation3 + $0xf0] sm:$0xff] %v1468
        %1501 = vst [vmem:[#allocation3 + $0xf8] sm:$0xff] %v1469
        %v1502 = vld [vmem:[%s328] sm:$0xff]
        %v1503 = vld [vmem:[%s328 + $0x8] sm:$0xff]
        %v1504 = vld [vmem:[%s328 + $0x18] sm:$0xff]
        %v1505 = vld [vmem:[%s328 + $0x20] sm:$0xff]
        %v1506 = vld [vmem:[%s328 + $0x30] sm:$0xff]
        %v1507 = vld [vmem:[%s328 + $0x38] sm:$0xff]
        %v1508 = vld [vmem:[%s328 + $0x48] sm:$0xff]
        %v1509 = vld [vmem:[%s328 + $0x50] sm:$0xff]
        %v1510 = vld [vmem:[%s328 + $0x60] sm:$0xff]
        %v1511 = vld [vmem:[%s328 + $0x68] sm:$0xff]
        %v1512 = vld [vmem:[%s328 + $0x78] sm:$0xff]
        %v1513 = vld [vmem:[%s328 + $0x80] sm:$0xff]
        %v1514 = vld [vmem:[%s328 + $0x90] sm:$0xff]
        %v1515 = vld [vmem:[%s328 + $0x98] sm:$0xff]
        %v1516 = vld [vmem:[%s328 + $0xa8] sm:$0xff]
        %v1517 = vld [vmem:[%s328 + $0xb0] sm:$0xff]
        %v1518 = vld [vmem:[%s328 + $0xc0] sm:$0xff]
        %v1519 = vld [vmem:[%s328 + $0xc8] sm:$0xff]
        %v1520 = vld [vmem:[%s328 + $0xd8] sm:$0xff]
        %v1521 = vld [vmem:[%s328 + $0xe0] sm:$0xff]
        %v1522 = vld [vmem:[%s328 + $0xf0] sm:$0xff]
        %v1523 = vld [vmem:[%s328 + $0xf8] sm:$0xff]
        %v1524 = vld [vmem:[%s328 + $0x108] sm:$0xff]
        %v1525 = vld [vmem:[%s328 + $0x110] sm:$0xff]
        %v1526 = vld [vmem:[%s328 + $0x120] sm:$0xff]
        %v1527 = vld [vmem:[%s328 + $0x128] sm:$0xff]
        %v1528 = vld [vmem:[%s328 + $0x138] sm:$0xff]
        %v1529 = vld [vmem:[%s328 + $0x140] sm:$0xff]
        %v1530 = vld [vmem:[%s328 + $0x150] sm:$0xff]
        %v1531 = vld [vmem:[%s328 + $0x158] sm:$0xff]
        %v1532 = vld [vmem:[%s328 + $0x168] sm:$0xff]
        %v1533 = vld [vmem:[%s328 + $0x170] sm:$0xff]
        %v1534 = vld [vmem:[#allocation3] sm:$0xff]
        %v1535 = vld [vmem:[#allocation3 + $0x8] sm:$0xff]
        %v1536 = vld [vmem:[#allocation3 + $0x10] sm:$0xff]
        %v1537 = vld [vmem:[#allocation3 + $0x18] sm:$0xff]
        %v1538 = vld [vmem:[#allocation3 + $0x20] sm:$0xff]
        %v1539 = vld [vmem:[#allocation3 + $0x28] sm:$0xff]
        %v1540 = vld [vmem:[#allocation3 + $0x30] sm:$0xff]
        %v1541 = vld [vmem:[#allocation3 + $0x38] sm:$0xff]
        %v1542 = vld [vmem:[#allocation3 + $0x40] sm:$0xff]
        %v1543 = vld [vmem:[#allocation3 + $0x48] sm:$0xff]
        %v1544 = vld [vmem:[#allocation3 + $0x50] sm:$0xff]
        %v1545 = vld [vmem:[#allocation3 + $0x58] sm:$0xff]
        %v1546 = vld [vmem:[#allocation3 + $0x60] sm:$0xff]
        %v1547 = vld [vmem:[#allocation3 + $0x68] sm:$0xff]
        %v1548 = vld [vmem:[#allocation3 + $0x70] sm:$0xff]
        %v1549 = vld [vmem:[#allocation3 + $0x78] sm:$0xff]
        %v1550 = vld [vmem:[#allocation3 + $0x80] sm:$0xff]
        %v1551 = vld [vmem:[#allocation3 + $0x88] sm:$0xff]
        %v1552 = vld [vmem:[#allocation3 + $0x90] sm:$0xff]
        %v1553 = vld [vmem:[#allocation3 + $0x98] sm:$0xff]
        %v1554 = vld [vmem:[#allocation3 + $0xa0] sm:$0xff]
        %v1555 = vld [vmem:[#allocation3 + $0xa8] sm:$0xff]
        %v1556 = vld [vmem:[#allocation3 + $0xb0] sm:$0xff]
        %v1557 = vld [vmem:[#allocation3 + $0xb8] sm:$0xff]
        %v1558 = vld [vmem:[#allocation3 + $0xc0] sm:$0xff]
        %v1559 = vld [vmem:[#allocation3 + $0xc8] sm:$0xff]
        %v1560 = vld [vmem:[#allocation3 + $0xd0] sm:$0xff]
        %v1561 = vld [vmem:[#allocation3 + $0xd8] sm:$0xff]
        %v1562 = vld [vmem:[#allocation3 + $0xe0] sm:$0xff]
        %v1563 = vld [vmem:[#allocation3 + $0xe8] sm:$0xff]
        %v1564 = vld [vmem:[#allocation3 + $0xf0] sm:$0xff]
        %v1565 = vld [vmem:[#allocation3 + $0xf8] sm:$0xff]
        %s1566 = scalar_lea.vmem [#allocation7], 384
        %v1567 = vld [vmem:[%s1566] sm:$0xff]
        %v1568 = vld [vmem:[%s1566 + $0x8] sm:$0xff]
        %v1569 = vld [vmem:[%s1566 + $0x10] sm:$0xff]
        %v1570 = vld [vmem:[%s1566 + $0x18] sm:$0xff]
        %v1571 = vld [vmem:[%s1566 + $0x20] sm:$0xff]
        %v1572 = vld [vmem:[%s1566 + $0x28] sm:$0xff]
        %v1573 = vld [vmem:[%s1566 + $0x30] sm:$0xff]
        %v1574 = vld [vmem:[%s1566 + $0x38] sm:$0xff]
        %v1575 = vld [vmem:[%s1566 + $0x40] sm:$0xff]
        %v1576 = vld [vmem:[%s1566 + $0x48] sm:$0xff]
        %v1577 = vld [vmem:[%s1566 + $0x50] sm:$0xff]
        %v1578 = vld [vmem:[%s1566 + $0x58] sm:$0xff]
        %v1579 = vld [vmem:[%s1566 + $0x60] sm:$0xff]
        %v1580 = vld [vmem:[%s1566 + $0x68] sm:$0xff]
        %v1581 = vld [vmem:[%s1566 + $0x70] sm:$0xff]
        %v1582 = vld [vmem:[%s1566 + $0x78] sm:$0xff]
        %1583 = vmatprep.subr.mxu0 0.0
        %1584 = vmatpush1.msra.mxu0 %v1567
        %1585 = vmatprep.subr.mxu0 0.0
        %1586 = vmatpush1.msra.mxu0 %v1568
        %1587 = vmatprep.subr.mxu0 0.0
        %1588 = vmatpush1.msra.mxu0 %v1569
        %1589 = vmatprep.subr.mxu0 0.0
        %1590 = vmatpush1.msra.mxu0 %v1570
        %1591 = vmatprep.subr.mxu0 0.0
        %1592 = vmatpush1.msra.mxu0 %v1571
        %1593 = vmatprep.subr.mxu0 0.0
        %1594 = vmatpush1.msra.mxu0 %v1572
        %1595 = vmatprep.subr.mxu0 0.0
        %1596 = vmatpush1.msra.mxu0 %v1573
        %1597 = vmatprep.subr.mxu0 0.0
        %1598 = vmatpush1.msra.mxu0 %v1574
        %1599 = vmatprep.subr.mxu0 0.0
        %1600 = vmatpush1.msra.mxu0 %v1575
        %1601 = vmatprep.subr.mxu0 0.0
        %1602 = vmatpush1.msra.mxu0 %v1576
        %1603 = vmatprep.subr.mxu0 0.0
        %1604 = vmatpush1.msra.mxu0 %v1577
        %1605 = vmatprep.subr.mxu0 0.0
        %1606 = vmatpush1.msra.mxu0 %v1578
        %1607 = vmatprep.subr.mxu0 0.0
        %1608 = vmatpush1.msra.mxu0 %v1579
        %1609 = vmatprep.subr.mxu0 0.0
        %1610 = vmatpush1.msra.mxu0 %v1580
        %1611 = vmatprep.subr.mxu0 0.0
        %1612 = vmatpush1.msra.mxu0 %v1581
        %1613 = vmatprep.subr.mxu0 0.0
        %1614 = vmatpush1.msra.mxu0 %v1582
        %1615 = vmatprep.subr.mxu0 0.0
        %1616 = vmatpush1.msra.mxu0 0.0
        %1617 = vmatprep.subr.mxu0 0.0
        %1618 = vmatpush1.msra.mxu0 0.0
        %1619 = vmatprep.subr.mxu0 0.0
        %1620 = vmatpush1.msra.mxu0 0.0
        %1621 = vmatprep.subr.mxu0 0.0
        %1622 = vmatpush1.msra.mxu0 0.0
        %1623 = vmatprep.subr.mxu0 0.0
        %1624 = vmatpush1.msra.mxu0 0.0
        %1625 = vmatprep.subr.mxu0 0.0
        %1626 = vmatpush1.msra.mxu0 0.0
        %1627 = vmatprep.subr.mxu0 0.0
        %1628 = vmatpush1.msra.mxu0 0.0
        %1629 = vmatprep.subr.mxu0 0.0
        %1630 = vmatpush1.msra.mxu0 0.0
        %1631 = vmatprep.subr.mxu0 0.0
        %1632 = vmatpush1.msra.mxu0 0.0
        %1633 = vmatprep.subr.mxu0 0.0
        %1634 = vmatpush1.msra.mxu0 0.0
        %1635 = vmatprep.subr.mxu0 0.0
        %1636 = vmatpush1.msra.mxu0 0.0
        %1637 = vmatprep.subr.mxu0 0.0
        %1638 = vmatpush1.msra.mxu0 0.0
        %1639 = vmatprep.subr.mxu0 0.0
        %1640 = vmatpush1.msra.mxu0 0.0
        %1641 = vmatprep.subr.mxu0 0.0
        %1642 = vmatpush1.msra.mxu0 0.0
        %1643 = vmatprep.subr.mxu0 0.0
        %1644 = vmatpush1.msra.mxu0 0.0
        %1645 = vmatprep.subr.mxu0 0.0
        %1646 = vmatpush1.msra.mxu0 0.0
        %1647 = vmatprep.mubr.f32.mxu0 0.0
        %1648 = vmatmul.mubr.f32.gmra.mrb[0].mxu0 %v1502
        %v1649 = vpop.f32.mrb[0].mxu0
        %v1650 = vadd.f32 0.0, %v1649
        %v1651 = vpop.f32.mrb[0].mxu0
        %1652 = vmatprep.mubr.f32.mxu0 0.0
        %1653 = vmatmul.mubr.f32.gmra.mrb[0].mxu0 %v1503
        %v1654 = vpop.f32.mrb[0].mxu0
        %v1655 = vadd.f32 0.0, %v1654
        %v1656 = vpop.f32.mrb[0].mxu0
        %1657 = vmatprep.mubr.f32.mxu0 0.0
        %1658 = vmatmul.mubr.f32.gmra.mrb[0].mxu0 %v1504
        %v1659 = vpop.f32.mrb[0].mxu0
        %v1660 = vadd.f32 0.0, %v1659
        %v1661 = vpop.f32.mrb[0].mxu0
        %1662 = vmatprep.mubr.f32.mxu0 0.0
        %1663 = vmatmul.mubr.f32.gmra.mrb[0].mxu0 %v1505
        %v1664 = vpop.f32.mrb[0].mxu0
        %v1665 = vadd.f32 0.0, %v1664
        %v1666 = vpop.f32.mrb[0].mxu0
        %1667 = vmatprep.mubr.f32.mxu0 0.0
        %1668 = vmatmul.mubr.f32.gmra.mrb[0].mxu0 %v1506
        %v1669 = vpop.f32.mrb[0].mxu0
        %v1670 = vadd.f32 0.0, %v1669
        %v1671 = vpop.f32.mrb[0].mxu0
        %1672 = vmatprep.mubr.f32.mxu0 0.0
        %1673 = vmatmul.mubr.f32.gmra.mrb[0].mxu0 %v1507
        %v1674 = vpop.f32.mrb[0].mxu0
        %v1675 = vadd.f32 0.0, %v1674
        %v1676 = vpop.f32.mrb[0].mxu0
        %1677 = vmatprep.mubr.f32.mxu0 0.0
        %1678 = vmatmul.mubr.f32.gmra.mrb[0].mxu0 %v1508
        %v1679 = vpop.f32.mrb[0].mxu0
        %v1680 = vadd.f32 0.0, %v1679
        %v1681 = vpop.f32.mrb[0].mxu0
        %1682 = vmatprep.mubr.f32.mxu0 0.0
        %1683 = vmatmul.mubr.f32.gmra.mrb[0].mxu0 %v1509
        %v1684 = vpop.f32.mrb[0].mxu0
        %v1685 = vadd.f32 0.0, %v1684
        %v1686 = vpop.f32.mrb[0].mxu0
        %1687 = vmatprep.mubr.f32.mxu0 0.0
        %1688 = vmatmul.mubr.f32.gmra.mrb[0].mxu0 %v1510
        %v1689 = vpop.f32.mrb[0].mxu0
        %v1690 = vadd.f32 0.0, %v1689
        %v1691 = vpop.f32.mrb[0].mxu0
        %1692 = vmatprep.mubr.f32.mxu0 0.0
        %1693 = vmatmul.mubr.f32.gmra.mrb[0].mxu0 %v1511
        %v1694 = vpop.f32.mrb[0].mxu0
        %v1695 = vadd.f32 0.0, %v1694
        %v1696 = vpop.f32.mrb[0].mxu0
        %1697 = vmatprep.mubr.f32.mxu0 0.0
        %1698 = vmatmul.mubr.f32.gmra.mrb[0].mxu0 %v1512
        %v1699 = vpop.f32.mrb[0].mxu0
        %v1700 = vadd.f32 0.0, %v1699
        %v1701 = vpop.f32.mrb[0].mxu0
        %1702 = vmatprep.mubr.f32.mxu0 0.0
        %1703 = vmatmul.mubr.f32.gmra.mrb[0].mxu0 %v1513
        %v1704 = vpop.f32.mrb[0].mxu0
        %v1705 = vadd.f32 0.0, %v1704
        %v1706 = vpop.f32.mrb[0].mxu0
        %1707 = vmatprep.mubr.f32.mxu0 0.0
        %1708 = vmatmul.mubr.f32.gmra.mrb[0].mxu0 %v1514
        %v1709 = vpop.f32.mrb[0].mxu0
        %v1710 = vadd.f32 0.0, %v1709
        %v1711 = vpop.f32.mrb[0].mxu0
        %1712 = vmatprep.mubr.f32.mxu0 0.0
        %1713 = vmatmul.mubr.f32.gmra.mrb[0].mxu0 %v1515
        %v1714 = vpop.f32.mrb[0].mxu0
        %v1715 = vadd.f32 0.0, %v1714
        %v1716 = vpop.f32.mrb[0].mxu0
        %1717 = vmatprep.mubr.f32.mxu0 0.0
        %1718 = vmatmul.mubr.f32.gmra.mrb[0].mxu0 %v1516
        %v1719 = vpop.f32.mrb[0].mxu0
        %v1720 = vadd.f32 0.0, %v1719
        %v1721 = vpop.f32.mrb[0].mxu0
        %1722 = vmatprep.mubr.f32.mxu0 0.0
        %1723 = vmatmul.mubr.f32.gmra.mrb[0].mxu0 %v1517
        %v1724 = vpop.f32.mrb[0].mxu0
        %v1725 = vadd.f32 0.0, %v1724
        %v1726 = vpop.f32.mrb[0].mxu0
        %1727 = vmatprep.mubr.f32.mxu0 0.0
        %1728 = vmatmul.mubr.f32.gmra.mrb[0].mxu0 %v1518
        %v1729 = vpop.f32.mrb[0].mxu0
        %v1730 = vadd.f32 0.0, %v1729
        %v1731 = vpop.f32.mrb[0].mxu0
        %1732 = vmatprep.mubr.f32.mxu0 0.0
        %1733 = vmatmul.mubr.f32.gmra.mrb[0].mxu0 %v1519
        %v1734 = vpop.f32.mrb[0].mxu0
        %v1735 = vadd.f32 0.0, %v1734
        %v1736 = vpop.f32.mrb[0].mxu0
        %1737 = vmatprep.mubr.f32.mxu0 0.0
        %1738 = vmatmul.mubr.f32.gmra.mrb[0].mxu0 %v1520
        %v1739 = vpop.f32.mrb[0].mxu0
        %v1740 = vadd.f32 0.0, %v1739
        %v1741 = vpop.f32.mrb[0].mxu0
        %1742 = vmatprep.mubr.f32.mxu0 0.0
        %1743 = vmatmul.mubr.f32.gmra.mrb[0].mxu0 %v1521
        %v1744 = vpop.f32.mrb[0].mxu0
        %v1745 = vadd.f32 0.0, %v1744
        %v1746 = vpop.f32.mrb[0].mxu0
        %1747 = vmatprep.mubr.f32.mxu0 0.0
        %1748 = vmatmul.mubr.f32.gmra.mrb[0].mxu0 %v1522
        %v1749 = vpop.f32.mrb[0].mxu0
        %v1750 = vadd.f32 0.0, %v1749
        %v1751 = vpop.f32.mrb[0].mxu0
        %1752 = vmatprep.mubr.f32.mxu0 0.0
        %1753 = vmatmul.mubr.f32.gmra.mrb[0].mxu0 %v1523
        %v1754 = vpop.f32.mrb[0].mxu0
        %v1755 = vadd.f32 0.0, %v1754
        %v1756 = vpop.f32.mrb[0].mxu0
        %1757 = vmatprep.mubr.f32.mxu0 0.0
        %1758 = vmatmul.mubr.f32.gmra.mrb[0].mxu0 %v1524
        %v1759 = vpop.f32.mrb[0].mxu0
        %v1760 = vadd.f32 0.0, %v1759
        %v1761 = vpop.f32.mrb[0].mxu0
        %1762 = vmatprep.mubr.f32.mxu0 0.0
        %1763 = vmatmul.mubr.f32.gmra.mrb[0].mxu0 %v1525
        %v1764 = vpop.f32.mrb[0].mxu0
        %v1765 = vadd.f32 0.0, %v1764
        %v1766 = vpop.f32.mrb[0].mxu0
        %1767 = vmatprep.mubr.f32.mxu0 0.0
        %1768 = vmatmul.mubr.f32.gmra.mrb[0].mxu0 %v1526
        %v1769 = vpop.f32.mrb[0].mxu0
        %v1770 = vadd.f32 0.0, %v1769
        %v1771 = vpop.f32.mrb[0].mxu0
        %1772 = vmatprep.mubr.f32.mxu0 0.0
        %1773 = vmatmul.mubr.f32.gmra.mrb[0].mxu0 %v1527
        %v1774 = vpop.f32.mrb[0].mxu0
        %v1775 = vadd.f32 0.0, %v1774
        %v1776 = vpop.f32.mrb[0].mxu0
        %1777 = vmatprep.mubr.f32.mxu0 0.0
        %1778 = vmatmul.mubr.f32.gmra.mrb[0].mxu0 %v1528
        %v1779 = vpop.f32.mrb[0].mxu0
        %v1780 = vadd.f32 0.0, %v1779
        %v1781 = vpop.f32.mrb[0].mxu0
        %1782 = vmatprep.mubr.f32.mxu0 0.0
        %1783 = vmatmul.mubr.f32.gmra.mrb[0].mxu0 %v1529
        %v1784 = vpop.f32.mrb[0].mxu0
        %v1785 = vadd.f32 0.0, %v1784
        %v1786 = vpop.f32.mrb[0].mxu0
        %1787 = vmatprep.mubr.f32.mxu0 0.0
        %1788 = vmatmul.mubr.f32.gmra.mrb[0].mxu0 %v1530
        %v1789 = vpop.f32.mrb[0].mxu0
        %v1790 = vadd.f32 0.0, %v1789
        %v1791 = vpop.f32.mrb[0].mxu0
        %1792 = vmatprep.mubr.f32.mxu0 0.0
        %1793 = vmatmul.mubr.f32.gmra.mrb[0].mxu0 %v1531
        %v1794 = vpop.f32.mrb[0].mxu0
        %v1795 = vadd.f32 0.0, %v1794
        %v1796 = vpop.f32.mrb[0].mxu0
        %1797 = vmatprep.mubr.f32.mxu0 0.0
        %1798 = vmatmul.mubr.f32.gmra.mrb[0].mxu0 %v1532
        %v1799 = vpop.f32.mrb[0].mxu0
        %v1800 = vadd.f32 0.0, %v1799
        %v1801 = vpop.f32.mrb[0].mxu0
        %1802 = vmatprep.mubr.f32.mxu0 0.0
        %1803 = vmatmul.mubr.f32.gmra.mrb[0].mxu0 %v1533
        %v1804 = vpop.f32.mrb[0].mxu0
        %v1805 = vadd.f32 0.0, %v1804
        %v1806 = vpop.f32.mrb[0].mxu0
        %1807 = vdwg.mxu0
        %v1808 = vadd.f32 %v1534, %v1650
        %v1809 = vadd.f32 %v1535, %v1655
        %v1810 = vadd.f32 %v1536, %v1660
        %v1811 = vadd.f32 %v1537, %v1665
        %v1812 = vadd.f32 %v1538, %v1670
        %v1813 = vadd.f32 %v1539, %v1675
        %v1814 = vadd.f32 %v1540, %v1680
        %v1815 = vadd.f32 %v1541, %v1685
        %v1816 = vadd.f32 %v1542, %v1690
        %v1817 = vadd.f32 %v1543, %v1695
        %v1818 = vadd.f32 %v1544, %v1700
        %v1819 = vadd.f32 %v1545, %v1705
        %v1820 = vadd.f32 %v1546, %v1710
        %v1821 = vadd.f32 %v1547, %v1715
        %v1822 = vadd.f32 %v1548, %v1720
        %v1823 = vadd.f32 %v1549, %v1725
        %v1824 = vadd.f32 %v1550, %v1730
        %v1825 = vadd.f32 %v1551, %v1735
        %v1826 = vadd.f32 %v1552, %v1740
        %v1827 = vadd.f32 %v1553, %v1745
        %v1828 = vadd.f32 %v1554, %v1750
        %v1829 = vadd.f32 %v1555, %v1755
        %v1830 = vadd.f32 %v1556, %v1760
        %v1831 = vadd.f32 %v1557, %v1765
        %v1832 = vadd.f32 %v1558, %v1770
        %v1833 = vadd.f32 %v1559, %v1775
        %v1834 = vadd.f32 %v1560, %v1780
        %v1835 = vadd.f32 %v1561, %v1785
        %v1836 = vadd.f32 %v1562, %v1790
        %v1837 = vadd.f32 %v1563, %v1795
        %v1838 = vadd.f32 %v1564, %v1800
        %v1839 = vadd.f32 %v1565, %v1805
        %1840 = vst [vmem:[#allocation3] sm:$0xff] %v1808
        %1841 = vst [vmem:[#allocation3 + $0x8] sm:$0xff] %v1809
        %1842 = vst [vmem:[#allocation3 + $0x10] sm:$0xff] %v1810
        %1843 = vst [vmem:[#allocation3 + $0x18] sm:$0xff] %v1811
        %1844 = vst [vmem:[#allocation3 + $0x20] sm:$0xff] %v1812
        %1845 = vst [vmem:[#allocation3 + $0x28] sm:$0xff] %v1813
        %1846 = vst [vmem:[#allocation3 + $0x30] sm:$0xff] %v1814
        %1847 = vst [vmem:[#allocation3 + $0x38] sm:$0xff] %v1815
        %1848 = vst [vmem:[#allocation3 + $0x40] sm:$0xff] %v1816
        %1849 = vst [vmem:[#allocation3 + $0x48] sm:$0xff] %v1817
        %1850 = vst [vmem:[#allocation3 + $0x50] sm:$0xff] %v1818
        %1851 = vst [vmem:[#allocation3 + $0x58] sm:$0xff] %v1819
        %1852 = vst [vmem:[#allocation3 + $0x60] sm:$0xff] %v1820
        %1853 = vst [vmem:[#allocation3 + $0x68] sm:$0xff] %v1821
        %1854 = vst [vmem:[#allocation3 + $0x70] sm:$0xff] %v1822
        %1855 = vst [vmem:[#allocation3 + $0x78] sm:$0xff] %v1823
        %1856 = vst [vmem:[#allocation3 + $0x80] sm:$0xff] %v1824
        %1857 = vst [vmem:[#allocation3 + $0x88] sm:$0xff] %v1825
        %1858 = vst [vmem:[#allocation3 + $0x90] sm:$0xff] %v1826
        %1859 = vst [vmem:[#allocation3 + $0x98] sm:$0xff] %v1827
        %1860 = vst [vmem:[#allocation3 + $0xa0] sm:$0xff] %v1828
        %1861 = vst [vmem:[#allocation3 + $0xa8] sm:$0xff] %v1829
        %1862 = vst [vmem:[#allocation3 + $0xb0] sm:$0xff] %v1830
        %1863 = vst [vmem:[#allocation3 + $0xb8] sm:$0xff] %v1831
        %1864 = vst [vmem:[#allocation3 + $0xc0] sm:$0xff] %v1832
        %1865 = vst [vmem:[#allocation3 + $0xc8] sm:$0xff] %v1833
        %1866 = vst [vmem:[#allocation3 + $0xd0] sm:$0xff] %v1834
        %1867 = vst [vmem:[#allocation3 + $0xd8] sm:$0xff] %v1835
        %1868 = vst [vmem:[#allocation3 + $0xe0] sm:$0xff] %v1836
        %1869 = vst [vmem:[#allocation3 + $0xe8] sm:$0xff] %v1837
        %1870 = vst [vmem:[#allocation3 + $0xf0] sm:$0xff] %v1838
        %1871 = vst [vmem:[#allocation3 + $0xf8] sm:$0xff] %v1839
        %v1872 = vld [vmem:[%s328 + $0x1] sm:$0xff]
        %v1873 = vld [vmem:[%s328 + $0x9] sm:$0xff]
        %v1874 = vld [vmem:[%s328 + $0x19] sm:$0xff]
        %v1875 = vld [vmem:[%s328 + $0x21] sm:$0xff]
        %v1876 = vld [vmem:[%s328 + $0x31] sm:$0xff]
        %v1877 = vld [vmem:[%s328 + $0x39] sm:$0xff]
        %v1878 = vld [vmem:[%s328 + $0x49] sm:$0xff]
        %v1879 = vld [vmem:[%s328 + $0x51] sm:$0xff]
        %v1880 = vld [vmem:[%s328 + $0x61] sm:$0xff]
        %v1881 = vld [vmem:[%s328 + $0x69] sm:$0xff]
        %v1882 = vld [vmem:[%s328 + $0x79] sm:$0xff]
        %v1883 = vld [vmem:[%s328 + $0x81] sm:$0xff]
        %v1884 = vld [vmem:[%s328 + $0x91] sm:$0xff]
        %v1885 = vld [vmem:[%s328 + $0x99] sm:$0xff]
        %v1886 = vld [vmem:[%s328 + $0xa9] sm:$0xff]
        %v1887 = vld [vmem:[%s328 + $0xb1] sm:$0xff]
        %v1888 = vld [vmem:[%s328 + $0xc1] sm:$0xff]
        %v1889 = vld [vmem:[%s328 + $0xc9] sm:$0xff]
        %v1890 = vld [vmem:[%s328 + $0xd9] sm:$0xff]
        %v1891 = vld [vmem:[%s328 + $0xe1] sm:$0xff]
        %v1892 = vld [vmem:[%s328 + $0xf1] sm:$0xff]
        %v1893 = vld [vmem:[%s328 + $0xf9] sm:$0xff]
        %v1894 = vld [vmem:[%s328 + $0x109] sm:$0xff]
        %v1895 = vld [vmem:[%s328 + $0x111] sm:$0xff]
        %v1896 = vld [vmem:[%s328 + $0x121] sm:$0xff]
        %v1897 = vld [vmem:[%s328 + $0x129] sm:$0xff]
        %v1898 = vld [vmem:[%s328 + $0x139] sm:$0xff]
        %v1899 = vld [vmem:[%s328 + $0x141] sm:$0xff]
        %v1900 = vld [vmem:[%s328 + $0x151] sm:$0xff]
        %v1901 = vld [vmem:[%s328 + $0x159] sm:$0xff]
        %v1902 = vld [vmem:[%s328 + $0x169] sm:$0xff]
        %v1903 = vld [vmem:[%s328 + $0x171] sm:$0xff]
        %v1904 = vld [vmem:[#allocation3] sm:$0xff]
        %v1905 = vld [vmem:[#allocation3 + $0x8] sm:$0xff]
        %v1906 = vld [vmem:[#allocation3 + $0x10] sm:$0xff]
        %v1907 = vld [vmem:[#allocation3 + $0x18] sm:$0xff]
        %v1908 = vld [vmem:[#allocation3 + $0x20] sm:$0xff]
        %v1909 = vld [vmem:[#allocation3 + $0x28] sm:$0xff]
        %v1910 = vld [vmem:[#allocation3 + $0x30] sm:$0xff]
        %v1911 = vld [vmem:[#allocation3 + $0x38] sm:$0xff]
        %v1912 = vld [vmem:[#allocation3 + $0x40] sm:$0xff]
        %v1913 = vld [vmem:[#allocation3 + $0x48] sm:$0xff]
        %v1914 = vld [vmem:[#allocation3 + $0x50] sm:$0xff]
        %v1915 = vld [vmem:[#allocation3 + $0x58] sm:$0xff]
        %v1916 = vld [vmem:[#allocation3 + $0x60] sm:$0xff]
        %v1917 = vld [vmem:[#allocation3 + $0x68] sm:$0xff]
        %v1918 = vld [vmem:[#allocation3 + $0x70] sm:$0xff]
        %v1919 = vld [vmem:[#allocation3 + $0x78] sm:$0xff]
        %v1920 = vld [vmem:[#allocation3 + $0x80] sm:$0xff]
        %v1921 = vld [vmem:[#allocation3 + $0x88] sm:$0xff]
        %v1922 = vld [vmem:[#allocation3 + $0x90] sm:$0xff]
        %v1923 = vld [vmem:[#allocation3 + $0x98] sm:$0xff]
        %v1924 = vld [vmem:[#allocation3 + $0xa0] sm:$0xff]
        %v1925 = vld [vmem:[#allocation3 + $0xa8] sm:$0xff]
        %v1926 = vld [vmem:[#allocation3 + $0xb0] sm:$0xff]
        %v1927 = vld [vmem:[#allocation3 + $0xb8] sm:$0xff]
        %v1928 = vld [vmem:[#allocation3 + $0xc0] sm:$0xff]
        %v1929 = vld [vmem:[#allocation3 + $0xc8] sm:$0xff]
        %v1930 = vld [vmem:[#allocation3 + $0xd0] sm:$0xff]
        %v1931 = vld [vmem:[#allocation3 + $0xd8] sm:$0xff]
        %v1932 = vld [vmem:[#allocation3 + $0xe0] sm:$0xff]
        %v1933 = vld [vmem:[#allocation3 + $0xe8] sm:$0xff]
        %v1934 = vld [vmem:[#allocation3 + $0xf0] sm:$0xff]
        %v1935 = vld [vmem:[#allocation3 + $0xf8] sm:$0xff]
        %s1936 = scalar_lea.vmem [#allocation7], 512
        %v1937 = vld [vmem:[%s1936] sm:$0xff]
        %v1938 = vld [vmem:[%s1936 + $0x8] sm:$0xff]
        %v1939 = vld [vmem:[%s1936 + $0x10] sm:$0xff]
        %v1940 = vld [vmem:[%s1936 + $0x18] sm:$0xff]
        %v1941 = vld [vmem:[%s1936 + $0x20] sm:$0xff]
        %v1942 = vld [vmem:[%s1936 + $0x28] sm:$0xff]
        %v1943 = vld [vmem:[%s1936 + $0x30] sm:$0xff]
        %v1944 = vld [vmem:[%s1936 + $0x38] sm:$0xff]
        %v1945 = vld [vmem:[%s1936 + $0x40] sm:$0xff]
        %v1946 = vld [vmem:[%s1936 + $0x48] sm:$0xff]
        %v1947 = vld [vmem:[%s1936 + $0x50] sm:$0xff]
        %v1948 = vld [vmem:[%s1936 + $0x58] sm:$0xff]
        %v1949 = vld [vmem:[%s1936 + $0x60] sm:$0xff]
        %v1950 = vld [vmem:[%s1936 + $0x68] sm:$0xff]
        %v1951 = vld [vmem:[%s1936 + $0x70] sm:$0xff]
        %v1952 = vld [vmem:[%s1936 + $0x78] sm:$0xff]
        %1953 = vmatprep.subr.mxu0 0.0
        %1954 = vmatpush1.msra.mxu0 %v1937
        %1955 = vmatprep.subr.mxu0 0.0
        %1956 = vmatpush1.msra.mxu0 %v1938
        %1957 = vmatprep.subr.mxu0 0.0
        %1958 = vmatpush1.msra.mxu0 %v1939
        %1959 = vmatprep.subr.mxu0 0.0
        %1960 = vmatpush1.msra.mxu0 %v1940
        %1961 = vmatprep.subr.mxu0 0.0
        %1962 = vmatpush1.msra.mxu0 %v1941
        %1963 = vmatprep.subr.mxu0 0.0
        %1964 = vmatpush1.msra.mxu0 %v1942
        %1965 = vmatprep.subr.mxu0 0.0
        %1966 = vmatpush1.msra.mxu0 %v1943
        %1967 = vmatprep.subr.mxu0 0.0
        %1968 = vmatpush1.msra.mxu0 %v1944
        %1969 = vmatprep.subr.mxu0 0.0
        %1970 = vmatpush1.msra.mxu0 %v1945
        %1971 = vmatprep.subr.mxu0 0.0
        %1972 = vmatpush1.msra.mxu0 %v1946
        %1973 = vmatprep.subr.mxu0 0.0
        %1974 = vmatpush1.msra.mxu0 %v1947
        %1975 = vmatprep.subr.mxu0 0.0
        %1976 = vmatpush1.msra.mxu0 %v1948
        %1977 = vmatprep.subr.mxu0 0.0
        %1978 = vmatpush1.msra.mxu0 %v1949
        %1979 = vmatprep.subr.mxu0 0.0
        %1980 = vmatpush1.msra.mxu0 %v1950
        %1981 = vmatprep.subr.mxu0 0.0
        %1982 = vmatpush1.msra.mxu0 %v1951
        %1983 = vmatprep.subr.mxu0 0.0
        %1984 = vmatpush1.msra.mxu0 %v1952
        %1985 = vmatprep.subr.mxu0 0.0
        %1986 = vmatpush1.msra.mxu0 0.0
        %1987 = vmatprep.subr.mxu0 0.0
        %1988 = vmatpush1.msra.mxu0 0.0
        %1989 = vmatprep.subr.mxu0 0.0
        %1990 = vmatpush1.msra.mxu0 0.0
        %1991 = vmatprep.subr.mxu0 0.0
        %1992 = vmatpush1.msra.mxu0 0.0
        %1993 = vmatprep.subr.mxu0 0.0
        %1994 = vmatpush1.msra.mxu0 0.0
        %1995 = vmatprep.subr.mxu0 0.0
        %1996 = vmatpush1.msra.mxu0 0.0
        %1997 = vmatprep.subr.mxu0 0.0
        %1998 = vmatpush1.msra.mxu0 0.0
        %1999 = vmatprep.subr.mxu0 0.0
        %2000 = vmatpush1.msra.mxu0 0.0
        %2001 = vmatprep.subr.mxu0 0.0
        %2002 = vmatpush1.msra.mxu0 0.0
        %2003 = vmatprep.subr.mxu0 0.0
        %2004 = vmatpush1.msra.mxu0 0.0
        %2005 = vmatprep.subr.mxu0 0.0
        %2006 = vmatpush1.msra.mxu0 0.0
        %2007 = vmatprep.subr.mxu0 0.0
        %2008 = vmatpush1.msra.mxu0 0.0
        %2009 = vmatprep.subr.mxu0 0.0
        %2010 = vmatpush1.msra.mxu0 0.0
        %2011 = vmatprep.subr.mxu0 0.0
        %2012 = vmatpush1.msra.mxu0 0.0
        %2013 = vmatprep.subr.mxu0 0.0
        %2014 = vmatpush1.msra.mxu0 0.0
        %2015 = vmatprep.subr.mxu0 0.0
        %2016 = vmatpush1.msra.mxu0 0.0
        %2017 = vmatprep.mubr.f32.mxu0 0.0
        %2018 = vmatmul.mubr.f32.gmra.mrb[0].mxu0 %v1872
        %v2019 = vpop.f32.mrb[0].mxu0
        %v2020 = vadd.f32 0.0, %v2019
        %v2021 = vpop.f32.mrb[0].mxu0
        %2022 = vmatprep.mubr.f32.mxu0 0.0
        %2023 = vmatmul.mubr.f32.gmra.mrb[0].mxu0 %v1873
        %v2024 = vpop.f32.mrb[0].mxu0
        %v2025 = vadd.f32 0.0, %v2024
        %v2026 = vpop.f32.mrb[0].mxu0
        %2027 = vmatprep.mubr.f32.mxu0 0.0
        %2028 = vmatmul.mubr.f32.gmra.mrb[0].mxu0 %v1874
        %v2029 = vpop.f32.mrb[0].mxu0
        %v2030 = vadd.f32 0.0, %v2029
        %v2031 = vpop.f32.mrb[0].mxu0
        %2032 = vmatprep.mubr.f32.mxu0 0.0
        %2033 = vmatmul.mubr.f32.gmra.mrb[0].mxu0 %v1875
        %v2034 = vpop.f32.mrb[0].mxu0
        %v2035 = vadd.f32 0.0, %v2034
        %v2036 = vpop.f32.mrb[0].mxu0
        %2037 = vmatprep.mubr.f32.mxu0 0.0
        %2038 = vmatmul.mubr.f32.gmra.mrb[0].mxu0 %v1876
        %v2039 = vpop.f32.mrb[0].mxu0
        %v2040 = vadd.f32 0.0, %v2039
        %v2041 = vpop.f32.mrb[0].mxu0
        %2042 = vmatprep.mubr.f32.mxu0 0.0
        %2043 = vmatmul.mubr.f32.gmra.mrb[0].mxu0 %v1877
        %v2044 = vpop.f32.mrb[0].mxu0
        %v2045 = vadd.f32 0.0, %v2044
        %v2046 = vpop.f32.mrb[0].mxu0
        %2047 = vmatprep.mubr.f32.mxu0 0.0
        %2048 = vmatmul.mubr.f32.gmra.mrb[0].mxu0 %v1878
        %v2049 = vpop.f32.mrb[0].mxu0
        %v2050 = vadd.f32 0.0, %v2049
        %v2051 = vpop.f32.mrb[0].mxu0
        %2052 = vmatprep.mubr.f32.mxu0 0.0
        %2053 = vmatmul.mubr.f32.gmra.mrb[0].mxu0 %v1879
        %v2054 = vpop.f32.mrb[0].mxu0
        %v2055 = vadd.f32 0.0, %v2054
        %v2056 = vpop.f32.mrb[0].mxu0
        %2057 = vmatprep.mubr.f32.mxu0 0.0
        %2058 = vmatmul.mubr.f32.gmra.mrb[0].mxu0 %v1880
        %v2059 = vpop.f32.mrb[0].mxu0
        %v2060 = vadd.f32 0.0, %v2059
        %v2061 = vpop.f32.mrb[0].mxu0
        %2062 = vmatprep.mubr.f32.mxu0 0.0
        %2063 = vmatmul.mubr.f32.gmra.mrb[0].mxu0 %v1881
        %v2064 = vpop.f32.mrb[0].mxu0
        %v2065 = vadd.f32 0.0, %v2064
        %v2066 = vpop.f32.mrb[0].mxu0
        %2067 = vmatprep.mubr.f32.mxu0 0.0
        %2068 = vmatmul.mubr.f32.gmra.mrb[0].mxu0 %v1882
        %v2069 = vpop.f32.mrb[0].mxu0
        %v2070 = vadd.f32 0.0, %v2069
        %v2071 = vpop.f32.mrb[0].mxu0
        %2072 = vmatprep.mubr.f32.mxu0 0.0
        %2073 = vmatmul.mubr.f32.gmra.mrb[0].mxu0 %v1883
        %v2074 = vpop.f32.mrb[0].mxu0
        %v2075 = vadd.f32 0.0, %v2074
        %v2076 = vpop.f32.mrb[0].mxu0
        %2077 = vmatprep.mubr.f32.mxu0 0.0
        %2078 = vmatmul.mubr.f32.gmra.mrb[0].mxu0 %v1884
        %v2079 = vpop.f32.mrb[0].mxu0
        %v2080 = vadd.f32 0.0, %v2079
        %v2081 = vpop.f32.mrb[0].mxu0
        %2082 = vmatprep.mubr.f32.mxu0 0.0
        %2083 = vmatmul.mubr.f32.gmra.mrb[0].mxu0 %v1885
        %v2084 = vpop.f32.mrb[0].mxu0
        %v2085 = vadd.f32 0.0, %v2084
        %v2086 = vpop.f32.mrb[0].mxu0
        %2087 = vmatprep.mubr.f32.mxu0 0.0
        %2088 = vmatmul.mubr.f32.gmra.mrb[0].mxu0 %v1886
        %v2089 = vpop.f32.mrb[0].mxu0
        %v2090 = vadd.f32 0.0, %v2089
        %v2091 = vpop.f32.mrb[0].mxu0
        %2092 = vmatprep.mubr.f32.mxu0 0.0
        %2093 = vmatmul.mubr.f32.gmra.mrb[0].mxu0 %v1887
        %v2094 = vpop.f32.mrb[0].mxu0
        %v2095 = vadd.f32 0.0, %v2094
        %v2096 = vpop.f32.mrb[0].mxu0
        %2097 = vmatprep.mubr.f32.mxu0 0.0
        %2098 = vmatmul.mubr.f32.gmra.mrb[0].mxu0 %v1888
        %v2099 = vpop.f32.mrb[0].mxu0
        %v2100 = vadd.f32 0.0, %v2099
        %v2101 = vpop.f32.mrb[0].mxu0
        %2102 = vmatprep.mubr.f32.mxu0 0.0
        %2103 = vmatmul.mubr.f32.gmra.mrb[0].mxu0 %v1889
        %v2104 = vpop.f32.mrb[0].mxu0
        %v2105 = vadd.f32 0.0, %v2104
        %v2106 = vpop.f32.mrb[0].mxu0
        %2107 = vmatprep.mubr.f32.mxu0 0.0
        %2108 = vmatmul.mubr.f32.gmra.mrb[0].mxu0 %v1890
        %v2109 = vpop.f32.mrb[0].mxu0
        %v2110 = vadd.f32 0.0, %v2109
        %v2111 = vpop.f32.mrb[0].mxu0
        %2112 = vmatprep.mubr.f32.mxu0 0.0
        %2113 = vmatmul.mubr.f32.gmra.mrb[0].mxu0 %v1891
        %v2114 = vpop.f32.mrb[0].mxu0
        %v2115 = vadd.f32 0.0, %v2114
        %v2116 = vpop.f32.mrb[0].mxu0
        %2117 = vmatprep.mubr.f32.mxu0 0.0
        %2118 = vmatmul.mubr.f32.gmra.mrb[0].mxu0 %v1892
        %v2119 = vpop.f32.mrb[0].mxu0
        %v2120 = vadd.f32 0.0, %v2119
        %v2121 = vpop.f32.mrb[0].mxu0
        %2122 = vmatprep.mubr.f32.mxu0 0.0
        %2123 = vmatmul.mubr.f32.gmra.mrb[0].mxu0 %v1893
        %v2124 = vpop.f32.mrb[0].mxu0
        %v2125 = vadd.f32 0.0, %v2124
        %v2126 = vpop.f32.mrb[0].mxu0
        %2127 = vmatprep.mubr.f32.mxu0 0.0
        %2128 = vmatmul.mubr.f32.gmra.mrb[0].mxu0 %v1894
        %v2129 = vpop.f32.mrb[0].mxu0
        %v2130 = vadd.f32 0.0, %v2129
        %v2131 = vpop.f32.mrb[0].mxu0
        %2132 = vmatprep.mubr.f32.mxu0 0.0
        %2133 = vmatmul.mubr.f32.gmra.mrb[0].mxu0 %v1895
        %v2134 = vpop.f32.mrb[0].mxu0
        %v2135 = vadd.f32 0.0, %v2134
        %v2136 = vpop.f32.mrb[0].mxu0
        %2137 = vmatprep.mubr.f32.mxu0 0.0
        %2138 = vmatmul.mubr.f32.gmra.mrb[0].mxu0 %v1896
        %v2139 = vpop.f32.mrb[0].mxu0
        %v2140 = vadd.f32 0.0, %v2139
        %v2141 = vpop.f32.mrb[0].mxu0
        %2142 = vmatprep.mubr.f32.mxu0 0.0
        %2143 = vmatmul.mubr.f32.gmra.mrb[0].mxu0 %v1897
        %v2144 = vpop.f32.mrb[0].mxu0
        %v2145 = vadd.f32 0.0, %v2144
        %v2146 = vpop.f32.mrb[0].mxu0
        %2147 = vmatprep.mubr.f32.mxu0 0.0
        %2148 = vmatmul.mubr.f32.gmra.mrb[0].mxu0 %v1898
        %v2149 = vpop.f32.mrb[0].mxu0
        %v2150 = vadd.f32 0.0, %v2149
        %v2151 = vpop.f32.mrb[0].mxu0
        %2152 = vmatprep.mubr.f32.mxu0 0.0
        %2153 = vmatmul.mubr.f32.gmra.mrb[0].mxu0 %v1899
        %v2154 = vpop.f32.mrb[0].mxu0
        %v2155 = vadd.f32 0.0, %v2154
        %v2156 = vpop.f32.mrb[0].mxu0
        %2157 = vmatprep.mubr.f32.mxu0 0.0
        %2158 = vmatmul.mubr.f32.gmra.mrb[0].mxu0 %v1900
        %v2159 = vpop.f32.mrb[0].mxu0
        %v2160 = vadd.f32 0.0, %v2159
        %v2161 = vpop.f32.mrb[0].mxu0
        %2162 = vmatprep.mubr.f32.mxu0 0.0
        %2163 = vmatmul.mubr.f32.gmra.mrb[0].mxu0 %v1901
        %v2164 = vpop.f32.mrb[0].mxu0
        %v2165 = vadd.f32 0.0, %v2164
        %v2166 = vpop.f32.mrb[0].mxu0
        %2167 = vmatprep.mubr.f32.mxu0 0.0
        %2168 = vmatmul.mubr.f32.gmra.mrb[0].mxu0 %v1902
        %v2169 = vpop.f32.mrb[0].mxu0
        %v2170 = vadd.f32 0.0, %v2169
        %v2171 = vpop.f32.mrb[0].mxu0
        %2172 = vmatprep.mubr.f32.mxu0 0.0
        %2173 = vmatmul.mubr.f32.gmra.mrb[0].mxu0 %v1903
        %v2174 = vpop.f32.mrb[0].mxu0
        %v2175 = vadd.f32 0.0, %v2174
        %v2176 = vpop.f32.mrb[0].mxu0
        %2177 = vdwg.mxu0
        %v2178 = vadd.f32 %v1904, %v2020
        %v2179 = vadd.f32 %v1905, %v2025
        %v2180 = vadd.f32 %v1906, %v2030
        %v2181 = vadd.f32 %v1907, %v2035
        %v2182 = vadd.f32 %v1908, %v2040
        %v2183 = vadd.f32 %v1909, %v2045
        %v2184 = vadd.f32 %v1910, %v2050
        %v2185 = vadd.f32 %v1911, %v2055
        %v2186 = vadd.f32 %v1912, %v2060
        %v2187 = vadd.f32 %v1913, %v2065
        %v2188 = vadd.f32 %v1914, %v2070
        %v2189 = vadd.f32 %v1915, %v2075
        %v2190 = vadd.f32 %v1916, %v2080
        %v2191 = vadd.f32 %v1917, %v2085
        %v2192 = vadd.f32 %v1918, %v2090
        %v2193 = vadd.f32 %v1919, %v2095
        %v2194 = vadd.f32 %v1920, %v2100
        %v2195 = vadd.f32 %v1921, %v2105
        %v2196 = vadd.f32 %v1922, %v2110
        %v2197 = vadd.f32 %v1923, %v2115
        %v2198 = vadd.f32 %v1924, %v2120
        %v2199 = vadd.f32 %v1925, %v2125
        %v2200 = vadd.f32 %v1926, %v2130
        %v2201 = vadd.f32 %v1927, %v2135
        %v2202 = vadd.f32 %v1928, %v2140
        %v2203 = vadd.f32 %v1929, %v2145
        %v2204 = vadd.f32 %v1930, %v2150
        %v2205 = vadd.f32 %v1931, %v2155
        %v2206 = vadd.f32 %v1932, %v2160
        %v2207 = vadd.f32 %v1933, %v2165
        %v2208 = vadd.f32 %v1934, %v2170
        %v2209 = vadd.f32 %v1935, %v2175
        %2210 = vst [vmem:[#allocation3] sm:$0xff] %v2178
        %2211 = vst [vmem:[#allocation3 + $0x8] sm:$0xff] %v2179
        %2212 = vst [vmem:[#allocation3 + $0x10] sm:$0xff] %v2180
        %2213 = vst [vmem:[#allocation3 + $0x18] sm:$0xff] %v2181
        %2214 = vst [vmem:[#allocation3 + $0x20] sm:$0xff] %v2182
        %2215 = vst [vmem:[#allocation3 + $0x28] sm:$0xff] %v2183
        %2216 = vst [vmem:[#allocation3 + $0x30] sm:$0xff] %v2184
        %2217 = vst [vmem:[#allocation3 + $0x38] sm:$0xff] %v2185
        %2218 = vst [vmem:[#allocation3 + $0x40] sm:$0xff] %v2186
        %2219 = vst [vmem:[#allocation3 + $0x48] sm:$0xff] %v2187
        %2220 = vst [vmem:[#allocation3 + $0x50] sm:$0xff] %v2188
        %2221 = vst [vmem:[#allocation3 + $0x58] sm:$0xff] %v2189
        %2222 = vst [vmem:[#allocation3 + $0x60] sm:$0xff] %v2190
        %2223 = vst [vmem:[#allocation3 + $0x68] sm:$0xff] %v2191
        %2224 = vst [vmem:[#allocation3 + $0x70] sm:$0xff] %v2192
        %2225 = vst [vmem:[#allocation3 + $0x78] sm:$0xff] %v2193
        %2226 = vst [vmem:[#allocation3 + $0x80] sm:$0xff] %v2194
        %2227 = vst [vmem:[#allocation3 + $0x88] sm:$0xff] %v2195
        %2228 = vst [vmem:[#allocation3 + $0x90] sm:$0xff] %v2196
        %2229 = vst [vmem:[#allocation3 + $0x98] sm:$0xff] %v2197
        %2230 = vst [vmem:[#allocation3 + $0xa0] sm:$0xff] %v2198
        %2231 = vst [vmem:[#allocation3 + $0xa8] sm:$0xff] %v2199
        %2232 = vst [vmem:[#allocation3 + $0xb0] sm:$0xff] %v2200
        %2233 = vst [vmem:[#allocation3 + $0xb8] sm:$0xff] %v2201
        %2234 = vst [vmem:[#allocation3 + $0xc0] sm:$0xff] %v2202
        %2235 = vst [vmem:[#allocation3 + $0xc8] sm:$0xff] %v2203
        %2236 = vst [vmem:[#allocation3 + $0xd0] sm:$0xff] %v2204
        %2237 = vst [vmem:[#allocation3 + $0xd8] sm:$0xff] %v2205
        %2238 = vst [vmem:[#allocation3 + $0xe0] sm:$0xff] %v2206
        %2239 = vst [vmem:[#allocation3 + $0xe8] sm:$0xff] %v2207
        %2240 = vst [vmem:[#allocation3 + $0xf0] sm:$0xff] %v2208
        %2241 = vst [vmem:[#allocation3 + $0xf8] sm:$0xff] %v2209
        %v2242 = vld [vmem:[%s328 + $0x2] sm:$0xff]
        %v2243 = vld [vmem:[%s328 + $0xa] sm:$0xff]
        %v2244 = vld [vmem:[%s328 + $0x1a] sm:$0xff]
        %v2245 = vld [vmem:[%s328 + $0x22] sm:$0xff]
        %v2246 = vld [vmem:[%s328 + $0x32] sm:$0xff]
        %v2247 = vld [vmem:[%s328 + $0x3a] sm:$0xff]
        %v2248 = vld [vmem:[%s328 + $0x4a] sm:$0xff]
        %v2249 = vld [vmem:[%s328 + $0x52] sm:$0xff]
        %v2250 = vld [vmem:[%s328 + $0x62] sm:$0xff]
        %v2251 = vld [vmem:[%s328 + $0x6a] sm:$0xff]
        %v2252 = vld [vmem:[%s328 + $0x7a] sm:$0xff]
        %v2253 = vld [vmem:[%s328 + $0x82] sm:$0xff]
        %v2254 = vld [vmem:[%s328 + $0x92] sm:$0xff]
        %v2255 = vld [vmem:[%s328 + $0x9a] sm:$0xff]
        %v2256 = vld [vmem:[%s328 + $0xaa] sm:$0xff]
        %v2257 = vld [vmem:[%s328 + $0xb2] sm:$0xff]
        %v2258 = vld [vmem:[%s328 + $0xc2] sm:$0xff]
        %v2259 = vld [vmem:[%s328 + $0xca] sm:$0xff]
        %v2260 = vld [vmem:[%s328 + $0xda] sm:$0xff]
        %v2261 = vld [vmem:[%s328 + $0xe2] sm:$0xff]
        %v2262 = vld [vmem:[%s328 + $0xf2] sm:$0xff]
        %v2263 = vld [vmem:[%s328 + $0xfa] sm:$0xff]
        %v2264 = vld [vmem:[%s328 + $0x10a] sm:$0xff]
        %v2265 = vld [vmem:[%s328 + $0x112] sm:$0xff]
        %v2266 = vld [vmem:[%s328 + $0x122] sm:$0xff]
        %v2267 = vld [vmem:[%s328 + $0x12a] sm:$0xff]
        %v2268 = vld [vmem:[%s328 + $0x13a] sm:$0xff]
        %v2269 = vld [vmem:[%s328 + $0x142] sm:$0xff]
        %v2270 = vld [vmem:[%s328 + $0x152] sm:$0xff]
        %v2271 = vld [vmem:[%s328 + $0x15a] sm:$0xff]
        %v2272 = vld [vmem:[%s328 + $0x16a] sm:$0xff]
        %v2273 = vld [vmem:[%s328 + $0x172] sm:$0xff]
        %v2274 = vld [vmem:[#allocation3] sm:$0xff]
        %v2275 = vld [vmem:[#allocation3 + $0x8] sm:$0xff]
        %v2276 = vld [vmem:[#allocation3 + $0x10] sm:$0xff]
        %v2277 = vld [vmem:[#allocation3 + $0x18] sm:$0xff]
        %v2278 = vld [vmem:[#allocation3 + $0x20] sm:$0xff]
        %v2279 = vld [vmem:[#allocation3 + $0x28] sm:$0xff]
        %v2280 = vld [vmem:[#allocation3 + $0x30] sm:$0xff]
        %v2281 = vld [vmem:[#allocation3 + $0x38] sm:$0xff]
        %v2282 = vld [vmem:[#allocation3 + $0x40] sm:$0xff]
        %v2283 = vld [vmem:[#allocation3 + $0x48] sm:$0xff]
        %v2284 = vld [vmem:[#allocation3 + $0x50] sm:$0xff]
        %v2285 = vld [vmem:[#allocation3 + $0x58] sm:$0xff]
        %v2286 = vld [vmem:[#allocation3 + $0x60] sm:$0xff]
        %v2287 = vld [vmem:[#allocation3 + $0x68] sm:$0xff]
        %v2288 = vld [vmem:[#allocation3 + $0x70] sm:$0xff]
        %v2289 = vld [vmem:[#allocation3 + $0x78] sm:$0xff]
        %v2290 = vld [vmem:[#allocation3 + $0x80] sm:$0xff]
        %v2291 = vld [vmem:[#allocation3 + $0x88] sm:$0xff]
        %v2292 = vld [vmem:[#allocation3 + $0x90] sm:$0xff]
        %v2293 = vld [vmem:[#allocation3 + $0x98] sm:$0xff]
        %v2294 = vld [vmem:[#allocation3 + $0xa0] sm:$0xff]
        %v2295 = vld [vmem:[#allocation3 + $0xa8] sm:$0xff]
        %v2296 = vld [vmem:[#allocation3 + $0xb0] sm:$0xff]
        %v2297 = vld [vmem:[#allocation3 + $0xb8] sm:$0xff]
        %v2298 = vld [vmem:[#allocation3 + $0xc0] sm:$0xff]
        %v2299 = vld [vmem:[#allocation3 + $0xc8] sm:$0xff]
        %v2300 = vld [vmem:[#allocation3 + $0xd0] sm:$0xff]
        %v2301 = vld [vmem:[#allocation3 + $0xd8] sm:$0xff]
        %v2302 = vld [vmem:[#allocation3 + $0xe0] sm:$0xff]
        %v2303 = vld [vmem:[#allocation3 + $0xe8] sm:$0xff]
        %v2304 = vld [vmem:[#allocation3 + $0xf0] sm:$0xff]
        %v2305 = vld [vmem:[#allocation3 + $0xf8] sm:$0xff]
        %s2306 = scalar_lea.vmem [#allocation7], 640
        %v2307 = vld [vmem:[%s2306] sm:$0xff]
        %v2308 = vld [vmem:[%s2306 + $0x8] sm:$0xff]
        %v2309 = vld [vmem:[%s2306 + $0x10] sm:$0xff]
        %v2310 = vld [vmem:[%s2306 + $0x18] sm:$0xff]
        %v2311 = vld [vmem:[%s2306 + $0x20] sm:$0xff]
        %v2312 = vld [vmem:[%s2306 + $0x28] sm:$0xff]
        %v2313 = vld [vmem:[%s2306 + $0x30] sm:$0xff]
        %v2314 = vld [vmem:[%s2306 + $0x38] sm:$0xff]
        %v2315 = vld [vmem:[%s2306 + $0x40] sm:$0xff]
        %v2316 = vld [vmem:[%s2306 + $0x48] sm:$0xff]
        %v2317 = vld [vmem:[%s2306 + $0x50] sm:$0xff]
        %v2318 = vld [vmem:[%s2306 + $0x58] sm:$0xff]
        %v2319 = vld [vmem:[%s2306 + $0x60] sm:$0xff]
        %v2320 = vld [vmem:[%s2306 + $0x68] sm:$0xff]
        %v2321 = vld [vmem:[%s2306 + $0x70] sm:$0xff]
        %v2322 = vld [vmem:[%s2306 + $0x78] sm:$0xff]
        %2323 = vmatprep.subr.mxu0 0.0
        %2324 = vmatpush1.msra.mxu0 %v2307
        %2325 = vmatprep.subr.mxu0 0.0
        %2326 = vmatpush1.msra.mxu0 %v2308
        %2327 = vmatprep.subr.mxu0 0.0
        %2328 = vmatpush1.msra.mxu0 %v2309
        %2329 = vmatprep.subr.mxu0 0.0
        %2330 = vmatpush1.msra.mxu0 %v2310
        %2331 = vmatprep.subr.mxu0 0.0
        %2332 = vmatpush1.msra.mxu0 %v2311
        %2333 = vmatprep.subr.mxu0 0.0
        %2334 = vmatpush1.msra.mxu0 %v2312
        %2335 = vmatprep.subr.mxu0 0.0
        %2336 = vmatpush1.msra.mxu0 %v2313
        %2337 = vmatprep.subr.mxu0 0.0
        %2338 = vmatpush1.msra.mxu0 %v2314
        %2339 = vmatprep.subr.mxu0 0.0
        %2340 = vmatpush1.msra.mxu0 %v2315
        %2341 = vmatprep.subr.mxu0 0.0
        %2342 = vmatpush1.msra.mxu0 %v2316
        %2343 = vmatprep.subr.mxu0 0.0
        %2344 = vmatpush1.msra.mxu0 %v2317
        %2345 = vmatprep.subr.mxu0 0.0
        %2346 = vmatpush1.msra.mxu0 %v2318
        %2347 = vmatprep.subr.mxu0 0.0
        %2348 = vmatpush1.msra.mxu0 %v2319
        %2349 = vmatprep.subr.mxu0 0.0
        %2350 = vmatpush1.msra.mxu0 %v2320
        %2351 = vmatprep.subr.mxu0 0.0
        %2352 = vmatpush1.msra.mxu0 %v2321
        %2353 = vmatprep.subr.mxu0 0.0
        %2354 = vmatpush1.msra.mxu0 %v2322
        %2355 = vmatprep.subr.mxu0 0.0
        %2356 = vmatpush1.msra.mxu0 0.0
        %2357 = vmatprep.subr.mxu0 0.0
        %2358 = vmatpush1.msra.mxu0 0.0
        %2359 = vmatprep.subr.mxu0 0.0
        %2360 = vmatpush1.msra.mxu0 0.0
        %2361 = vmatprep.subr.mxu0 0.0
        %2362 = vmatpush1.msra.mxu0 0.0
        %2363 = vmatprep.subr.mxu0 0.0
        %2364 = vmatpush1.msra.mxu0 0.0
        %2365 = vmatprep.subr.mxu0 0.0
        %2366 = vmatpush1.msra.mxu0 0.0
        %2367 = vmatprep.subr.mxu0 0.0
        %2368 = vmatpush1.msra.mxu0 0.0
        %2369 = vmatprep.subr.mxu0 0.0
        %2370 = vmatpush1.msra.mxu0 0.0
        %2371 = vmatprep.subr.mxu0 0.0
        %2372 = vmatpush1.msra.mxu0 0.0
        %2373 = vmatprep.subr.mxu0 0.0
        %2374 = vmatpush1.msra.mxu0 0.0
        %2375 = vmatprep.subr.mxu0 0.0
        %2376 = vmatpush1.msra.mxu0 0.0
        %2377 = vmatprep.subr.mxu0 0.0
        %2378 = vmatpush1.msra.mxu0 0.0
        %2379 = vmatprep.subr.mxu0 0.0
        %2380 = vmatpush1.msra.mxu0 0.0
        %2381 = vmatprep.subr.mxu0 0.0
        %2382 = vmatpush1.msra.mxu0 0.0
        %2383 = vmatprep.subr.mxu0 0.0
        %2384 = vmatpush1.msra.mxu0 0.0
        %2385 = vmatprep.subr.mxu0 0.0
        %2386 = vmatpush1.msra.mxu0 0.0
        %2387 = vmatprep.mubr.f32.mxu0 0.0
        %2388 = vmatmul.mubr.f32.gmra.mrb[0].mxu0 %v2242
        %v2389 = vpop.f32.mrb[0].mxu0
        %v2390 = vadd.f32 0.0, %v2389
        %v2391 = vpop.f32.mrb[0].mxu0
        %2392 = vmatprep.mubr.f32.mxu0 0.0
        %2393 = vmatmul.mubr.f32.gmra.mrb[0].mxu0 %v2243
        %v2394 = vpop.f32.mrb[0].mxu0
        %v2395 = vadd.f32 0.0, %v2394
        %v2396 = vpop.f32.mrb[0].mxu0
        %2397 = vmatprep.mubr.f32.mxu0 0.0
        %2398 = vmatmul.mubr.f32.gmra.mrb[0].mxu0 %v2244
        %v2399 = vpop.f32.mrb[0].mxu0
        %v2400 = vadd.f32 0.0, %v2399
        %v2401 = vpop.f32.mrb[0].mxu0
        %2402 = vmatprep.mubr.f32.mxu0 0.0
        %2403 = vmatmul.mubr.f32.gmra.mrb[0].mxu0 %v2245
        %v2404 = vpop.f32.mrb[0].mxu0
        %v2405 = vadd.f32 0.0, %v2404
        %v2406 = vpop.f32.mrb[0].mxu0
        %2407 = vmatprep.mubr.f32.mxu0 0.0
        %2408 = vmatmul.mubr.f32.gmra.mrb[0].mxu0 %v2246
        %v2409 = vpop.f32.mrb[0].mxu0
        %v2410 = vadd.f32 0.0, %v2409
        %v2411 = vpop.f32.mrb[0].mxu0
        %2412 = vmatprep.mubr.f32.mxu0 0.0
        %2413 = vmatmul.mubr.f32.gmra.mrb[0].mxu0 %v2247
        %v2414 = vpop.f32.mrb[0].mxu0
        %v2415 = vadd.f32 0.0, %v2414
        %v2416 = vpop.f32.mrb[0].mxu0
        %2417 = vmatprep.mubr.f32.mxu0 0.0
        %2418 = vmatmul.mubr.f32.gmra.mrb[0].mxu0 %v2248
        %v2419 = vpop.f32.mrb[0].mxu0
        %v2420 = vadd.f32 0.0, %v2419
        %v2421 = vpop.f32.mrb[0].mxu0
        %2422 = vmatprep.mubr.f32.mxu0 0.0
        %2423 = vmatmul.mubr.f32.gmra.mrb[0].mxu0 %v2249
        %v2424 = vpop.f32.mrb[0].mxu0
        %v2425 = vadd.f32 0.0, %v2424
        %v2426 = vpop.f32.mrb[0].mxu0
        %2427 = vmatprep.mubr.f32.mxu0 0.0
        %2428 = vmatmul.mubr.f32.gmra.mrb[0].mxu0 %v2250
        %v2429 = vpop.f32.mrb[0].mxu0
        %v2430 = vadd.f32 0.0, %v2429
        %v2431 = vpop.f32.mrb[0].mxu0
        %2432 = vmatprep.mubr.f32.mxu0 0.0
        %2433 = vmatmul.mubr.f32.gmra.mrb[0].mxu0 %v2251
        %v2434 = vpop.f32.mrb[0].mxu0
        %v2435 = vadd.f32 0.0, %v2434
        %v2436 = vpop.f32.mrb[0].mxu0
        %2437 = vmatprep.mubr.f32.mxu0 0.0
        %2438 = vmatmul.mubr.f32.gmra.mrb[0].mxu0 %v2252
        %v2439 = vpop.f32.mrb[0].mxu0
        %v2440 = vadd.f32 0.0, %v2439
        %v2441 = vpop.f32.mrb[0].mxu0
        %2442 = vmatprep.mubr.f32.mxu0 0.0
        %2443 = vmatmul.mubr.f32.gmra.mrb[0].mxu0 %v2253
        %v2444 = vpop.f32.mrb[0].mxu0
        %v2445 = vadd.f32 0.0, %v2444
        %v2446 = vpop.f32.mrb[0].mxu0
        %2447 = vmatprep.mubr.f32.mxu0 0.0
        %2448 = vmatmul.mubr.f32.gmra.mrb[0].mxu0 %v2254
        %v2449 = vpop.f32.mrb[0].mxu0
        %v2450 = vadd.f32 0.0, %v2449
        %v2451 = vpop.f32.mrb[0].mxu0
        %2452 = vmatprep.mubr.f32.mxu0 0.0
        %2453 = vmatmul.mubr.f32.gmra.mrb[0].mxu0 %v2255
        %v2454 = vpop.f32.mrb[0].mxu0
        %v2455 = vadd.f32 0.0, %v2454
        %v2456 = vpop.f32.mrb[0].mxu0
        %2457 = vmatprep.mubr.f32.mxu0 0.0
        %2458 = vmatmul.mubr.f32.gmra.mrb[0].mxu0 %v2256
        %v2459 = vpop.f32.mrb[0].mxu0
        %v2460 = vadd.f32 0.0, %v2459
        %v2461 = vpop.f32.mrb[0].mxu0
        %2462 = vmatprep.mubr.f32.mxu0 0.0
        %2463 = vmatmul.mubr.f32.gmra.mrb[0].mxu0 %v2257
        %v2464 = vpop.f32.mrb[0].mxu0
        %v2465 = vadd.f32 0.0, %v2464
        %v2466 = vpop.f32.mrb[0].mxu0
        %2467 = vmatprep.mubr.f32.mxu0 0.0
        %2468 = vmatmul.mubr.f32.gmra.mrb[0].mxu0 %v2258
        %v2469 = vpop.f32.mrb[0].mxu0
        %v2470 = vadd.f32 0.0, %v2469
        %v2471 = vpop.f32.mrb[0].mxu0
        %2472 = vmatprep.mubr.f32.mxu0 0.0
        %2473 = vmatmul.mubr.f32.gmra.mrb[0].mxu0 %v2259
        %v2474 = vpop.f32.mrb[0].mxu0
        %v2475 = vadd.f32 0.0, %v2474
        %v2476 = vpop.f32.mrb[0].mxu0
        %2477 = vmatprep.mubr.f32.mxu0 0.0
        %2478 = vmatmul.mubr.f32.gmra.mrb[0].mxu0 %v2260
        %v2479 = vpop.f32.mrb[0].mxu0
        %v2480 = vadd.f32 0.0, %v2479
        %v2481 = vpop.f32.mrb[0].mxu0
        %2482 = vmatprep.mubr.f32.mxu0 0.0
        %2483 = vmatmul.mubr.f32.gmra.mrb[0].mxu0 %v2261
        %v2484 = vpop.f32.mrb[0].mxu0
        %v2485 = vadd.f32 0.0, %v2484
        %v2486 = vpop.f32.mrb[0].mxu0
        %2487 = vmatprep.mubr.f32.mxu0 0.0
        %2488 = vmatmul.mubr.f32.gmra.mrb[0].mxu0 %v2262
        %v2489 = vpop.f32.mrb[0].mxu0
        %v2490 = vadd.f32 0.0, %v2489
        %v2491 = vpop.f32.mrb[0].mxu0
        %2492 = vmatprep.mubr.f32.mxu0 0.0
        %2493 = vmatmul.mubr.f32.gmra.mrb[0].mxu0 %v2263
        %v2494 = vpop.f32.mrb[0].mxu0
        %v2495 = vadd.f32 0.0, %v2494
        %v2496 = vpop.f32.mrb[0].mxu0
        %2497 = vmatprep.mubr.f32.mxu0 0.0
        %2498 = vmatmul.mubr.f32.gmra.mrb[0].mxu0 %v2264
        %v2499 = vpop.f32.mrb[0].mxu0
        %v2500 = vadd.f32 0.0, %v2499
        %v2501 = vpop.f32.mrb[0].mxu0
        %2502 = vmatprep.mubr.f32.mxu0 0.0
        %2503 = vmatmul.mubr.f32.gmra.mrb[0].mxu0 %v2265
        %v2504 = vpop.f32.mrb[0].mxu0
        %v2505 = vadd.f32 0.0, %v2504
        %v2506 = vpop.f32.mrb[0].mxu0
        %2507 = vmatprep.mubr.f32.mxu0 0.0
        %2508 = vmatmul.mubr.f32.gmra.mrb[0].mxu0 %v2266
        %v2509 = vpop.f32.mrb[0].mxu0
        %v2510 = vadd.f32 0.0, %v2509
        %v2511 = vpop.f32.mrb[0].mxu0
        %2512 = vmatprep.mubr.f32.mxu0 0.0
        %2513 = vmatmul.mubr.f32.gmra.mrb[0].mxu0 %v2267
        %v2514 = vpop.f32.mrb[0].mxu0
        %v2515 = vadd.f32 0.0, %v2514
        %v2516 = vpop.f32.mrb[0].mxu0
        %2517 = vmatprep.mubr.f32.mxu0 0.0
        %2518 = vmatmul.mubr.f32.gmra.mrb[0].mxu0 %v2268
        %v2519 = vpop.f32.mrb[0].mxu0
        %v2520 = vadd.f32 0.0, %v2519
        %v2521 = vpop.f32.mrb[0].mxu0
        %2522 = vmatprep.mubr.f32.mxu0 0.0
        %2523 = vmatmul.mubr.f32.gmra.mrb[0].mxu0 %v2269
        %v2524 = vpop.f32.mrb[0].mxu0
        %v2525 = vadd.f32 0.0, %v2524
        %v2526 = vpop.f32.mrb[0].mxu0
        %2527 = vmatprep.mubr.f32.mxu0 0.0
        %2528 = vmatmul.mubr.f32.gmra.mrb[0].mxu0 %v2270
        %v2529 = vpop.f32.mrb[0].mxu0
        %v2530 = vadd.f32 0.0, %v2529
        %v2531 = vpop.f32.mrb[0].mxu0
        %2532 = vmatprep.mubr.f32.mxu0 0.0
        %2533 = vmatmul.mubr.f32.gmra.mrb[0].mxu0 %v2271
        %v2534 = vpop.f32.mrb[0].mxu0
        %v2535 = vadd.f32 0.0, %v2534
        %v2536 = vpop.f32.mrb[0].mxu0
        %2537 = vmatprep.mubr.f32.mxu0 0.0
        %2538 = vmatmul.mubr.f32.gmra.mrb[0].mxu0 %v2272
        %v2539 = vpop.f32.mrb[0].mxu0
        %v2540 = vadd.f32 0.0, %v2539
        %v2541 = vpop.f32.mrb[0].mxu0
        %2542 = vmatprep.mubr.f32.mxu0 0.0
        %2543 = vmatmul.mubr.f32.gmra.mrb[0].mxu0 %v2273
        %v2544 = vpop.f32.mrb[0].mxu0
        %v2545 = vadd.f32 0.0, %v2544
        %v2546 = vpop.f32.mrb[0].mxu0
        %2547 = vdwg.mxu0
        %v2548 = vadd.f32 %v2274, %v2390
        %v2549 = vadd.f32 %v2275, %v2395
        %v2550 = vadd.f32 %v2276, %v2400
        %v2551 = vadd.f32 %v2277, %v2405
        %v2552 = vadd.f32 %v2278, %v2410
        %v2553 = vadd.f32 %v2279, %v2415
        %v2554 = vadd.f32 %v2280, %v2420
        %v2555 = vadd.f32 %v2281, %v2425
        %v2556 = vadd.f32 %v2282, %v2430
        %v2557 = vadd.f32 %v2283, %v2435
        %v2558 = vadd.f32 %v2284, %v2440
        %v2559 = vadd.f32 %v2285, %v2445
        %v2560 = vadd.f32 %v2286, %v2450
        %v2561 = vadd.f32 %v2287, %v2455
        %v2562 = vadd.f32 %v2288, %v2460
        %v2563 = vadd.f32 %v2289, %v2465
        %v2564 = vadd.f32 %v2290, %v2470
        %v2565 = vadd.f32 %v2291, %v2475
        %v2566 = vadd.f32 %v2292, %v2480
        %v2567 = vadd.f32 %v2293, %v2485
        %v2568 = vadd.f32 %v2294, %v2490
        %v2569 = vadd.f32 %v2295, %v2495
        %v2570 = vadd.f32 %v2296, %v2500
        %v2571 = vadd.f32 %v2297, %v2505
        %v2572 = vadd.f32 %v2298, %v2510
        %v2573 = vadd.f32 %v2299, %v2515
        %v2574 = vadd.f32 %v2300, %v2520
        %v2575 = vadd.f32 %v2301, %v2525
        %v2576 = vadd.f32 %v2302, %v2530
        %v2577 = vadd.f32 %v2303, %v2535
        %v2578 = vadd.f32 %v2304, %v2540
        %v2579 = vadd.f32 %v2305, %v2545
        %2580 = vst [vmem:[#allocation3] sm:$0xff] %v2548
        %2581 = vst [vmem:[#allocation3 + $0x8] sm:$0xff] %v2549
        %2582 = vst [vmem:[#allocation3 + $0x10] sm:$0xff] %v2550
        %2583 = vst [vmem:[#allocation3 + $0x18] sm:$0xff] %v2551
        %2584 = vst [vmem:[#allocation3 + $0x20] sm:$0xff] %v2552
        %2585 = vst [vmem:[#allocation3 + $0x28] sm:$0xff] %v2553
        %2586 = vst [vmem:[#allocation3 + $0x30] sm:$0xff] %v2554
        %2587 = vst [vmem:[#allocation3 + $0x38] sm:$0xff] %v2555
        %2588 = vst [vmem:[#allocation3 + $0x40] sm:$0xff] %v2556
        %2589 = vst [vmem:[#allocation3 + $0x48] sm:$0xff] %v2557
        %2590 = vst [vmem:[#allocation3 + $0x50] sm:$0xff] %v2558
        %2591 = vst [vmem:[#allocation3 + $0x58] sm:$0xff] %v2559
        %2592 = vst [vmem:[#allocation3 + $0x60] sm:$0xff] %v2560
        %2593 = vst [vmem:[#allocation3 + $0x68] sm:$0xff] %v2561
        %2594 = vst [vmem:[#allocation3 + $0x70] sm:$0xff] %v2562
        %2595 = vst [vmem:[#allocation3 + $0x78] sm:$0xff] %v2563
        %2596 = vst [vmem:[#allocation3 + $0x80] sm:$0xff] %v2564
        %2597 = vst [vmem:[#allocation3 + $0x88] sm:$0xff] %v2565
        %2598 = vst [vmem:[#allocation3 + $0x90] sm:$0xff] %v2566
        %2599 = vst [vmem:[#allocation3 + $0x98] sm:$0xff] %v2567
        %2600 = vst [vmem:[#allocation3 + $0xa0] sm:$0xff] %v2568
        %2601 = vst [vmem:[#allocation3 + $0xa8] sm:$0xff] %v2569
        %2602 = vst [vmem:[#allocation3 + $0xb0] sm:$0xff] %v2570
        %2603 = vst [vmem:[#allocation3 + $0xb8] sm:$0xff] %v2571
        %2604 = vst [vmem:[#allocation3 + $0xc0] sm:$0xff] %v2572
        %2605 = vst [vmem:[#allocation3 + $0xc8] sm:$0xff] %v2573
        %2606 = vst [vmem:[#allocation3 + $0xd0] sm:$0xff] %v2574
        %2607 = vst [vmem:[#allocation3 + $0xd8] sm:$0xff] %v2575
        %2608 = vst [vmem:[#allocation3 + $0xe0] sm:$0xff] %v2576
        %2609 = vst [vmem:[#allocation3 + $0xe8] sm:$0xff] %v2577
        %2610 = vst [vmem:[#allocation3 + $0xf0] sm:$0xff] %v2578
        %2611 = vst [vmem:[#allocation3 + $0xf8] sm:$0xff] %v2579
        %s2612 = scalar_lea.vmem [#allocation2], 48
        %v2613 = vld [vmem:[%s2612] sm:$0xff]
        %v2614 = vld [vmem:[%s2612 + $0x8] sm:$0xff]
        %v2615 = vld [vmem:[%s2612 + $0x18] sm:$0xff]
        %v2616 = vld [vmem:[%s2612 + $0x20] sm:$0xff]
        %v2617 = vld [vmem:[%s2612 + $0x30] sm:$0xff]
        %v2618 = vld [vmem:[%s2612 + $0x38] sm:$0xff]
        %v2619 = vld [vmem:[%s2612 + $0x48] sm:$0xff]
        %v2620 = vld [vmem:[%s2612 + $0x50] sm:$0xff]
        %v2621 = vld [vmem:[%s2612 + $0x60] sm:$0xff]
        %v2622 = vld [vmem:[%s2612 + $0x68] sm:$0xff]
        %v2623 = vld [vmem:[%s2612 + $0x78] sm:$0xff]
        %v2624 = vld [vmem:[%s2612 + $0x80] sm:$0xff]
        %v2625 = vld [vmem:[%s2612 + $0x90] sm:$0xff]
        %v2626 = vld [vmem:[%s2612 + $0x98] sm:$0xff]
        %v2627 = vld [vmem:[%s2612 + $0xa8] sm:$0xff]
        %v2628 = vld [vmem:[%s2612 + $0xb0] sm:$0xff]
        %v2629 = vld [vmem:[%s2612 + $0xc0] sm:$0xff]
        %v2630 = vld [vmem:[%s2612 + $0xc8] sm:$0xff]
        %v2631 = vld [vmem:[%s2612 + $0xd8] sm:$0xff]
        %v2632 = vld [vmem:[%s2612 + $0xe0] sm:$0xff]
        %v2633 = vld [vmem:[%s2612 + $0xf0] sm:$0xff]
        %v2634 = vld [vmem:[%s2612 + $0xf8] sm:$0xff]
        %v2635 = vld [vmem:[%s2612 + $0x108] sm:$0xff]
        %v2636 = vld [vmem:[%s2612 + $0x110] sm:$0xff]
        %v2637 = vld [vmem:[%s2612 + $0x120] sm:$0xff]
        %v2638 = vld [vmem:[%s2612 + $0x128] sm:$0xff]
        %v2639 = vld [vmem:[%s2612 + $0x138] sm:$0xff]
        %v2640 = vld [vmem:[%s2612 + $0x140] sm:$0xff]
        %v2641 = vld [vmem:[%s2612 + $0x150] sm:$0xff]
        %v2642 = vld [vmem:[%s2612 + $0x158] sm:$0xff]
        %v2643 = vld [vmem:[%s2612 + $0x168] sm:$0xff]
        %v2644 = vld [vmem:[%s2612 + $0x170] sm:$0xff]
        %v2645 = vld [vmem:[#allocation3] sm:$0xff]
        %v2646 = vld [vmem:[#allocation3 + $0x8] sm:$0xff]
        %v2647 = vld [vmem:[#allocation3 + $0x10] sm:$0xff]
        %v2648 = vld [vmem:[#allocation3 + $0x18] sm:$0xff]
        %v2649 = vld [vmem:[#allocation3 + $0x20] sm:$0xff]
        %v2650 = vld [vmem:[#allocation3 + $0x28] sm:$0xff]
        %v2651 = vld [vmem:[#allocation3 + $0x30] sm:$0xff]
        %v2652 = vld [vmem:[#allocation3 + $0x38] sm:$0xff]
        %v2653 = vld [vmem:[#allocation3 + $0x40] sm:$0xff]
        %v2654 = vld [vmem:[#allocation3 + $0x48] sm:$0xff]
        %v2655 = vld [vmem:[#allocation3 + $0x50] sm:$0xff]
        %v2656 = vld [vmem:[#allocation3 + $0x58] sm:$0xff]
        %v2657 = vld [vmem:[#allocation3 + $0x60] sm:$0xff]
        %v2658 = vld [vmem:[#allocation3 + $0x68] sm:$0xff]
        %v2659 = vld [vmem:[#allocation3 + $0x70] sm:$0xff]
        %v2660 = vld [vmem:[#allocation3 + $0x78] sm:$0xff]
        %v2661 = vld [vmem:[#allocation3 + $0x80] sm:$0xff]
        %v2662 = vld [vmem:[#allocation3 + $0x88] sm:$0xff]
        %v2663 = vld [vmem:[#allocation3 + $0x90] sm:$0xff]
        %v2664 = vld [vmem:[#allocation3 + $0x98] sm:$0xff]
        %v2665 = vld [vmem:[#allocation3 + $0xa0] sm:$0xff]
        %v2666 = vld [vmem:[#allocation3 + $0xa8] sm:$0xff]
        %v2667 = vld [vmem:[#allocation3 + $0xb0] sm:$0xff]
        %v2668 = vld [vmem:[#allocation3 + $0xb8] sm:$0xff]
        %v2669 = vld [vmem:[#allocation3 + $0xc0] sm:$0xff]
        %v2670 = vld [vmem:[#allocation3 + $0xc8] sm:$0xff]
        %v2671 = vld [vmem:[#allocation3 + $0xd0] sm:$0xff]
        %v2672 = vld [vmem:[#allocation3 + $0xd8] sm:$0xff]
        %v2673 = vld [vmem:[#allocation3 + $0xe0] sm:$0xff]
        %v2674 = vld [vmem:[#allocation3 + $0xe8] sm:$0xff]
        %v2675 = vld [vmem:[#allocation3 + $0xf0] sm:$0xff]
        %v2676 = vld [vmem:[#allocation3 + $0xf8] sm:$0xff]
        %s2677 = scalar_lea.vmem [#allocation7], 768
        %v2678 = vld [vmem:[%s2677] sm:$0xff]
        %v2679 = vld [vmem:[%s2677 + $0x8] sm:$0xff]
        %v2680 = vld [vmem:[%s2677 + $0x10] sm:$0xff]
        %v2681 = vld [vmem:[%s2677 + $0x18] sm:$0xff]
        %v2682 = vld [vmem:[%s2677 + $0x20] sm:$0xff]
        %v2683 = vld [vmem:[%s2677 + $0x28] sm:$0xff]
        %v2684 = vld [vmem:[%s2677 + $0x30] sm:$0xff]
        %v2685 = vld [vmem:[%s2677 + $0x38] sm:$0xff]
        %v2686 = vld [vmem:[%s2677 + $0x40] sm:$0xff]
        %v2687 = vld [vmem:[%s2677 + $0x48] sm:$0xff]
        %v2688 = vld [vmem:[%s2677 + $0x50] sm:$0xff]
        %v2689 = vld [vmem:[%s2677 + $0x58] sm:$0xff]
        %v2690 = vld [vmem:[%s2677 + $0x60] sm:$0xff]
        %v2691 = vld [vmem:[%s2677 + $0x68] sm:$0xff]
        %v2692 = vld [vmem:[%s2677 + $0x70] sm:$0xff]
        %v2693 = vld [vmem:[%s2677 + $0x78] sm:$0xff]
        %2694 = vmatprep.subr.mxu0 0.0
        %2695 = vmatpush1.msra.mxu0 %v2678
        %2696 = vmatprep.subr.mxu0 0.0
        %2697 = vmatpush1.msra.mxu0 %v2679
        %2698 = vmatprep.subr.mxu0 0.0
        %2699 = vmatpush1.msra.mxu0 %v2680
        %2700 = vmatprep.subr.mxu0 0.0
        %2701 = vmatpush1.msra.mxu0 %v2681
        %2702 = vmatprep.subr.mxu0 0.0
        %2703 = vmatpush1.msra.mxu0 %v2682
        %2704 = vmatprep.subr.mxu0 0.0
        %2705 = vmatpush1.msra.mxu0 %v2683
        %2706 = vmatprep.subr.mxu0 0.0
        %2707 = vmatpush1.msra.mxu0 %v2684
        %2708 = vmatprep.subr.mxu0 0.0
        %2709 = vmatpush1.msra.mxu0 %v2685
        %2710 = vmatprep.subr.mxu0 0.0
        %2711 = vmatpush1.msra.mxu0 %v2686
        %2712 = vmatprep.subr.mxu0 0.0
        %2713 = vmatpush1.msra.mxu0 %v2687
        %2714 = vmatprep.subr.mxu0 0.0
        %2715 = vmatpush1.msra.mxu0 %v2688
        %2716 = vmatprep.subr.mxu0 0.0
        %2717 = vmatpush1.msra.mxu0 %v2689
        %2718 = vmatprep.subr.mxu0 0.0
        %2719 = vmatpush1.msra.mxu0 %v2690
        %2720 = vmatprep.subr.mxu0 0.0
        %2721 = vmatpush1.msra.mxu0 %v2691
        %2722 = vmatprep.subr.mxu0 0.0
        %2723 = vmatpush1.msra.mxu0 %v2692
        %2724 = vmatprep.subr.mxu0 0.0
        %2725 = vmatpush1.msra.mxu0 %v2693
        %2726 = vmatprep.subr.mxu0 0.0
        %2727 = vmatpush1.msra.mxu0 0.0
        %2728 = vmatprep.subr.mxu0 0.0
        %2729 = vmatpush1.msra.mxu0 0.0
        %2730 = vmatprep.subr.mxu0 0.0
        %2731 = vmatpush1.msra.mxu0 0.0
        %2732 = vmatprep.subr.mxu0 0.0
        %2733 = vmatpush1.msra.mxu0 0.0
        %2734 = vmatprep.subr.mxu0 0.0
        %2735 = vmatpush1.msra.mxu0 0.0
        %2736 = vmatprep.subr.mxu0 0.0
        %2737 = vmatpush1.msra.mxu0 0.0
        %2738 = vmatprep.subr.mxu0 0.0
        %2739 = vmatpush1.msra.mxu0 0.0
        %2740 = vmatprep.subr.mxu0 0.0
        %2741 = vmatpush1.msra.mxu0 0.0
        %2742 = vmatprep.subr.mxu0 0.0
        %2743 = vmatpush1.msra.mxu0 0.0
        %2744 = vmatprep.subr.mxu0 0.0
        %2745 = vmatpush1.msra.mxu0 0.0
        %2746 = vmatprep.subr.mxu0 0.0
        %2747 = vmatpush1.msra.mxu0 0.0
        %2748 = vmatprep.subr.mxu0 0.0
        %2749 = vmatpush1.msra.mxu0 0.0
        %2750 = vmatprep.subr.mxu0 0.0
        %2751 = vmatpush1.msra.mxu0 0.0
        %2752 = vmatprep.subr.mxu0 0.0
        %2753 = vmatpush1.msra.mxu0 0.0
        %2754 = vmatprep.subr.mxu0 0.0
        %2755 = vmatpush1.msra.mxu0 0.0
        %2756 = vmatprep.subr.mxu0 0.0
        %2757 = vmatpush1.msra.mxu0 0.0
        %2758 = vmatprep.mubr.f32.mxu0 0.0
        %2759 = vmatmul.mubr.f32.gmra.mrb[0].mxu0 %v2613
        %v2760 = vpop.f32.mrb[0].mxu0
        %v2761 = vadd.f32 0.0, %v2760
        %v2762 = vpop.f32.mrb[0].mxu0
        %2763 = vmatprep.mubr.f32.mxu0 0.0
        %2764 = vmatmul.mubr.f32.gmra.mrb[0].mxu0 %v2614
        %v2765 = vpop.f32.mrb[0].mxu0
        %v2766 = vadd.f32 0.0, %v2765
        %v2767 = vpop.f32.mrb[0].mxu0
        %2768 = vmatprep.mubr.f32.mxu0 0.0
        %2769 = vmatmul.mubr.f32.gmra.mrb[0].mxu0 %v2615
        %v2770 = vpop.f32.mrb[0].mxu0
        %v2771 = vadd.f32 0.0, %v2770
        %v2772 = vpop.f32.mrb[0].mxu0
        %2773 = vmatprep.mubr.f32.mxu0 0.0
        %2774 = vmatmul.mubr.f32.gmra.mrb[0].mxu0 %v2616
        %v2775 = vpop.f32.mrb[0].mxu0
        %v2776 = vadd.f32 0.0, %v2775
        %v2777 = vpop.f32.mrb[0].mxu0
        %2778 = vmatprep.mubr.f32.mxu0 0.0
        %2779 = vmatmul.mubr.f32.gmra.mrb[0].mxu0 %v2617
        %v2780 = vpop.f32.mrb[0].mxu0
        %v2781 = vadd.f32 0.0, %v2780
        %v2782 = vpop.f32.mrb[0].mxu0
        %2783 = vmatprep.mubr.f32.mxu0 0.0
        %2784 = vmatmul.mubr.f32.gmra.mrb[0].mxu0 %v2618
        %v2785 = vpop.f32.mrb[0].mxu0
        %v2786 = vadd.f32 0.0, %v2785
        %v2787 = vpop.f32.mrb[0].mxu0
        %2788 = vmatprep.mubr.f32.mxu0 0.0
        %2789 = vmatmul.mubr.f32.gmra.mrb[0].mxu0 %v2619
        %v2790 = vpop.f32.mrb[0].mxu0
        %v2791 = vadd.f32 0.0, %v2790
        %v2792 = vpop.f32.mrb[0].mxu0
        %2793 = vmatprep.mubr.f32.mxu0 0.0
        %2794 = vmatmul.mubr.f32.gmra.mrb[0].mxu0 %v2620
        %v2795 = vpop.f32.mrb[0].mxu0
        %v2796 = vadd.f32 0.0, %v2795
        %v2797 = vpop.f32.mrb[0].mxu0
        %2798 = vmatprep.mubr.f32.mxu0 0.0
        %2799 = vmatmul.mubr.f32.gmra.mrb[0].mxu0 %v2621
        %v2800 = vpop.f32.mrb[0].mxu0
        %v2801 = vadd.f32 0.0, %v2800
        %v2802 = vpop.f32.mrb[0].mxu0
        %2803 = vmatprep.mubr.f32.mxu0 0.0
        %2804 = vmatmul.mubr.f32.gmra.mrb[0].mxu0 %v2622
        %v2805 = vpop.f32.mrb[0].mxu0
        %v2806 = vadd.f32 0.0, %v2805
        %v2807 = vpop.f32.mrb[0].mxu0
        %2808 = vmatprep.mubr.f32.mxu0 0.0
        %2809 = vmatmul.mubr.f32.gmra.mrb[0].mxu0 %v2623
        %v2810 = vpop.f32.mrb[0].mxu0
        %v2811 = vadd.f32 0.0, %v2810
        %v2812 = vpop.f32.mrb[0].mxu0
        %2813 = vmatprep.mubr.f32.mxu0 0.0
        %2814 = vmatmul.mubr.f32.gmra.mrb[0].mxu0 %v2624
        %v2815 = vpop.f32.mrb[0].mxu0
        %v2816 = vadd.f32 0.0, %v2815
        %v2817 = vpop.f32.mrb[0].mxu0
        %2818 = vmatprep.mubr.f32.mxu0 0.0
        %2819 = vmatmul.mubr.f32.gmra.mrb[0].mxu0 %v2625
        %v2820 = vpop.f32.mrb[0].mxu0
        %v2821 = vadd.f32 0.0, %v2820
        %v2822 = vpop.f32.mrb[0].mxu0
        %2823 = vmatprep.mubr.f32.mxu0 0.0
        %2824 = vmatmul.mubr.f32.gmra.mrb[0].mxu0 %v2626
        %v2825 = vpop.f32.mrb[0].mxu0
        %v2826 = vadd.f32 0.0, %v2825
        %v2827 = vpop.f32.mrb[0].mxu0
        %2828 = vmatprep.mubr.f32.mxu0 0.0
        %2829 = vmatmul.mubr.f32.gmra.mrb[0].mxu0 %v2627
        %v2830 = vpop.f32.mrb[0].mxu0
        %v2831 = vadd.f32 0.0, %v2830
        %v2832 = vpop.f32.mrb[0].mxu0
        %2833 = vmatprep.mubr.f32.mxu0 0.0
        %2834 = vmatmul.mubr.f32.gmra.mrb[0].mxu0 %v2628
        %v2835 = vpop.f32.mrb[0].mxu0
        %v2836 = vadd.f32 0.0, %v2835
        %v2837 = vpop.f32.mrb[0].mxu0
        %2838 = vmatprep.mubr.f32.mxu0 0.0
        %2839 = vmatmul.mubr.f32.gmra.mrb[0].mxu0 %v2629
        %v2840 = vpop.f32.mrb[0].mxu0
        %v2841 = vadd.f32 0.0, %v2840
        %v2842 = vpop.f32.mrb[0].mxu0
        %2843 = vmatprep.mubr.f32.mxu0 0.0
        %2844 = vmatmul.mubr.f32.gmra.mrb[0].mxu0 %v2630
        %v2845 = vpop.f32.mrb[0].mxu0
        %v2846 = vadd.f32 0.0, %v2845
        %v2847 = vpop.f32.mrb[0].mxu0
        %2848 = vmatprep.mubr.f32.mxu0 0.0
        %2849 = vmatmul.mubr.f32.gmra.mrb[0].mxu0 %v2631
        %v2850 = vpop.f32.mrb[0].mxu0
        %v2851 = vadd.f32 0.0, %v2850
        %v2852 = vpop.f32.mrb[0].mxu0
        %2853 = vmatprep.mubr.f32.mxu0 0.0
        %2854 = vmatmul.mubr.f32.gmra.mrb[0].mxu0 %v2632
        %v2855 = vpop.f32.mrb[0].mxu0
        %v2856 = vadd.f32 0.0, %v2855
        %v2857 = vpop.f32.mrb[0].mxu0
        %2858 = vmatprep.mubr.f32.mxu0 0.0
        %2859 = vmatmul.mubr.f32.gmra.mrb[0].mxu0 %v2633
        %v2860 = vpop.f32.mrb[0].mxu0
        %v2861 = vadd.f32 0.0, %v2860
        %v2862 = vpop.f32.mrb[0].mxu0
        %2863 = vmatprep.mubr.f32.mxu0 0.0
        %2864 = vmatmul.mubr.f32.gmra.mrb[0].mxu0 %v2634
        %v2865 = vpop.f32.mrb[0].mxu0
        %v2866 = vadd.f32 0.0, %v2865
        %v2867 = vpop.f32.mrb[0].mxu0
        %2868 = vmatprep.mubr.f32.mxu0 0.0
        %2869 = vmatmul.mubr.f32.gmra.mrb[0].mxu0 %v2635
        %v2870 = vpop.f32.mrb[0].mxu0
        %v2871 = vadd.f32 0.0, %v2870
        %v2872 = vpop.f32.mrb[0].mxu0
        %2873 = vmatprep.mubr.f32.mxu0 0.0
        %2874 = vmatmul.mubr.f32.gmra.mrb[0].mxu0 %v2636
        %v2875 = vpop.f32.mrb[0].mxu0
        %v2876 = vadd.f32 0.0, %v2875
        %v2877 = vpop.f32.mrb[0].mxu0
        %2878 = vmatprep.mubr.f32.mxu0 0.0
        %2879 = vmatmul.mubr.f32.gmra.mrb[0].mxu0 %v2637
        %v2880 = vpop.f32.mrb[0].mxu0
        %v2881 = vadd.f32 0.0, %v2880
        %v2882 = vpop.f32.mrb[0].mxu0
        %2883 = vmatprep.mubr.f32.mxu0 0.0
        %2884 = vmatmul.mubr.f32.gmra.mrb[0].mxu0 %v2638
        %v2885 = vpop.f32.mrb[0].mxu0
        %v2886 = vadd.f32 0.0, %v2885
        %v2887 = vpop.f32.mrb[0].mxu0
        %2888 = vmatprep.mubr.f32.mxu0 0.0
        %2889 = vmatmul.mubr.f32.gmra.mrb[0].mxu0 %v2639
        %v2890 = vpop.f32.mrb[0].mxu0
        %v2891 = vadd.f32 0.0, %v2890
        %v2892 = vpop.f32.mrb[0].mxu0
        %2893 = vmatprep.mubr.f32.mxu0 0.0
        %2894 = vmatmul.mubr.f32.gmra.mrb[0].mxu0 %v2640
        %v2895 = vpop.f32.mrb[0].mxu0
        %v2896 = vadd.f32 0.0, %v2895
        %v2897 = vpop.f32.mrb[0].mxu0
        %2898 = vmatprep.mubr.f32.mxu0 0.0
        %2899 = vmatmul.mubr.f32.gmra.mrb[0].mxu0 %v2641
        %v2900 = vpop.f32.mrb[0].mxu0
        %v2901 = vadd.f32 0.0, %v2900
        %v2902 = vpop.f32.mrb[0].mxu0
        %2903 = vmatprep.mubr.f32.mxu0 0.0
        %2904 = vmatmul.mubr.f32.gmra.mrb[0].mxu0 %v2642
        %v2905 = vpop.f32.mrb[0].mxu0
        %v2906 = vadd.f32 0.0, %v2905
        %v2907 = vpop.f32.mrb[0].mxu0
        %2908 = vmatprep.mubr.f32.mxu0 0.0
        %2909 = vmatmul.mubr.f32.gmra.mrb[0].mxu0 %v2643
        %v2910 = vpop.f32.mrb[0].mxu0
        %v2911 = vadd.f32 0.0, %v2910
        %v2912 = vpop.f32.mrb[0].mxu0
        %2913 = vmatprep.mubr.f32.mxu0 0.0
        %2914 = vmatmul.mubr.f32.gmra.mrb[0].mxu0 %v2644
        %v2915 = vpop.f32.mrb[0].mxu0
        %v2916 = vadd.f32 0.0, %v2915
        %v2917 = vpop.f32.mrb[0].mxu0
        %2918 = vdwg.mxu0
        %v2919 = vadd.f32 %v2645, %v2761
        %v2920 = vadd.f32 %v2646, %v2766
        %v2921 = vadd.f32 %v2647, %v2771
        %v2922 = vadd.f32 %v2648, %v2776
        %v2923 = vadd.f32 %v2649, %v2781
        %v2924 = vadd.f32 %v2650, %v2786
        %v2925 = vadd.f32 %v2651, %v2791
        %v2926 = vadd.f32 %v2652, %v2796
        %v2927 = vadd.f32 %v2653, %v2801
        %v2928 = vadd.f32 %v2654, %v2806
        %v2929 = vadd.f32 %v2655, %v2811
        %v2930 = vadd.f32 %v2656, %v2816
        %v2931 = vadd.f32 %v2657, %v2821
        %v2932 = vadd.f32 %v2658, %v2826
        %v2933 = vadd.f32 %v2659, %v2831
        %v2934 = vadd.f32 %v2660, %v2836
        %v2935 = vadd.f32 %v2661, %v2841
        %v2936 = vadd.f32 %v2662, %v2846
        %v2937 = vadd.f32 %v2663, %v2851
        %v2938 = vadd.f32 %v2664, %v2856
        %v2939 = vadd.f32 %v2665, %v2861
        %v2940 = vadd.f32 %v2666, %v2866
        %v2941 = vadd.f32 %v2667, %v2871
        %v2942 = vadd.f32 %v2668, %v2876
        %v2943 = vadd.f32 %v2669, %v2881
        %v2944 = vadd.f32 %v2670, %v2886
        %v2945 = vadd.f32 %v2671, %v2891
        %v2946 = vadd.f32 %v2672, %v2896
        %v2947 = vadd.f32 %v2673, %v2901
        %v2948 = vadd.f32 %v2674, %v2906
        %v2949 = vadd.f32 %v2675, %v2911
        %v2950 = vadd.f32 %v2676, %v2916
        %2951 = vst [vmem:[#allocation3] sm:$0xff] %v2919
        %2952 = vst [vmem:[#allocation3 + $0x8] sm:$0xff] %v2920
        %2953 = vst [vmem:[#allocation3 + $0x10] sm:$0xff] %v2921
        %2954 = vst [vmem:[#allocation3 + $0x18] sm:$0xff] %v2922
        %2955 = vst [vmem:[#allocation3 + $0x20] sm:$0xff] %v2923
        %2956 = vst [vmem:[#allocation3 + $0x28] sm:$0xff] %v2924
        %2957 = vst [vmem:[#allocation3 + $0x30] sm:$0xff] %v2925
        %2958 = vst [vmem:[#allocation3 + $0x38] sm:$0xff] %v2926
        %2959 = vst [vmem:[#allocation3 + $0x40] sm:$0xff] %v2927
        %2960 = vst [vmem:[#allocation3 + $0x48] sm:$0xff] %v2928
        %2961 = vst [vmem:[#allocation3 + $0x50] sm:$0xff] %v2929
        %2962 = vst [vmem:[#allocation3 + $0x58] sm:$0xff] %v2930
        %2963 = vst [vmem:[#allocation3 + $0x60] sm:$0xff] %v2931
        %2964 = vst [vmem:[#allocation3 + $0x68] sm:$0xff] %v2932
        %2965 = vst [vmem:[#allocation3 + $0x70] sm:$0xff] %v2933
        %2966 = vst [vmem:[#allocation3 + $0x78] sm:$0xff] %v2934
        %2967 = vst [vmem:[#allocation3 + $0x80] sm:$0xff] %v2935
        %2968 = vst [vmem:[#allocation3 + $0x88] sm:$0xff] %v2936
        %2969 = vst [vmem:[#allocation3 + $0x90] sm:$0xff] %v2937
        %2970 = vst [vmem:[#allocation3 + $0x98] sm:$0xff] %v2938
        %2971 = vst [vmem:[#allocation3 + $0xa0] sm:$0xff] %v2939
        %2972 = vst [vmem:[#allocation3 + $0xa8] sm:$0xff] %v2940
        %2973 = vst [vmem:[#allocation3 + $0xb0] sm:$0xff] %v2941
        %2974 = vst [vmem:[#allocation3 + $0xb8] sm:$0xff] %v2942
        %2975 = vst [vmem:[#allocation3 + $0xc0] sm:$0xff] %v2943
        %2976 = vst [vmem:[#allocation3 + $0xc8] sm:$0xff] %v2944
        %2977 = vst [vmem:[#allocation3 + $0xd0] sm:$0xff] %v2945
        %2978 = vst [vmem:[#allocation3 + $0xd8] sm:$0xff] %v2946
        %2979 = vst [vmem:[#allocation3 + $0xe0] sm:$0xff] %v2947
        %2980 = vst [vmem:[#allocation3 + $0xe8] sm:$0xff] %v2948
        %2981 = vst [vmem:[#allocation3 + $0xf0] sm:$0xff] %v2949
        %2982 = vst [vmem:[#allocation3 + $0xf8] sm:$0xff] %v2950
        %v2983 = vld [vmem:[%s2612 + $0x1] sm:$0xff]
        %v2984 = vld [vmem:[%s2612 + $0x9] sm:$0xff]
        %v2985 = vld [vmem:[%s2612 + $0x19] sm:$0xff]
        %v2986 = vld [vmem:[%s2612 + $0x21] sm:$0xff]
        %v2987 = vld [vmem:[%s2612 + $0x31] sm:$0xff]
        %v2988 = vld [vmem:[%s2612 + $0x39] sm:$0xff]
        %v2989 = vld [vmem:[%s2612 + $0x49] sm:$0xff]
        %v2990 = vld [vmem:[%s2612 + $0x51] sm:$0xff]
        %v2991 = vld [vmem:[%s2612 + $0x61] sm:$0xff]
        %v2992 = vld [vmem:[%s2612 + $0x69] sm:$0xff]
        %v2993 = vld [vmem:[%s2612 + $0x79] sm:$0xff]
        %v2994 = vld [vmem:[%s2612 + $0x81] sm:$0xff]
        %v2995 = vld [vmem:[%s2612 + $0x91] sm:$0xff]
        %v2996 = vld [vmem:[%s2612 + $0x99] sm:$0xff]
        %v2997 = vld [vmem:[%s2612 + $0xa9] sm:$0xff]
        %v2998 = vld [vmem:[%s2612 + $0xb1] sm:$0xff]
        %v2999 = vld [vmem:[%s2612 + $0xc1] sm:$0xff]
        %v3000 = vld [vmem:[%s2612 + $0xc9] sm:$0xff]
        %v3001 = vld [vmem:[%s2612 + $0xd9] sm:$0xff]
        %v3002 = vld [vmem:[%s2612 + $0xe1] sm:$0xff]
        %v3003 = vld [vmem:[%s2612 + $0xf1] sm:$0xff]
        %v3004 = vld [vmem:[%s2612 + $0xf9] sm:$0xff]
        %v3005 = vld [vmem:[%s2612 + $0x109] sm:$0xff]
        %v3006 = vld [vmem:[%s2612 + $0x111] sm:$0xff]
        %v3007 = vld [vmem:[%s2612 + $0x121] sm:$0xff]
        %v3008 = vld [vmem:[%s2612 + $0x129] sm:$0xff]
        %v3009 = vld [vmem:[%s2612 + $0x139] sm:$0xff]
        %v3010 = vld [vmem:[%s2612 + $0x141] sm:$0xff]
        %v3011 = vld [vmem:[%s2612 + $0x151] sm:$0xff]
        %v3012 = vld [vmem:[%s2612 + $0x159] sm:$0xff]
        %v3013 = vld [vmem:[%s2612 + $0x169] sm:$0xff]
        %v3014 = vld [vmem:[%s2612 + $0x171] sm:$0xff]
        %v3015 = vld [vmem:[#allocation3] sm:$0xff]
        %v3016 = vld [vmem:[#allocation3 + $0x8] sm:$0xff]
        %v3017 = vld [vmem:[#allocation3 + $0x10] sm:$0xff]
        %v3018 = vld [vmem:[#allocation3 + $0x18] sm:$0xff]
        %v3019 = vld [vmem:[#allocation3 + $0x20] sm:$0xff]
        %v3020 = vld [vmem:[#allocation3 + $0x28] sm:$0xff]
        %v3021 = vld [vmem:[#allocation3 + $0x30] sm:$0xff]
        %v3022 = vld [vmem:[#allocation3 + $0x38] sm:$0xff]
        %v3023 = vld [vmem:[#allocation3 + $0x40] sm:$0xff]
        %v3024 = vld [vmem:[#allocation3 + $0x48] sm:$0xff]
        %v3025 = vld [vmem:[#allocation3 + $0x50] sm:$0xff]
        %v3026 = vld [vmem:[#allocation3 + $0x58] sm:$0xff]
        %v3027 = vld [vmem:[#allocation3 + $0x60] sm:$0xff]
        %v3028 = vld [vmem:[#allocation3 + $0x68] sm:$0xff]
        %v3029 = vld [vmem:[#allocation3 + $0x70] sm:$0xff]
        %v3030 = vld [vmem:[#allocation3 + $0x78] sm:$0xff]
        %v3031 = vld [vmem:[#allocation3 + $0x80] sm:$0xff]
        %v3032 = vld [vmem:[#allocation3 + $0x88] sm:$0xff]
        %v3033 = vld [vmem:[#allocation3 + $0x90] sm:$0xff]
        %v3034 = vld [vmem:[#allocation3 + $0x98] sm:$0xff]
        %v3035 = vld [vmem:[#allocation3 + $0xa0] sm:$0xff]
        %v3036 = vld [vmem:[#allocation3 + $0xa8] sm:$0xff]
        %v3037 = vld [vmem:[#allocation3 + $0xb0] sm:$0xff]
        %v3038 = vld [vmem:[#allocation3 + $0xb8] sm:$0xff]
        %v3039 = vld [vmem:[#allocation3 + $0xc0] sm:$0xff]
        %v3040 = vld [vmem:[#allocation3 + $0xc8] sm:$0xff]
        %v3041 = vld [vmem:[#allocation3 + $0xd0] sm:$0xff]
        %v3042 = vld [vmem:[#allocation3 + $0xd8] sm:$0xff]
        %v3043 = vld [vmem:[#allocation3 + $0xe0] sm:$0xff]
        %v3044 = vld [vmem:[#allocation3 + $0xe8] sm:$0xff]
        %v3045 = vld [vmem:[#allocation3 + $0xf0] sm:$0xff]
        %v3046 = vld [vmem:[#allocation3 + $0xf8] sm:$0xff]
        %s3047 = scalar_lea.vmem [#allocation7], 896
        %v3048 = vld [vmem:[%s3047] sm:$0xff]
        %v3049 = vld [vmem:[%s3047 + $0x8] sm:$0xff]
        %v3050 = vld [vmem:[%s3047 + $0x10] sm:$0xff]
        %v3051 = vld [vmem:[%s3047 + $0x18] sm:$0xff]
        %v3052 = vld [vmem:[%s3047 + $0x20] sm:$0xff]
        %v3053 = vld [vmem:[%s3047 + $0x28] sm:$0xff]
        %v3054 = vld [vmem:[%s3047 + $0x30] sm:$0xff]
        %v3055 = vld [vmem:[%s3047 + $0x38] sm:$0xff]
        %v3056 = vld [vmem:[%s3047 + $0x40] sm:$0xff]
        %v3057 = vld [vmem:[%s3047 + $0x48] sm:$0xff]
        %v3058 = vld [vmem:[%s3047 + $0x50] sm:$0xff]
        %v3059 = vld [vmem:[%s3047 + $0x58] sm:$0xff]
        %v3060 = vld [vmem:[%s3047 + $0x60] sm:$0xff]
        %v3061 = vld [vmem:[%s3047 + $0x68] sm:$0xff]
        %v3062 = vld [vmem:[%s3047 + $0x70] sm:$0xff]
        %v3063 = vld [vmem:[%s3047 + $0x78] sm:$0xff]
        %3064 = vmatprep.subr.mxu0 0.0
        %3065 = vmatpush1.msra.mxu0 %v3048
        %3066 = vmatprep.subr.mxu0 0.0
        %3067 = vmatpush1.msra.mxu0 %v3049
        %3068 = vmatprep.subr.mxu0 0.0
        %3069 = vmatpush1.msra.mxu0 %v3050
        %3070 = vmatprep.subr.mxu0 0.0
        %3071 = vmatpush1.msra.mxu0 %v3051
        %3072 = vmatprep.subr.mxu0 0.0
        %3073 = vmatpush1.msra.mxu0 %v3052
        %3074 = vmatprep.subr.mxu0 0.0
        %3075 = vmatpush1.msra.mxu0 %v3053
        %3076 = vmatprep.subr.mxu0 0.0
        %3077 = vmatpush1.msra.mxu0 %v3054
        %3078 = vmatprep.subr.mxu0 0.0
        %3079 = vmatpush1.msra.mxu0 %v3055
        %3080 = vmatprep.subr.mxu0 0.0
        %3081 = vmatpush1.msra.mxu0 %v3056
        %3082 = vmatprep.subr.mxu0 0.0
        %3083 = vmatpush1.msra.mxu0 %v3057
        %3084 = vmatprep.subr.mxu0 0.0
        %3085 = vmatpush1.msra.mxu0 %v3058
        %3086 = vmatprep.subr.mxu0 0.0
        %3087 = vmatpush1.msra.mxu0 %v3059
        %3088 = vmatprep.subr.mxu0 0.0
        %3089 = vmatpush1.msra.mxu0 %v3060
        %3090 = vmatprep.subr.mxu0 0.0
        %3091 = vmatpush1.msra.mxu0 %v3061
        %3092 = vmatprep.subr.mxu0 0.0
        %3093 = vmatpush1.msra.mxu0 %v3062
        %3094 = vmatprep.subr.mxu0 0.0
        %3095 = vmatpush1.msra.mxu0 %v3063
        %3096 = vmatprep.subr.mxu0 0.0
        %3097 = vmatpush1.msra.mxu0 0.0
        %3098 = vmatprep.subr.mxu0 0.0
        %3099 = vmatpush1.msra.mxu0 0.0
        %3100 = vmatprep.subr.mxu0 0.0
        %3101 = vmatpush1.msra.mxu0 0.0
        %3102 = vmatprep.subr.mxu0 0.0
        %3103 = vmatpush1.msra.mxu0 0.0
        %3104 = vmatprep.subr.mxu0 0.0
        %3105 = vmatpush1.msra.mxu0 0.0
        %3106 = vmatprep.subr.mxu0 0.0
        %3107 = vmatpush1.msra.mxu0 0.0
        %3108 = vmatprep.subr.mxu0 0.0
        %3109 = vmatpush1.msra.mxu0 0.0
        %3110 = vmatprep.subr.mxu0 0.0
        %3111 = vmatpush1.msra.mxu0 0.0
        %3112 = vmatprep.subr.mxu0 0.0
        %3113 = vmatpush1.msra.mxu0 0.0
        %3114 = vmatprep.subr.mxu0 0.0
        %3115 = vmatpush1.msra.mxu0 0.0
        %3116 = vmatprep.subr.mxu0 0.0
        %3117 = vmatpush1.msra.mxu0 0.0
        %3118 = vmatprep.subr.mxu0 0.0
        %3119 = vmatpush1.msra.mxu0 0.0
        %3120 = vmatprep.subr.mxu0 0.0
        %3121 = vmatpush1.msra.mxu0 0.0
        %3122 = vmatprep.subr.mxu0 0.0
        %3123 = vmatpush1.msra.mxu0 0.0
        %3124 = vmatprep.subr.mxu0 0.0
        %3125 = vmatpush1.msra.mxu0 0.0
        %3126 = vmatprep.subr.mxu0 0.0
        %3127 = vmatpush1.msra.mxu0 0.0
        %3128 = vmatprep.mubr.f32.mxu0 0.0
        %3129 = vmatmul.mubr.f32.gmra.mrb[0].mxu0 %v2983
        %v3130 = vpop.f32.mrb[0].mxu0
        %v3131 = vadd.f32 0.0, %v3130
        %v3132 = vpop.f32.mrb[0].mxu0
        %3133 = vmatprep.mubr.f32.mxu0 0.0
        %3134 = vmatmul.mubr.f32.gmra.mrb[0].mxu0 %v2984
        %v3135 = vpop.f32.mrb[0].mxu0
        %v3136 = vadd.f32 0.0, %v3135
        %v3137 = vpop.f32.mrb[0].mxu0
        %3138 = vmatprep.mubr.f32.mxu0 0.0
        %3139 = vmatmul.mubr.f32.gmra.mrb[0].mxu0 %v2985
        %v3140 = vpop.f32.mrb[0].mxu0
        %v3141 = vadd.f32 0.0, %v3140
        %v3142 = vpop.f32.mrb[0].mxu0
        %3143 = vmatprep.mubr.f32.mxu0 0.0
        %3144 = vmatmul.mubr.f32.gmra.mrb[0].mxu0 %v2986
        %v3145 = vpop.f32.mrb[0].mxu0
        %v3146 = vadd.f32 0.0, %v3145
        %v3147 = vpop.f32.mrb[0].mxu0
        %3148 = vmatprep.mubr.f32.mxu0 0.0
        %3149 = vmatmul.mubr.f32.gmra.mrb[0].mxu0 %v2987
        %v3150 = vpop.f32.mrb[0].mxu0
        %v3151 = vadd.f32 0.0, %v3150
        %v3152 = vpop.f32.mrb[0].mxu0
        %3153 = vmatprep.mubr.f32.mxu0 0.0
        %3154 = vmatmul.mubr.f32.gmra.mrb[0].mxu0 %v2988
        %v3155 = vpop.f32.mrb[0].mxu0
        %v3156 = vadd.f32 0.0, %v3155
        %v3157 = vpop.f32.mrb[0].mxu0
        %3158 = vmatprep.mubr.f32.mxu0 0.0
        %3159 = vmatmul.mubr.f32.gmra.mrb[0].mxu0 %v2989
        %v3160 = vpop.f32.mrb[0].mxu0
        %v3161 = vadd.f32 0.0, %v3160
        %v3162 = vpop.f32.mrb[0].mxu0
        %3163 = vmatprep.mubr.f32.mxu0 0.0
        %3164 = vmatmul.mubr.f32.gmra.mrb[0].mxu0 %v2990
        %v3165 = vpop.f32.mrb[0].mxu0
        %v3166 = vadd.f32 0.0, %v3165
        %v3167 = vpop.f32.mrb[0].mxu0
        %3168 = vmatprep.mubr.f32.mxu0 0.0
        %3169 = vmatmul.mubr.f32.gmra.mrb[0].mxu0 %v2991
        %v3170 = vpop.f32.mrb[0].mxu0
        %v3171 = vadd.f32 0.0, %v3170
        %v3172 = vpop.f32.mrb[0].mxu0
        %3173 = vmatprep.mubr.f32.mxu0 0.0
        %3174 = vmatmul.mubr.f32.gmra.mrb[0].mxu0 %v2992
        %v3175 = vpop.f32.mrb[0].mxu0
        %v3176 = vadd.f32 0.0, %v3175
        %v3177 = vpop.f32.mrb[0].mxu0
        %3178 = vmatprep.mubr.f32.mxu0 0.0
        %3179 = vmatmul.mubr.f32.gmra.mrb[0].mxu0 %v2993
        %v3180 = vpop.f32.mrb[0].mxu0
        %v3181 = vadd.f32 0.0, %v3180
        %v3182 = vpop.f32.mrb[0].mxu0
        %3183 = vmatprep.mubr.f32.mxu0 0.0
        %3184 = vmatmul.mubr.f32.gmra.mrb[0].mxu0 %v2994
        %v3185 = vpop.f32.mrb[0].mxu0
        %v3186 = vadd.f32 0.0, %v3185
        %v3187 = vpop.f32.mrb[0].mxu0
        %3188 = vmatprep.mubr.f32.mxu0 0.0
        %3189 = vmatmul.mubr.f32.gmra.mrb[0].mxu0 %v2995
        %v3190 = vpop.f32.mrb[0].mxu0
        %v3191 = vadd.f32 0.0, %v3190
        %v3192 = vpop.f32.mrb[0].mxu0
        %3193 = vmatprep.mubr.f32.mxu0 0.0
        %3194 = vmatmul.mubr.f32.gmra.mrb[0].mxu0 %v2996
        %v3195 = vpop.f32.mrb[0].mxu0
        %v3196 = vadd.f32 0.0, %v3195
        %v3197 = vpop.f32.mrb[0].mxu0
        %3198 = vmatprep.mubr.f32.mxu0 0.0
        %3199 = vmatmul.mubr.f32.gmra.mrb[0].mxu0 %v2997
        %v3200 = vpop.f32.mrb[0].mxu0
        %v3201 = vadd.f32 0.0, %v3200
        %v3202 = vpop.f32.mrb[0].mxu0
        %3203 = vmatprep.mubr.f32.mxu0 0.0
        %3204 = vmatmul.mubr.f32.gmra.mrb[0].mxu0 %v2998
        %v3205 = vpop.f32.mrb[0].mxu0
        %v3206 = vadd.f32 0.0, %v3205
        %v3207 = vpop.f32.mrb[0].mxu0
        %3208 = vmatprep.mubr.f32.mxu0 0.0
        %3209 = vmatmul.mubr.f32.gmra.mrb[0].mxu0 %v2999
        %v3210 = vpop.f32.mrb[0].mxu0
        %v3211 = vadd.f32 0.0, %v3210
        %v3212 = vpop.f32.mrb[0].mxu0
        %3213 = vmatprep.mubr.f32.mxu0 0.0
        %3214 = vmatmul.mubr.f32.gmra.mrb[0].mxu0 %v3000
        %v3215 = vpop.f32.mrb[0].mxu0
        %v3216 = vadd.f32 0.0, %v3215
        %v3217 = vpop.f32.mrb[0].mxu0
        %3218 = vmatprep.mubr.f32.mxu0 0.0
        %3219 = vmatmul.mubr.f32.gmra.mrb[0].mxu0 %v3001
        %v3220 = vpop.f32.mrb[0].mxu0
        %v3221 = vadd.f32 0.0, %v3220
        %v3222 = vpop.f32.mrb[0].mxu0
        %3223 = vmatprep.mubr.f32.mxu0 0.0
        %3224 = vmatmul.mubr.f32.gmra.mrb[0].mxu0 %v3002
        %v3225 = vpop.f32.mrb[0].mxu0
        %v3226 = vadd.f32 0.0, %v3225
        %v3227 = vpop.f32.mrb[0].mxu0
        %3228 = vmatprep.mubr.f32.mxu0 0.0
        %3229 = vmatmul.mubr.f32.gmra.mrb[0].mxu0 %v3003
        %v3230 = vpop.f32.mrb[0].mxu0
        %v3231 = vadd.f32 0.0, %v3230
        %v3232 = vpop.f32.mrb[0].mxu0
        %3233 = vmatprep.mubr.f32.mxu0 0.0
        %3234 = vmatmul.mubr.f32.gmra.mrb[0].mxu0 %v3004
        %v3235 = vpop.f32.mrb[0].mxu0
        %v3236 = vadd.f32 0.0, %v3235
        %v3237 = vpop.f32.mrb[0].mxu0
        %3238 = vmatprep.mubr.f32.mxu0 0.0
        %3239 = vmatmul.mubr.f32.gmra.mrb[0].mxu0 %v3005
        %v3240 = vpop.f32.mrb[0].mxu0
        %v3241 = vadd.f32 0.0, %v3240
        %v3242 = vpop.f32.mrb[0].mxu0
        %3243 = vmatprep.mubr.f32.mxu0 0.0
        %3244 = vmatmul.mubr.f32.gmra.mrb[0].mxu0 %v3006
        %v3245 = vpop.f32.mrb[0].mxu0
        %v3246 = vadd.f32 0.0, %v3245
        %v3247 = vpop.f32.mrb[0].mxu0
        %3248 = vmatprep.mubr.f32.mxu0 0.0
        %3249 = vmatmul.mubr.f32.gmra.mrb[0].mxu0 %v3007
        %v3250 = vpop.f32.mrb[0].mxu0
        %v3251 = vadd.f32 0.0, %v3250
        %v3252 = vpop.f32.mrb[0].mxu0
        %3253 = vmatprep.mubr.f32.mxu0 0.0
        %3254 = vmatmul.mubr.f32.gmra.mrb[0].mxu0 %v3008
        %v3255 = vpop.f32.mrb[0].mxu0
        %v3256 = vadd.f32 0.0, %v3255
        %v3257 = vpop.f32.mrb[0].mxu0
        %3258 = vmatprep.mubr.f32.mxu0 0.0
        %3259 = vmatmul.mubr.f32.gmra.mrb[0].mxu0 %v3009
        %v3260 = vpop.f32.mrb[0].mxu0
        %v3261 = vadd.f32 0.0, %v3260
        %v3262 = vpop.f32.mrb[0].mxu0
        %3263 = vmatprep.mubr.f32.mxu0 0.0
        %3264 = vmatmul.mubr.f32.gmra.mrb[0].mxu0 %v3010
        %v3265 = vpop.f32.mrb[0].mxu0
        %v3266 = vadd.f32 0.0, %v3265
        %v3267 = vpop.f32.mrb[0].mxu0
        %3268 = vmatprep.mubr.f32.mxu0 0.0
        %3269 = vmatmul.mubr.f32.gmra.mrb[0].mxu0 %v3011
        %v3270 = vpop.f32.mrb[0].mxu0
        %v3271 = vadd.f32 0.0, %v3270
        %v3272 = vpop.f32.mrb[0].mxu0
        %3273 = vmatprep.mubr.f32.mxu0 0.0
        %3274 = vmatmul.mubr.f32.gmra.mrb[0].mxu0 %v3012
        %v3275 = vpop.f32.mrb[0].mxu0
        %v3276 = vadd.f32 0.0, %v3275
        %v3277 = vpop.f32.mrb[0].mxu0
        %3278 = vmatprep.mubr.f32.mxu0 0.0
        %3279 = vmatmul.mubr.f32.gmra.mrb[0].mxu0 %v3013
        %v3280 = vpop.f32.mrb[0].mxu0
        %v3281 = vadd.f32 0.0, %v3280
        %v3282 = vpop.f32.mrb[0].mxu0
        %3283 = vmatprep.mubr.f32.mxu0 0.0
        %3284 = vmatmul.mubr.f32.gmra.mrb[0].mxu0 %v3014
        %v3285 = vpop.f32.mrb[0].mxu0
        %v3286 = vadd.f32 0.0, %v3285
        %v3287 = vpop.f32.mrb[0].mxu0
        %3288 = vdwg.mxu0
        %v3289 = vadd.f32 %v3015, %v3131
        %v3290 = vadd.f32 %v3016, %v3136
        %v3291 = vadd.f32 %v3017, %v3141
        %v3292 = vadd.f32 %v3018, %v3146
        %v3293 = vadd.f32 %v3019, %v3151
        %v3294 = vadd.f32 %v3020, %v3156
        %v3295 = vadd.f32 %v3021, %v3161
        %v3296 = vadd.f32 %v3022, %v3166
        %v3297 = vadd.f32 %v3023, %v3171
        %v3298 = vadd.f32 %v3024, %v3176
        %v3299 = vadd.f32 %v3025, %v3181
        %v3300 = vadd.f32 %v3026, %v3186
        %v3301 = vadd.f32 %v3027, %v3191
        %v3302 = vadd.f32 %v3028, %v3196
        %v3303 = vadd.f32 %v3029, %v3201
        %v3304 = vadd.f32 %v3030, %v3206
        %v3305 = vadd.f32 %v3031, %v3211
        %v3306 = vadd.f32 %v3032, %v3216
        %v3307 = vadd.f32 %v3033, %v3221
        %v3308 = vadd.f32 %v3034, %v3226
        %v3309 = vadd.f32 %v3035, %v3231
        %v3310 = vadd.f32 %v3036, %v3236
        %v3311 = vadd.f32 %v3037, %v3241
        %v3312 = vadd.f32 %v3038, %v3246
        %v3313 = vadd.f32 %v3039, %v3251
        %v3314 = vadd.f32 %v3040, %v3256
        %v3315 = vadd.f32 %v3041, %v3261
        %v3316 = vadd.f32 %v3042, %v3266
        %v3317 = vadd.f32 %v3043, %v3271
        %v3318 = vadd.f32 %v3044, %v3276
        %v3319 = vadd.f32 %v3045, %v3281
        %v3320 = vadd.f32 %v3046, %v3286
        %3321 = vst [vmem:[#allocation3] sm:$0xff] %v3289
        %3322 = vst [vmem:[#allocation3 + $0x8] sm:$0xff] %v3290
        %3323 = vst [vmem:[#allocation3 + $0x10] sm:$0xff] %v3291
        %3324 = vst [vmem:[#allocation3 + $0x18] sm:$0xff] %v3292
        %3325 = vst [vmem:[#allocation3 + $0x20] sm:$0xff] %v3293
        %3326 = vst [vmem:[#allocation3 + $0x28] sm:$0xff] %v3294
        %3327 = vst [vmem:[#allocation3 + $0x30] sm:$0xff] %v3295
        %3328 = vst [vmem:[#allocation3 + $0x38] sm:$0xff] %v3296
        %3329 = vst [vmem:[#allocation3 + $0x40] sm:$0xff] %v3297
        %3330 = vst [vmem:[#allocation3 + $0x48] sm:$0xff] %v3298
        %3331 = vst [vmem:[#allocation3 + $0x50] sm:$0xff] %v3299
        %3332 = vst [vmem:[#allocation3 + $0x58] sm:$0xff] %v3300
        %3333 = vst [vmem:[#allocation3 + $0x60] sm:$0xff] %v3301
        %3334 = vst [vmem:[#allocation3 + $0x68] sm:$0xff] %v3302
        %3335 = vst [vmem:[#allocation3 + $0x70] sm:$0xff] %v3303
        %3336 = vst [vmem:[#allocation3 + $0x78] sm:$0xff] %v3304
        %3337 = vst [vmem:[#allocation3 + $0x80] sm:$0xff] %v3305
        %3338 = vst [vmem:[#allocation3 + $0x88] sm:$0xff] %v3306
        %3339 = vst [vmem:[#allocation3 + $0x90] sm:$0xff] %v3307
        %3340 = vst [vmem:[#allocation3 + $0x98] sm:$0xff] %v3308
        %3341 = vst [vmem:[#allocation3 + $0xa0] sm:$0xff] %v3309
        %3342 = vst [vmem:[#allocation3 + $0xa8] sm:$0xff] %v3310
        %3343 = vst [vmem:[#allocation3 + $0xb0] sm:$0xff] %v3311
        %3344 = vst [vmem:[#allocation3 + $0xb8] sm:$0xff] %v3312
        %3345 = vst [vmem:[#allocation3 + $0xc0] sm:$0xff] %v3313
        %3346 = vst [vmem:[#allocation3 + $0xc8] sm:$0xff] %v3314
        %3347 = vst [vmem:[#allocation3 + $0xd0] sm:$0xff] %v3315
        %3348 = vst [vmem:[#allocation3 + $0xd8] sm:$0xff] %v3316
        %3349 = vst [vmem:[#allocation3 + $0xe0] sm:$0xff] %v3317
        %3350 = vst [vmem:[#allocation3 + $0xe8] sm:$0xff] %v3318
        %3351 = vst [vmem:[#allocation3 + $0xf0] sm:$0xff] %v3319
        %3352 = vst [vmem:[#allocation3 + $0xf8] sm:$0xff] %v3320
        %v3353 = vld [vmem:[%s2612 + $0x2] sm:$0xff]
        %v3354 = vld [vmem:[%s2612 + $0xa] sm:$0xff]
        %v3355 = vld [vmem:[%s2612 + $0x1a] sm:$0xff]
        %v3356 = vld [vmem:[%s2612 + $0x22] sm:$0xff]
        %v3357 = vld [vmem:[%s2612 + $0x32] sm:$0xff]
        %v3358 = vld [vmem:[%s2612 + $0x3a] sm:$0xff]
        %v3359 = vld [vmem:[%s2612 + $0x4a] sm:$0xff]
        %v3360 = vld [vmem:[%s2612 + $0x52] sm:$0xff]
        %v3361 = vld [vmem:[%s2612 + $0x62] sm:$0xff]
        %v3362 = vld [vmem:[%s2612 + $0x6a] sm:$0xff]
        %v3363 = vld [vmem:[%s2612 + $0x7a] sm:$0xff]
        %v3364 = vld [vmem:[%s2612 + $0x82] sm:$0xff]
        %v3365 = vld [vmem:[%s2612 + $0x92] sm:$0xff]
        %v3366 = vld [vmem:[%s2612 + $0x9a] sm:$0xff]
        %v3367 = vld [vmem:[%s2612 + $0xaa] sm:$0xff]
        %v3368 = vld [vmem:[%s2612 + $0xb2] sm:$0xff]
        %v3369 = vld [vmem:[%s2612 + $0xc2] sm:$0xff]
        %v3370 = vld [vmem:[%s2612 + $0xca] sm:$0xff]
        %v3371 = vld [vmem:[%s2612 + $0xda] sm:$0xff]
        %v3372 = vld [vmem:[%s2612 + $0xe2] sm:$0xff]
        %v3373 = vld [vmem:[%s2612 + $0xf2] sm:$0xff]
        %v3374 = vld [vmem:[%s2612 + $0xfa] sm:$0xff]
        %v3375 = vld [vmem:[%s2612 + $0x10a] sm:$0xff]
        %v3376 = vld [vmem:[%s2612 + $0x112] sm:$0xff]
        %v3377 = vld [vmem:[%s2612 + $0x122] sm:$0xff]
        %v3378 = vld [vmem:[%s2612 + $0x12a] sm:$0xff]
        %v3379 = vld [vmem:[%s2612 + $0x13a] sm:$0xff]
        %v3380 = vld [vmem:[%s2612 + $0x142] sm:$0xff]
        %v3381 = vld [vmem:[%s2612 + $0x152] sm:$0xff]
        %v3382 = vld [vmem:[%s2612 + $0x15a] sm:$0xff]
        %v3383 = vld [vmem:[%s2612 + $0x16a] sm:$0xff]
        %v3384 = vld [vmem:[%s2612 + $0x172] sm:$0xff]
        %v3385 = vld [vmem:[#allocation3] sm:$0xff]
        %v3386 = vld [vmem:[#allocation3 + $0x8] sm:$0xff]
        %v3387 = vld [vmem:[#allocation3 + $0x10] sm:$0xff]
        %v3388 = vld [vmem:[#allocation3 + $0x18] sm:$0xff]
        %v3389 = vld [vmem:[#allocation3 + $0x20] sm:$0xff]
        %v3390 = vld [vmem:[#allocation3 + $0x28] sm:$0xff]
        %v3391 = vld [vmem:[#allocation3 + $0x30] sm:$0xff]
        %v3392 = vld [vmem:[#allocation3 + $0x38] sm:$0xff]
        %v3393 = vld [vmem:[#allocation3 + $0x40] sm:$0xff]
        %v3394 = vld [vmem:[#allocation3 + $0x48] sm:$0xff]
        %v3395 = vld [vmem:[#allocation3 + $0x50] sm:$0xff]
        %v3396 = vld [vmem:[#allocation3 + $0x58] sm:$0xff]
        %v3397 = vld [vmem:[#allocation3 + $0x60] sm:$0xff]
        %v3398 = vld [vmem:[#allocation3 + $0x68] sm:$0xff]
        %v3399 = vld [vmem:[#allocation3 + $0x70] sm:$0xff]
        %v3400 = vld [vmem:[#allocation3 + $0x78] sm:$0xff]
        %v3401 = vld [vmem:[#allocation3 + $0x80] sm:$0xff]
        %v3402 = vld [vmem:[#allocation3 + $0x88] sm:$0xff]
        %v3403 = vld [vmem:[#allocation3 + $0x90] sm:$0xff]
        %v3404 = vld [vmem:[#allocation3 + $0x98] sm:$0xff]
        %v3405 = vld [vmem:[#allocation3 + $0xa0] sm:$0xff]
        %v3406 = vld [vmem:[#allocation3 + $0xa8] sm:$0xff]
        %v3407 = vld [vmem:[#allocation3 + $0xb0] sm:$0xff]
        %v3408 = vld [vmem:[#allocation3 + $0xb8] sm:$0xff]
        %v3409 = vld [vmem:[#allocation3 + $0xc0] sm:$0xff]
        %v3410 = vld [vmem:[#allocation3 + $0xc8] sm:$0xff]
        %v3411 = vld [vmem:[#allocation3 + $0xd0] sm:$0xff]
        %v3412 = vld [vmem:[#allocation3 + $0xd8] sm:$0xff]
        %v3413 = vld [vmem:[#allocation3 + $0xe0] sm:$0xff]
        %v3414 = vld [vmem:[#allocation3 + $0xe8] sm:$0xff]
        %v3415 = vld [vmem:[#allocation3 + $0xf0] sm:$0xff]
        %v3416 = vld [vmem:[#allocation3 + $0xf8] sm:$0xff]
        %s3417 = scalar_lea.vmem [#allocation7], 1024
        %v3418 = vld [vmem:[%s3417] sm:$0xff]
        %v3419 = vld [vmem:[%s3417 + $0x8] sm:$0xff]
        %v3420 = vld [vmem:[%s3417 + $0x10] sm:$0xff]
        %v3421 = vld [vmem:[%s3417 + $0x18] sm:$0xff]
        %v3422 = vld [vmem:[%s3417 + $0x20] sm:$0xff]
        %v3423 = vld [vmem:[%s3417 + $0x28] sm:$0xff]
        %v3424 = vld [vmem:[%s3417 + $0x30] sm:$0xff]
        %v3425 = vld [vmem:[%s3417 + $0x38] sm:$0xff]
        %v3426 = vld [vmem:[%s3417 + $0x40] sm:$0xff]
        %v3427 = vld [vmem:[%s3417 + $0x48] sm:$0xff]
        %v3428 = vld [vmem:[%s3417 + $0x50] sm:$0xff]
        %v3429 = vld [vmem:[%s3417 + $0x58] sm:$0xff]
        %v3430 = vld [vmem:[%s3417 + $0x60] sm:$0xff]
        %v3431 = vld [vmem:[%s3417 + $0x68] sm:$0xff]
        %v3432 = vld [vmem:[%s3417 + $0x70] sm:$0xff]
        %v3433 = vld [vmem:[%s3417 + $0x78] sm:$0xff]
        %3434 = vmatprep.subr.mxu0 0.0
        %3435 = vmatpush1.msra.mxu0 %v3418
        %3436 = vmatprep.subr.mxu0 0.0
        %3437 = vmatpush1.msra.mxu0 %v3419
        %3438 = vmatprep.subr.mxu0 0.0
        %3439 = vmatpush1.msra.mxu0 %v3420
        %3440 = vmatprep.subr.mxu0 0.0
        %3441 = vmatpush1.msra.mxu0 %v3421
        %3442 = vmatprep.subr.mxu0 0.0
        %3443 = vmatpush1.msra.mxu0 %v3422
        %3444 = vmatprep.subr.mxu0 0.0
        %3445 = vmatpush1.msra.mxu0 %v3423
        %3446 = vmatprep.subr.mxu0 0.0
        %3447 = vmatpush1.msra.mxu0 %v3424
        %3448 = vmatprep.subr.mxu0 0.0
        %3449 = vmatpush1.msra.mxu0 %v3425
        %3450 = vmatprep.subr.mxu0 0.0
        %3451 = vmatpush1.msra.mxu0 %v3426
        %3452 = vmatprep.subr.mxu0 0.0
        %3453 = vmatpush1.msra.mxu0 %v3427
        %3454 = vmatprep.subr.mxu0 0.0
        %3455 = vmatpush1.msra.mxu0 %v3428
        %3456 = vmatprep.subr.mxu0 0.0
        %3457 = vmatpush1.msra.mxu0 %v3429
        %3458 = vmatprep.subr.mxu0 0.0
        %3459 = vmatpush1.msra.mxu0 %v3430
        %3460 = vmatprep.subr.mxu0 0.0
        %3461 = vmatpush1.msra.mxu0 %v3431
        %3462 = vmatprep.subr.mxu0 0.0
        %3463 = vmatpush1.msra.mxu0 %v3432
        %3464 = vmatprep.subr.mxu0 0.0
        %3465 = vmatpush1.msra.mxu0 %v3433
        %3466 = vmatprep.subr.mxu0 0.0
        %3467 = vmatpush1.msra.mxu0 0.0
        %3468 = vmatprep.subr.mxu0 0.0
        %3469 = vmatpush1.msra.mxu0 0.0
        %3470 = vmatprep.subr.mxu0 0.0
        %3471 = vmatpush1.msra.mxu0 0.0
        %3472 = vmatprep.subr.mxu0 0.0
        %3473 = vmatpush1.msra.mxu0 0.0
        %3474 = vmatprep.subr.mxu0 0.0
        %3475 = vmatpush1.msra.mxu0 0.0
        %3476 = vmatprep.subr.mxu0 0.0
        %3477 = vmatpush1.msra.mxu0 0.0
        %3478 = vmatprep.subr.mxu0 0.0
        %3479 = vmatpush1.msra.mxu0 0.0
        %3480 = vmatprep.subr.mxu0 0.0
        %3481 = vmatpush1.msra.mxu0 0.0
        %3482 = vmatprep.subr.mxu0 0.0
        %3483 = vmatpush1.msra.mxu0 0.0
        %3484 = vmatprep.subr.mxu0 0.0
        %3485 = vmatpush1.msra.mxu0 0.0
        %3486 = vmatprep.subr.mxu0 0.0
        %3487 = vmatpush1.msra.mxu0 0.0
        %3488 = vmatprep.subr.mxu0 0.0
        %3489 = vmatpush1.msra.mxu0 0.0
        %3490 = vmatprep.subr.mxu0 0.0
        %3491 = vmatpush1.msra.mxu0 0.0
        %3492 = vmatprep.subr.mxu0 0.0
        %3493 = vmatpush1.msra.mxu0 0.0
        %3494 = vmatprep.subr.mxu0 0.0
        %3495 = vmatpush1.msra.mxu0 0.0
        %3496 = vmatprep.subr.mxu0 0.0
        %3497 = vmatpush1.msra.mxu0 0.0
        %3498 = vmatprep.mubr.f32.mxu0 0.0
        %3499 = vmatmul.mubr.f32.gmra.mrb[0].mxu0 %v3353
        %v3500 = vpop.f32.mrb[0].mxu0
        %v3501 = vadd.f32 0.0, %v3500
        %v3502 = vpop.f32.mrb[0].mxu0
        %3503 = vmatprep.mubr.f32.mxu0 0.0
        %3504 = vmatmul.mubr.f32.gmra.mrb[0].mxu0 %v3354
        %v3505 = vpop.f32.mrb[0].mxu0
        %v3506 = vadd.f32 0.0, %v3505
        %v3507 = vpop.f32.mrb[0].mxu0
        %3508 = vmatprep.mubr.f32.mxu0 0.0
        %3509 = vmatmul.mubr.f32.gmra.mrb[0].mxu0 %v3355
        %v3510 = vpop.f32.mrb[0].mxu0
        %v3511 = vadd.f32 0.0, %v3510
        %v3512 = vpop.f32.mrb[0].mxu0
        %3513 = vmatprep.mubr.f32.mxu0 0.0
        %3514 = vmatmul.mubr.f32.gmra.mrb[0].mxu0 %v3356
        %v3515 = vpop.f32.mrb[0].mxu0
        %v3516 = vadd.f32 0.0, %v3515
        %v3517 = vpop.f32.mrb[0].mxu0
        %3518 = vmatprep.mubr.f32.mxu0 0.0
        %3519 = vmatmul.mubr.f32.gmra.mrb[0].mxu0 %v3357
        %v3520 = vpop.f32.mrb[0].mxu0
        %v3521 = vadd.f32 0.0, %v3520
        %v3522 = vpop.f32.mrb[0].mxu0
        %3523 = vmatprep.mubr.f32.mxu0 0.0
        %3524 = vmatmul.mubr.f32.gmra.mrb[0].mxu0 %v3358
        %v3525 = vpop.f32.mrb[0].mxu0
        %v3526 = vadd.f32 0.0, %v3525
        %v3527 = vpop.f32.mrb[0].mxu0
        %3528 = vmatprep.mubr.f32.mxu0 0.0
        %3529 = vmatmul.mubr.f32.gmra.mrb[0].mxu0 %v3359
        %v3530 = vpop.f32.mrb[0].mxu0
        %v3531 = vadd.f32 0.0, %v3530
        %v3532 = vpop.f32.mrb[0].mxu0
        %3533 = vmatprep.mubr.f32.mxu0 0.0
        %3534 = vmatmul.mubr.f32.gmra.mrb[0].mxu0 %v3360
        %v3535 = vpop.f32.mrb[0].mxu0
        %v3536 = vadd.f32 0.0, %v3535
        %v3537 = vpop.f32.mrb[0].mxu0
        %3538 = vmatprep.mubr.f32.mxu0 0.0
        %3539 = vmatmul.mubr.f32.gmra.mrb[0].mxu0 %v3361
        %v3540 = vpop.f32.mrb[0].mxu0
        %v3541 = vadd.f32 0.0, %v3540
        %v3542 = vpop.f32.mrb[0].mxu0
        %3543 = vmatprep.mubr.f32.mxu0 0.0
        %3544 = vmatmul.mubr.f32.gmra.mrb[0].mxu0 %v3362
        %v3545 = vpop.f32.mrb[0].mxu0
        %v3546 = vadd.f32 0.0, %v3545
        %v3547 = vpop.f32.mrb[0].mxu0
        %3548 = vmatprep.mubr.f32.mxu0 0.0
        %3549 = vmatmul.mubr.f32.gmra.mrb[0].mxu0 %v3363
        %v3550 = vpop.f32.mrb[0].mxu0
        %v3551 = vadd.f32 0.0, %v3550
        %v3552 = vpop.f32.mrb[0].mxu0
        %3553 = vmatprep.mubr.f32.mxu0 0.0
        %3554 = vmatmul.mubr.f32.gmra.mrb[0].mxu0 %v3364
        %v3555 = vpop.f32.mrb[0].mxu0
        %v3556 = vadd.f32 0.0, %v3555
        %v3557 = vpop.f32.mrb[0].mxu0
        %3558 = vmatprep.mubr.f32.mxu0 0.0
        %3559 = vmatmul.mubr.f32.gmra.mrb[0].mxu0 %v3365
        %v3560 = vpop.f32.mrb[0].mxu0
        %v3561 = vadd.f32 0.0, %v3560
        %v3562 = vpop.f32.mrb[0].mxu0
        %3563 = vmatprep.mubr.f32.mxu0 0.0
        %3564 = vmatmul.mubr.f32.gmra.mrb[0].mxu0 %v3366
        %v3565 = vpop.f32.mrb[0].mxu0
        %v3566 = vadd.f32 0.0, %v3565
        %v3567 = vpop.f32.mrb[0].mxu0
        %3568 = vmatprep.mubr.f32.mxu0 0.0
        %3569 = vmatmul.mubr.f32.gmra.mrb[0].mxu0 %v3367
        %v3570 = vpop.f32.mrb[0].mxu0
        %v3571 = vadd.f32 0.0, %v3570
        %v3572 = vpop.f32.mrb[0].mxu0
        %3573 = vmatprep.mubr.f32.mxu0 0.0
        %3574 = vmatmul.mubr.f32.gmra.mrb[0].mxu0 %v3368
        %v3575 = vpop.f32.mrb[0].mxu0
        %v3576 = vadd.f32 0.0, %v3575
        %v3577 = vpop.f32.mrb[0].mxu0
        %3578 = vmatprep.mubr.f32.mxu0 0.0
        %3579 = vmatmul.mubr.f32.gmra.mrb[0].mxu0 %v3369
        %v3580 = vpop.f32.mrb[0].mxu0
        %v3581 = vadd.f32 0.0, %v3580
        %v3582 = vpop.f32.mrb[0].mxu0
        %3583 = vmatprep.mubr.f32.mxu0 0.0
        %3584 = vmatmul.mubr.f32.gmra.mrb[0].mxu0 %v3370
        %v3585 = vpop.f32.mrb[0].mxu0
        %v3586 = vadd.f32 0.0, %v3585
        %v3587 = vpop.f32.mrb[0].mxu0
        %3588 = vmatprep.mubr.f32.mxu0 0.0
        %3589 = vmatmul.mubr.f32.gmra.mrb[0].mxu0 %v3371
        %v3590 = vpop.f32.mrb[0].mxu0
        %v3591 = vadd.f32 0.0, %v3590
        %v3592 = vpop.f32.mrb[0].mxu0
        %3593 = vmatprep.mubr.f32.mxu0 0.0
        %3594 = vmatmul.mubr.f32.gmra.mrb[0].mxu0 %v3372
        %v3595 = vpop.f32.mrb[0].mxu0
        %v3596 = vadd.f32 0.0, %v3595
        %v3597 = vpop.f32.mrb[0].mxu0
        %3598 = vmatprep.mubr.f32.mxu0 0.0
        %3599 = vmatmul.mubr.f32.gmra.mrb[0].mxu0 %v3373
        %v3600 = vpop.f32.mrb[0].mxu0
        %v3601 = vadd.f32 0.0, %v3600
        %v3602 = vpop.f32.mrb[0].mxu0
        %3603 = vmatprep.mubr.f32.mxu0 0.0
        %3604 = vmatmul.mubr.f32.gmra.mrb[0].mxu0 %v3374
        %v3605 = vpop.f32.mrb[0].mxu0
        %v3606 = vadd.f32 0.0, %v3605
        %v3607 = vpop.f32.mrb[0].mxu0
        %3608 = vmatprep.mubr.f32.mxu0 0.0
        %3609 = vmatmul.mubr.f32.gmra.mrb[0].mxu0 %v3375
        %v3610 = vpop.f32.mrb[0].mxu0
        %v3611 = vadd.f32 0.0, %v3610
        %v3612 = vpop.f32.mrb[0].mxu0
        %3613 = vmatprep.mubr.f32.mxu0 0.0
        %3614 = vmatmul.mubr.f32.gmra.mrb[0].mxu0 %v3376
        %v3615 = vpop.f32.mrb[0].mxu0
        %v3616 = vadd.f32 0.0, %v3615
        %v3617 = vpop.f32.mrb[0].mxu0
        %3618 = vmatprep.mubr.f32.mxu0 0.0
        %3619 = vmatmul.mubr.f32.gmra.mrb[0].mxu0 %v3377
        %v3620 = vpop.f32.mrb[0].mxu0
        %v3621 = vadd.f32 0.0, %v3620
        %v3622 = vpop.f32.mrb[0].mxu0
        %3623 = vmatprep.mubr.f32.mxu0 0.0
        %3624 = vmatmul.mubr.f32.gmra.mrb[0].mxu0 %v3378
        %v3625 = vpop.f32.mrb[0].mxu0
        %v3626 = vadd.f32 0.0, %v3625
        %v3627 = vpop.f32.mrb[0].mxu0
        %3628 = vmatprep.mubr.f32.mxu0 0.0
        %3629 = vmatmul.mubr.f32.gmra.mrb[0].mxu0 %v3379
        %v3630 = vpop.f32.mrb[0].mxu0
        %v3631 = vadd.f32 0.0, %v3630
        %v3632 = vpop.f32.mrb[0].mxu0
        %3633 = vmatprep.mubr.f32.mxu0 0.0
        %3634 = vmatmul.mubr.f32.gmra.mrb[0].mxu0 %v3380
        %v3635 = vpop.f32.mrb[0].mxu0
        %v3636 = vadd.f32 0.0, %v3635
        %v3637 = vpop.f32.mrb[0].mxu0
        %3638 = vmatprep.mubr.f32.mxu0 0.0
        %3639 = vmatmul.mubr.f32.gmra.mrb[0].mxu0 %v3381
        %v3640 = vpop.f32.mrb[0].mxu0
        %v3641 = vadd.f32 0.0, %v3640
        %v3642 = vpop.f32.mrb[0].mxu0
        %3643 = vmatprep.mubr.f32.mxu0 0.0
        %3644 = vmatmul.mubr.f32.gmra.mrb[0].mxu0 %v3382
        %v3645 = vpop.f32.mrb[0].mxu0
        %v3646 = vadd.f32 0.0, %v3645
        %v3647 = vpop.f32.mrb[0].mxu0
        %3648 = vmatprep.mubr.f32.mxu0 0.0
        %3649 = vmatmul.mubr.f32.gmra.mrb[0].mxu0 %v3383
        %v3650 = vpop.f32.mrb[0].mxu0
        %v3651 = vadd.f32 0.0, %v3650
        %v3652 = vpop.f32.mrb[0].mxu0
        %3653 = vmatprep.mubr.f32.mxu0 0.0
        %3654 = vmatmul.mubr.f32.gmra.mrb[0].mxu0 %v3384
        %v3655 = vpop.f32.mrb[0].mxu0
        %v3656 = vadd.f32 0.0, %v3655
        %v3657 = vpop.f32.mrb[0].mxu0
        %3658 = vdwg.mxu0
        %v3659 = vadd.f32 %v3385, %v3501
        %v3660 = vadd.f32 %v3386, %v3506
        %v3661 = vadd.f32 %v3387, %v3511
        %v3662 = vadd.f32 %v3388, %v3516
        %v3663 = vadd.f32 %v3389, %v3521
        %v3664 = vadd.f32 %v3390, %v3526
        %v3665 = vadd.f32 %v3391, %v3531
        %v3666 = vadd.f32 %v3392, %v3536
        %v3667 = vadd.f32 %v3393, %v3541
        %v3668 = vadd.f32 %v3394, %v3546
        %v3669 = vadd.f32 %v3395, %v3551
        %v3670 = vadd.f32 %v3396, %v3556
        %v3671 = vadd.f32 %v3397, %v3561
        %v3672 = vadd.f32 %v3398, %v3566
        %v3673 = vadd.f32 %v3399, %v3571
        %v3674 = vadd.f32 %v3400, %v3576
        %v3675 = vadd.f32 %v3401, %v3581
        %v3676 = vadd.f32 %v3402, %v3586
        %v3677 = vadd.f32 %v3403, %v3591
        %v3678 = vadd.f32 %v3404, %v3596
        %v3679 = vadd.f32 %v3405, %v3601
        %v3680 = vadd.f32 %v3406, %v3606
        %v3681 = vadd.f32 %v3407, %v3611
        %v3682 = vadd.f32 %v3408, %v3616
        %v3683 = vadd.f32 %v3409, %v3621
        %v3684 = vadd.f32 %v3410, %v3626
        %v3685 = vadd.f32 %v3411, %v3631
        %v3686 = vadd.f32 %v3412, %v3636
        %v3687 = vadd.f32 %v3413, %v3641
        %v3688 = vadd.f32 %v3414, %v3646
        %v3689 = vadd.f32 %v3415, %v3651
        %v3690 = vadd.f32 %v3416, %v3656
        %3691 = vst [vmem:[#allocation3] sm:$0xff] %v3659
        %3692 = vst [vmem:[#allocation3 + $0x8] sm:$0xff] %v3660
        %3693 = vst [vmem:[#allocation3 + $0x10] sm:$0xff] %v3661
        %3694 = vst [vmem:[#allocation3 + $0x18] sm:$0xff] %v3662
        %3695 = vst [vmem:[#allocation3 + $0x20] sm:$0xff] %v3663
        %3696 = vst [vmem:[#allocation3 + $0x28] sm:$0xff] %v3664
        %3697 = vst [vmem:[#allocation3 + $0x30] sm:$0xff] %v3665
        %3698 = vst [vmem:[#allocation3 + $0x38] sm:$0xff] %v3666
        %3699 = vst [vmem:[#allocation3 + $0x40] sm:$0xff] %v3667
        %3700 = vst [vmem:[#allocation3 + $0x48] sm:$0xff] %v3668
        %3701 = vst [vmem:[#allocation3 + $0x50] sm:$0xff] %v3669
        %3702 = vst [vmem:[#allocation3 + $0x58] sm:$0xff] %v3670
        %3703 = vst [vmem:[#allocation3 + $0x60] sm:$0xff] %v3671
        %3704 = vst [vmem:[#allocation3 + $0x68] sm:$0xff] %v3672
        %3705 = vst [vmem:[#allocation3 + $0x70] sm:$0xff] %v3673
        %3706 = vst [vmem:[#allocation3 + $0x78] sm:$0xff] %v3674
        %3707 = vst [vmem:[#allocation3 + $0x80] sm:$0xff] %v3675
        %3708 = vst [vmem:[#allocation3 + $0x88] sm:$0xff] %v3676
        %3709 = vst [vmem:[#allocation3 + $0x90] sm:$0xff] %v3677
        %3710 = vst [vmem:[#allocation3 + $0x98] sm:$0xff] %v3678
        %3711 = vst [vmem:[#allocation3 + $0xa0] sm:$0xff] %v3679
        %3712 = vst [vmem:[#allocation3 + $0xa8] sm:$0xff] %v3680
        %3713 = vst [vmem:[#allocation3 + $0xb0] sm:$0xff] %v3681
        %3714 = vst [vmem:[#allocation3 + $0xb8] sm:$0xff] %v3682
        %3715 = vst [vmem:[#allocation3 + $0xc0] sm:$0xff] %v3683
        %3716 = vst [vmem:[#allocation3 + $0xc8] sm:$0xff] %v3684
        %3717 = vst [vmem:[#allocation3 + $0xd0] sm:$0xff] %v3685
        %3718 = vst [vmem:[#allocation3 + $0xd8] sm:$0xff] %v3686
        %3719 = vst [vmem:[#allocation3 + $0xe0] sm:$0xff] %v3687
        %3720 = vst [vmem:[#allocation3 + $0xe8] sm:$0xff] %v3688
        %3721 = vst [vmem:[#allocation3 + $0xf0] sm:$0xff] %v3689
        %3722 = vst [vmem:[#allocation3 + $0xf8] sm:$0xff] %v3690
        %v3723 = vld [vmem:[#allocation3] sm:$0xff]
        %v3724 = vld [vmem:[#allocation3 + $0x8] sm:$0xff]
        %v3725 = vld [vmem:[#allocation3 + $0x10] sm:$0xff]
        %v3726 = vld [vmem:[#allocation3 + $0x18] sm:$0xff]
        %v3727 = vld [vmem:[#allocation3 + $0x20] sm:$0xff]
        %v3728 = vld [vmem:[#allocation3 + $0x28] sm:$0xff]
        %v3729 = vld [vmem:[#allocation3 + $0x30] sm:$0xff]
        %v3730 = vld [vmem:[#allocation3 + $0x38] sm:$0xff]
        %v3731 = vld [vmem:[#allocation3 + $0x40] sm:$0xff]
        %v3732 = vld [vmem:[#allocation3 + $0x48] sm:$0xff]
        %v3733 = vld [vmem:[#allocation3 + $0x50] sm:$0xff]
        %v3734 = vld [vmem:[#allocation3 + $0x58] sm:$0xff]
        %v3735 = vld [vmem:[#allocation3 + $0x60] sm:$0xff]
        %v3736 = vld [vmem:[#allocation3 + $0x68] sm:$0xff]
        %v3737 = vld [vmem:[#allocation3 + $0x70] sm:$0xff]
        %v3738 = vld [vmem:[#allocation3 + $0x78] sm:$0xff]
        %v3739 = vld [vmem:[#allocation3 + $0x80] sm:$0xff]
        %v3740 = vld [vmem:[#allocation3 + $0x88] sm:$0xff]
        %v3741 = vld [vmem:[#allocation3 + $0x90] sm:$0xff]
        %v3742 = vld [vmem:[#allocation3 + $0x98] sm:$0xff]
        %v3743 = vld [vmem:[#allocation3 + $0xa0] sm:$0xff]
        %v3744 = vld [vmem:[#allocation3 + $0xa8] sm:$0xff]
        %v3745 = vld [vmem:[#allocation3 + $0xb0] sm:$0xff]
        %v3746 = vld [vmem:[#allocation3 + $0xb8] sm:$0xff]
        %v3747 = vld [vmem:[#allocation3 + $0xc0] sm:$0xff]
        %v3748 = vld [vmem:[#allocation3 + $0xc8] sm:$0xff]
        %v3749 = vld [vmem:[#allocation3 + $0xd0] sm:$0xff]
        %v3750 = vld [vmem:[#allocation3 + $0xd8] sm:$0xff]
        %v3751 = vld [vmem:[#allocation3 + $0xe0] sm:$0xff]
        %v3752 = vld [vmem:[#allocation3 + $0xe8] sm:$0xff]
        %v3753 = vld [vmem:[#allocation3 + $0xf0] sm:$0xff]
        %v3754 = vld [vmem:[#allocation3 + $0xf8] sm:$0xff]
        %v3755 = vld [vmem:[%s2] sm:$0x1]
        %v3757 = vlaneseq
        %v3758 = vshrl.u32 %v3757, 7
        %v3759 = vsub.s32 0, %v3758
        %v3760 = vrot.slane %v3755, %v3759
        %v3762 = vadd.f32 %v3723, %v3760
        %v3763 = vadd.f32 %v3724, %v3760
        %v3764 = vadd.f32 %v3725, %v3760
        %v3765 = vadd.f32 %v3726, %v3760
        %v3766 = vadd.f32 %v3727, %v3760
        %v3767 = vadd.f32 %v3728, %v3760
        %v3768 = vadd.f32 %v3729, %v3760
        %v3769 = vadd.f32 %v3730, %v3760
        %v3770 = vadd.f32 %v3731, %v3760
        %v3771 = vadd.f32 %v3732, %v3760
        %v3772 = vadd.f32 %v3733, %v3760
        %v3773 = vadd.f32 %v3734, %v3760
        %v3774 = vadd.f32 %v3735, %v3760
        %v3775 = vadd.f32 %v3736, %v3760
        %v3776 = vadd.f32 %v3737, %v3760
        %v3777 = vadd.f32 %v3738, %v3760
        %v3778 = vadd.f32 %v3739, %v3760
        %v3779 = vadd.f32 %v3740, %v3760
        %v3780 = vadd.f32 %v3741, %v3760
        %v3781 = vadd.f32 %v3742, %v3760
        %v3782 = vadd.f32 %v3743, %v3760
        %v3783 = vadd.f32 %v3744, %v3760
        %v3784 = vadd.f32 %v3745, %v3760
        %v3785 = vadd.f32 %v3746, %v3760
        %v3786 = vadd.f32 %v3747, %v3760
        %v3787 = vadd.f32 %v3748, %v3760
        %v3788 = vadd.f32 %v3749, %v3760
        %v3789 = vadd.f32 %v3750, %v3760
        %v3790 = vadd.f32 %v3751, %v3760
        %v3791 = vadd.f32 %v3752, %v3760
        %v3792 = vadd.f32 %v3753, %v3760
        %v3793 = vadd.f32 %v3754, %v3760
        %3794 = vst [vmem:[%s234] sm:$0xff] %v3762
        %3795 = vst [vmem:[%s234 + $0x8] sm:$0xff] %v3763
        %3796 = vst [vmem:[%s234 + $0x10] sm:$0xff] %v3764
        %3797 = vst [vmem:[%s234 + $0x18] sm:$0xff] %v3765
        %3798 = vst [vmem:[%s234 + $0x20] sm:$0xff] %v3766
        %3799 = vst [vmem:[%s234 + $0x28] sm:$0xff] %v3767
        %3800 = vst [vmem:[%s234 + $0x30] sm:$0xff] %v3768
        %3801 = vst [vmem:[%s234 + $0x38] sm:$0xff] %v3769
        %3802 = vst [vmem:[%s234 + $0x40] sm:$0xff] %v3770
        %3803 = vst [vmem:[%s234 + $0x48] sm:$0xff] %v3771
        %3804 = vst [vmem:[%s234 + $0x50] sm:$0xff] %v3772
        %3805 = vst [vmem:[%s234 + $0x58] sm:$0xff] %v3773
        %3806 = vst [vmem:[%s234 + $0x60] sm:$0xff] %v3774
        %3807 = vst [vmem:[%s234 + $0x68] sm:$0xff] %v3775
        %3808 = vst [vmem:[%s234 + $0x70] sm:$0xff] %v3776
        %3809 = vst [vmem:[%s234 + $0x78] sm:$0xff] %v3777
        %3810 = vst [vmem:[%s234 + $0x80] sm:$0xff] %v3778
        %3811 = vst [vmem:[%s234 + $0x88] sm:$0xff] %v3779
        %3812 = vst [vmem:[%s234 + $0x90] sm:$0xff] %v3780
        %3813 = vst [vmem:[%s234 + $0x98] sm:$0xff] %v3781
        %3814 = vst [vmem:[%s234 + $0xa0] sm:$0xff] %v3782
        %3815 = vst [vmem:[%s234 + $0xa8] sm:$0xff] %v3783
        %3816 = vst [vmem:[%s234 + $0xb0] sm:$0xff] %v3784
        %3817 = vst [vmem:[%s234 + $0xb8] sm:$0xff] %v3785
        %3818 = vst [vmem:[%s234 + $0xc0] sm:$0xff] %v3786
        %3819 = vst [vmem:[%s234 + $0xc8] sm:$0xff] %v3787
        %3820 = vst [vmem:[%s234 + $0xd0] sm:$0xff] %v3788
        %3821 = vst [vmem:[%s234 + $0xd8] sm:$0xff] %v3789
        %3822 = vst [vmem:[%s234 + $0xe0] sm:$0xff] %v3790
        %3823 = vst [vmem:[%s234 + $0xe8] sm:$0xff] %v3791
        %3824 = vst [vmem:[%s234 + $0xf0] sm:$0xff] %v3792
        %3825 = vst [vmem:[%s234 + $0xf8] sm:$0xff] %v3793
        %v3826 = vadd.f32 %v3762, %v3763
        %v3827 = vadd.f32 %v3826, %v3764
        %v3828 = vadd.f32 %v3827, %v3765
        %v3829 = vadd.f32 %v3828, %v3766
        %v3830 = vadd.f32 %v3829, %v3767
        %v3831 = vadd.f32 %v3830, %v3768
        %v3832 = vadd.f32 %v3831, %v3769
        %v3833 = vadd.f32 %v3832, %v3770
        %v3834 = vadd.f32 %v3833, %v3771
        %v3835 = vadd.f32 %v3834, %v3772
        %v3836 = vadd.f32 %v3835, %v3773
        %v3837 = vadd.f32 %v3836, %v3774
        %v3838 = vadd.f32 %v3837, %v3775
        %v3839 = vadd.f32 %v3838, %v3776
        %v3840 = vadd.f32 %v3839, %v3777
        %v3841 = vadd.f32 %v3840, %v3778
        %v3842 = vadd.f32 %v3841, %v3779
        %v3843 = vadd.f32 %v3842, %v3780
        %v3844 = vadd.f32 %v3843, %v3781
        %v3845 = vadd.f32 %v3844, %v3782
        %v3846 = vadd.f32 %v3845, %v3783
        %v3847 = vadd.f32 %v3846, %v3784
        %v3848 = vadd.f32 %v3847, %v3785
        %v3849 = vadd.f32 %v3848, %v3786
        %v3850 = vadd.f32 %v3849, %v3787
        %v3851 = vadd.f32 %v3850, %v3788
        %v3852 = vadd.f32 %v3851, %v3789
        %v3853 = vadd.f32 %v3852, %v3790
        %v3854 = vadd.f32 %v3853, %v3791
        %v3855 = vadd.f32 %v3854, %v3792
        %v3856 = vadd.f32 %v3855, %v3793
        %v3857 = vrot.slane %v3856, 4
        %v3858 = vadd.f32 %v3856, %v3857
        %v3859 = vrot.slane %v3858, 2
        %v3860 = vadd.f32 %v3858, %v3859
        %v3861 = vrot.slane %v3860, 1
        %v3862 = vadd.f32 %v3860, %v3861
        %v3863 = vmul.f32 %v3762, %v3762
        %v3864 = vmul.f32 %v3763, %v3763
        %v3865 = vmul.f32 %v3764, %v3764
        %v3866 = vmul.f32 %v3765, %v3765
        %v3867 = vmul.f32 %v3766, %v3766
        %v3868 = vmul.f32 %v3767, %v3767
        %v3869 = vmul.f32 %v3768, %v3768
        %v3870 = vmul.f32 %v3769, %v3769
        %v3871 = vmul.f32 %v3770, %v3770
        %v3872 = vmul.f32 %v3771, %v3771
        %v3873 = vmul.f32 %v3772, %v3772
        %v3874 = vmul.f32 %v3773, %v3773
        %v3875 = vmul.f32 %v3774, %v3774
        %v3876 = vmul.f32 %v3775, %v3775
        %v3877 = vmul.f32 %v3776, %v3776
        %v3878 = vmul.f32 %v3777, %v3777
        %v3879 = vmul.f32 %v3778, %v3778
        %v3880 = vmul.f32 %v3779, %v3779
        %v3881 = vmul.f32 %v3780, %v3780
        %v3882 = vmul.f32 %v3781, %v3781
        %v3883 = vmul.f32 %v3782, %v3782
        %v3884 = vmul.f32 %v3783, %v3783
        %v3885 = vmul.f32 %v3784, %v3784
        %v3886 = vmul.f32 %v3785, %v3785
        %v3887 = vmul.f32 %v3786, %v3786
        %v3888 = vmul.f32 %v3787, %v3787
        %v3889 = vmul.f32 %v3788, %v3788
        %v3890 = vmul.f32 %v3789, %v3789
        %v3891 = vmul.f32 %v3790, %v3790
        %v3892 = vmul.f32 %v3791, %v3791
        %v3893 = vmul.f32 %v3792, %v3792
        %v3894 = vmul.f32 %v3793, %v3793
        %v3895 = vadd.f32 %v3863, %v3864
        %v3896 = vadd.f32 %v3895, %v3865
        %v3897 = vadd.f32 %v3896, %v3866
        %v3898 = vadd.f32 %v3897, %v3867
        %v3899 = vadd.f32 %v3898, %v3868
        %v3900 = vadd.f32 %v3899, %v3869
        %v3901 = vadd.f32 %v3900, %v3870
        %v3902 = vadd.f32 %v3901, %v3871
        %v3903 = vadd.f32 %v3902, %v3872
        %v3904 = vadd.f32 %v3903, %v3873
        %v3905 = vadd.f32 %v3904, %v3874
        %v3906 = vadd.f32 %v3905, %v3875
        %v3907 = vadd.f32 %v3906, %v3876
        %v3908 = vadd.f32 %v3907, %v3877
        %v3909 = vadd.f32 %v3908, %v3878
        %v3910 = vadd.f32 %v3909, %v3879
        %v3911 = vadd.f32 %v3910, %v3880
        %v3912 = vadd.f32 %v3911, %v3881
        %v3913 = vadd.f32 %v3912, %v3882
        %v3914 = vadd.f32 %v3913, %v3883
        %v3915 = vadd.f32 %v3914, %v3884
        %v3916 = vadd.f32 %v3915, %v3885
        %v3917 = vadd.f32 %v3916, %v3886
        %v3918 = vadd.f32 %v3917, %v3887
        %v3919 = vadd.f32 %v3918, %v3888
        %v3920 = vadd.f32 %v3919, %v3889
        %v3921 = vadd.f32 %v3920, %v3890
        %v3922 = vadd.f32 %v3921, %v3891
        %v3923 = vadd.f32 %v3922, %v3892
        %v3924 = vadd.f32 %v3923, %v3893
        %v3925 = vadd.f32 %v3924, %v3894
        %v3926 = vrot.slane %v3925, 4
        %v3927 = vadd.f32 %v3925, %v3926
        %v3928 = vrot.slane %v3927, 2
        %v3929 = vadd.f32 %v3927, %v3928
        %v3930 = vrot.slane %v3929, 1
        %v3931 = vadd.f32 %v3929, %v3930
        %3932 = vst [vmem:[%s241] sm:$0x1] %v3862
        %3933 = vst [vmem:[%s241 + $0x1] sm:$0x1] %v3931
        %3934 = vst [vmem:[%s241 + $0x2] sm:$0x3f] 0.0
        %s3935 = sand.u32 %s102, 1
        %s3936 = scalar_lea.sflag [#allocation6], %s3935
        %s3937 = sand.u32 %s102, 1
        %s3938 = smul.addr %s3937, 256
        %s3939 = scalar_lea.vmem [#allocation9], %s3938
        %s3940 = sand.u32 %s128, 1
        %s3941 = scalar_lea.sflag [#allocation11], %s3940
        %s3942 = sand.u32 %s128, 1
        %s3943 = smul.addr %s3942, 8
        %s3944 = scalar_lea.vmem [#allocation10], %s3943
        // Predicated region
        $region41: #{tpu_custom_call.1} parent=31 // pred_check
          %p3945 = pneg %p112
        $region42: #{tpu_custom_call.1} parent=31 // pred_check_branch
          %3947 = sbr.rel (%p3945) target = $region44
        $region43: #{tpu_custom_call.1} parent=31 // pred_region
          %s3949 = ssub.s32 4096, 4096
          %3950 = vsyncadd %s3936, %s3949
          %s3951 = smul.addr %s26, 32
          %s3952 = smul.addr %s3951, 128
          %s3953 = scalar_lea.hbm %s3, %s3952
          %s3954 = sshll.u32 %s3939, 4
          %s3955 = int_to_ptr.vmem [resolvable:$true] %s3954
          %3960 = dma.vmem_to_hbm [thread:$0]  %s3955, 4096, %s3953, %s3936, 128, 128, 8
        $region44: #{tpu_custom_call.1} parent=31 // pred_fallthru
          _
        // Predicated region
        $region45: #{tpu_custom_call.1} parent=31 // pred_check
          %p3961 = pneg %p138
        $region46: #{tpu_custom_call.1} parent=31 // pred_check_branch
          %3963 = sbr.rel (%p3961) target = $region48
        $region47: #{tpu_custom_call.1} parent=31 // pred_region
          %s3965 = ssub.s32 128, 128
          %3966 = vsyncadd %s3941, %s3965
          %s3967 = smul.addr %s26, 128
          %s3968 = scalar_lea.hbm %s4, %s3967
          %s3970 = sshll.u32 %s3944, 4
          %s3971 = int_to_ptr.vmem [resolvable:$true] %s3970
          %3973 = dma.vmem_to_hbm [thread:$0]  %s3971, 128, %s3968, %s3941
        $region48: #{tpu_custom_call.1} parent=31 // pred_fallthru
          _
      $region32: #{tpu_custom_call.1} parent=5 // pred_fallthru
        _
      %p3974 = scmp.le.s32.totalorder 2, %s21
      // Predicated region
      $region49: #{tpu_custom_call.1} parent=5 // pred_check
        %p3975 = pneg %p3974
      $region50: #{tpu_custom_call.1} parent=5 // pred_check_branch
        %3977 = sbr.rel (%p3975) target = $region52
      $region51: #{tpu_custom_call.1} parent=5 // pred_region
        %s3978 = ssub.s32 %s21, 2
        // Predicated region
        $region53: #{tpu_custom_call.1} parent=51 // pred_check
          %p3979 = pneg %p118
        $region54: #{tpu_custom_call.1} parent=51 // pred_check_branch
          %3981 = sbr.rel (%p3979) target = $region56
        $region55: #{tpu_custom_call.1} parent=51 // pred_region
          %s3982 = sand.u32 %s103, 1
          %s3983 = scalar_lea.sflag [#allocation6], %s3982
          %s3984 = sand.u32 %s103, 1
          %s3985 = smul.addr %s3984, 256
          %s3986 = scalar_lea.vmem [#allocation9], %s3985
          %3987 = dma.done %s3983, 4096
        $region56: #{tpu_custom_call.1} parent=51 // pred_fallthru
          _
        // Predicated region
        $region57: #{tpu_custom_call.1} parent=51 // pred_check
          %p3988 = pneg %p144
        $region58: #{tpu_custom_call.1} parent=51 // pred_check_branch
          %3990 = sbr.rel (%p3988) target = $region60
        $region59: #{tpu_custom_call.1} parent=51 // pred_region
          %s3991 = sand.u32 %s129, 1
          %s3992 = scalar_lea.sflag [#allocation11], %s3991
          %s3993 = sand.u32 %s129, 1
          %s3994 = smul.addr %s3993, 8
          %s3995 = scalar_lea.vmem [#allocation10], %s3994
          %3996 = dma.done %s3992, 128
        $region60: #{tpu_custom_call.1} parent=51 // pred_fallthru
          _
      $region52: #{tpu_custom_call.1} parent=5 // pred_fallthru
        _
    $region6: #{tpu_custom_call.1} parent=1 // loop_footer
      %s25 = sadd.s32 1, %s21
    $region7: #{tpu_custom_call.1} parent=1 // loop_footer_branch
      %20 = sbr.rel target = $region3
    $region8: #{tpu_custom_call.1} parent=1 // loop_exit
      _
    %3997 = vsyncpa [#allocation5], 1
    %s3998 = scalar_lea.sflag [#allocation5], 1
    %3999 = vsyncpa %s3998, 1
    %4000 = vsyncpa [#allocation8], 1
    %4001 = vsyncpa [#allocation6], 1
    %s4002 = scalar_lea.sflag [#allocation6], 1
    %4003 = vsyncpa %s4002, 1
    %4004 = vsyncpa [#allocation11], 1
    %s4005 = scalar_lea.sflag [#allocation11], 1
    %4006 = vsyncpa %s4005, 1

</llo_original>
